<compile_context>
chip_gen: v7x
topology: tpu7x:2x2x1
jax: 0.10.0
libtpu: 0.0.40
codegen_flags: <defaults>
</compile_context>

<pallas_src>
import math
import numpy as np
import jax
import jax.numpy as jnp
from jax.experimental import pallas as pl
from jax.experimental.pallas import tpu as pltpu

# ----------------------------------------------------------------------------
# Config
# ----------------------------------------------------------------------------
BATCH       = 2
IN_CH       = 4
CAMERA_NUM  = 1
IMG         = 64
STATE_DIM   = 32
HIDDEN_DIMS = (64, 64)
TOKEN_DIM   = 32
N_HEADS     = 2
DIM_FF      = 64
N_LAYERS    = 2
ENC_OUT     = 32
VISUAL_DIM  = CAMERA_NUM * IN_CH * IMG * IMG
N_VIS_TOK   = 16
N_TOKENS    = 1 + N_VIS_TOK
HEAD_DIM    = TOKEN_DIM // N_HEADS
K1          = 8 * 8 * IN_CH                      # conv1 folded im2col depth = 256

# NatureEncoder spatial sizes: 64 -(k8,s4)-> 15 -(k4,s2)-> 6 -(k3,s1)-> 4.
# The kernel only materialises conv1 on a 14x14 (=2*7) domain packed as 4 stride-2
# phases of 7x7 (padded to 8x8); conv2 only ever reads conv1 rows/cols 0..13.
assert (IMG - 8) // 4 + 1 == 15 and 2 * 5 + 3 <= 13
assert VISUAL_DIM == 16384

# ----------------------------------------------------------------------------
# Packed-weight layout (static row offsets)
# ----------------------------------------------------------------------------
# MAT32 slab: lane width 32, bf16
OFF_W1, OFF_WUP, OFF_WP, OFF_WO, OFF_WF2, OFF_WOUT = 0, 256, 320, 384, 448, 576
M32_ROWS = 640
# MAT64 slab: lane width 64, bf16
OFF_W2, OFF_W3, OFF_WM1, OFF_WM2, OFF_WF1 = 0, 512, 1088, 1120, 1184
M64_ROWS = 1248
# MAT96 slab: lane width 96, bf16 (QKV in-projections)
M96_ROWS = 2 * TOKEN_DIM
# BIAS slab: (24, 128) f32, one row per bias / LN vector
(B_B1, B_B2, B_B3, B_BUP, B_BM1, B_BM2, B_BP,
 B_BQKV, B_BO, B_L1G, B_L1B, B_BF1, B_BF2, B_L2G, B_L2B, B_BOUT) = (
    0, 1, 2, 3, 4, 5, 6, 7, 9, 11, 13, 15, 17, 19, 21, 23)
BIAS_ROWS = 24


# ----------------------------------------------------------------------------
# Fused per-sample kernel (grid = (batch,), "parallel")
# ----------------------------------------------------------------------------
def _loco_encoder_kernel(patches_ref, state_ref, m32_ref, m64_ref, m96_ref, bias_ref,
                         out_ref, y1_ref, y2_ref):
    f32, bf16 = jnp.float32, jnp.bfloat16

    def mm(a, b):
        return jnp.dot(a.astype(bf16), b.astype(bf16), preferred_element_type=f32)

    def bvec(row, n):                              # (1, n) f32 bias / LN row
        return bias_ref[row:row + 1, 0:n]

    def relu(v):
        return jnp.maximum(v, 0.0)

    # ---- conv1: single folded im2col matmul, K = 8*8*C = 256 --------------------
    # patch row (pq*64 + hb*8 + wb) <-> conv1 output position (2*hb + pq//2, 2*wb + pq%2);
    # rows with hb==7 or wb==7 are padding that conv2 never reads.
    h1 = relu(mm(patches_ref[0], m32_ref[OFF_W1:OFF_W1 + K1, :]) + bvec(B_B1, 32))
    y1_ref[...] = h1.astype(bf16).reshape(4, 64, 32)          # [pq, hb*8+wb, c]

    # ---- conv2: 4x4 stride-2, 32 -> 64.  16 per-tap dots on full 8x8 phase planes ----
    acc2 = jnp.zeros((6, 6, 64), f32)
    for i in range(4):
        for j in range(4):
            pq = (i % 2) * 2 + (j % 2)
            t = i * 4 + j
            w2t = m64_ref[OFF_W2 + 32 * t:OFF_W2 + 32 * t + 32, :]        # (32, 64)
            prod = mm(y1_ref[pq], w2t).reshape(8, 8, 64)                  # [hb, wb, co]
            acc2 = acc2 + prod[i // 2:i // 2 + 6, j // 2:j // 2 + 6, :]
    y2 = relu(acc2 + bvec(B_B2, 64))                                      # (6, 6, 64)
    y2 = jnp.concatenate([y2, jnp.zeros((6, 2, 64), f32)], axis=1)        # pad wb -> 8
    y2_ref[...] = y2.astype(bf16)

    # ---- conv3: 3x3 stride-1, 64 -> 64.  9 per-tap dots on full 4x8 row slabs -------
    acc3 = jnp.zeros((4, 4, 64), f32)
    for i in range(3):
        for j in range(3):
            t = i * 3 + j
            w3t = m64_ref[OFF_W3 + 64 * t:OFF_W3 + 64 * t + 64, :]        # (64, 64)
            slab = y2_ref[i:i + 4].reshape(32, 64)                        # rows = ro*8+col
            prod = mm(slab, w3t).reshape(4, 8, 64)
            acc3 = acc3 + prod[:, j:j + 4, :]
    h3 = relu(acc3 + bvec(B_B3, 64))                                      # (4, 4, 64)

    # ---- 1x1 up-conv -> 16 visual tokens, single dot --------------------------------
    h3f = jnp.concatenate([h3[0], h3[1], h3[2], h3[3]], axis=0)           # (16, 64)
    vis_tok = mm(h3f, m32_ref[OFF_WUP:OFF_WUP + 64, :]) + bvec(B_BUP, 32)  # (16, 32)

    # ---- state MLP (Linear+ReLU x2) + RLProjection (Linear+ReLU) --------------------
    s = state_ref[0]                                                      # (1, 32)
    s = relu(mm(s, m64_ref[OFF_WM1:OFF_WM1 + 32, :]) + bvec(B_BM1, 64))
    s = relu(mm(s, m64_ref[OFF_WM2:OFF_WM2 + 64, :]) + bvec(B_BM2, 64))
    s = relu(mm(s, m32_ref[OFF_WP:OFF_WP + 64, :]) + bvec(B_BP, 32))      # (1, 32)

    # token matrix: rows 0..15 = visual tokens, row 16 = state token (attention has no
    # positional info here, so token order only matters for the pooling below).
    x = jnp.concatenate([vis_tok, s], axis=0)                             # (17, 32)

    # ---- 2 post-norm transformer encoder layers (ReLU FFN, dropout=0) ---------------
    def layer_norm(t, g, b):
        mu = jnp.mean(t, axis=-1, keepdims=True)
        var = jnp.mean(jnp.square(t - mu), axis=-1, keepdims=True)
        return (t - mu) * jax.lax.rsqrt(var + 1e-5) * g + b

    scale = 1.0 / math.sqrt(HEAD_DIM)
    for l in range(N_LAYERS):
        qkv = mm(x, m96_ref[32 * l:32 * l + 32, :]) + bvec(B_BQKV + l, 3 * TOKEN_DIM)
        heads = []
        for h in range(N_HEADS):
            q = qkv[:, h * HEAD_DIM:(h + 1) * HEAD_DIM]
            k = qkv[:, TOKEN_DIM + h * HEAD_DIM:TOKEN_DIM + (h + 1) * HEAD_DIM]
            v = qkv[:, 2 * TOKEN_DIM + h * HEAD_DIM:2 * TOKEN_DIM + (h + 1) * HEAD_DIM]
            sc = jax.lax.dot_general(q.astype(jnp.bfloat16), k.astype(jnp.bfloat16),
                                     (((1,), (1,)), ((), ())),
                                     preferred_element_type=f32) * scale   # (17, 17)
            sc = sc - jnp.max(sc, axis=-1, keepdims=True)
            e = jnp.exp(sc)
            p = e * pl.reciprocal(jnp.sum(e, axis=-1, keepdims=True), approx=True)
            heads.append(mm(p, v))                                         # (17, 16)
        attn = mm(jnp.concatenate(heads, axis=-1),
                  m32_ref[OFF_WO + 32 * l:OFF_WO + 32 * l + 32, :]) + bvec(B_BO + l, 32)
        x = layer_norm(x + attn, bvec(B_L1G + l, 32), bvec(B_L1B + l, 32))
        ff = relu(mm(x, m64_ref[OFF_WF1 + 32 * l:OFF_WF1 + 32 * l + 32, :])
                  + bvec(B_BF1 + l, DIM_FF))
        ff = mm(ff, m32_ref[OFF_WF2 + 64 * l:OFF_WF2 + 64 * l + 64, :]) + bvec(B_BF2 + l, 32)
        x = layer_norm(x + ff, bvec(B_L2G + l, 32), bvec(B_L2B + l, 32))

    # ---- pool (max over 16 visual tokens) + out_linear ------------------------------
    pooled = jnp.concatenate([x[16:17, :],
                              jnp.max(x[0:16, :], axis=0, keepdims=True)], axis=-1)  # (1,64)
    out_ref[0] = mm(pooled, m32_ref[OFF_WOUT:OFF_WOUT + 64, :]) + bvec(B_BOUT, ENC_OUT)


# ----------------------------------------------------------------------------
# JAX-side glue: conv1 im2col (phase-ordered, padded, bf16)
# ----------------------------------------------------------------------------
_R_IDX = (4 * np.arange(2)[:, None, None]          # p   (phase)
          + 8 * np.arange(7)[None, :, None]        # hb  (phase-block)
          + np.arange(8)[None, None, :]            # kh
          ).reshape(-1)                             # max = 4 + 48 + 7 = 59 < 64


def _conv1_patches(img):
    """img (B, IMG, IMG, C) -> (B, 256, K1) bf16, row = pq*64 + hb*8 + wb."""
    b = img.shape[0]
    x = img.astype(jnp.bfloat16)
    x = x[:, _R_IDX]                                 # (B, 112, 64, C)  (p, hb, kh)
    x = x[:, :, _R_IDX]                              # (B, 112, 112, C) (q, wb, kw)
    x = x.reshape(b, 2, 7, 8, 2, 7, 8, IN_CH)        # (B, p, hb, kh, q, wb, kw, C)
    x = jnp.transpose(x, (0, 1, 4, 2, 5, 3, 6, 7))   # (B, p, q, hb, wb, kh, kw, C)
    x = x.reshape(b, 4, 7, 7, K1)
    x = jnp.pad(x, ((0, 0), (0, 0), (0, 1), (0, 1), (0, 0)))
    return x.reshape(b, 256, K1)


def loco_transformer_encoder(packed, x):
    """x: (B, state_dim + visual_dim) -> (B, encoder_out). Mirrors the torch forward."""
    mat32, mat64, mat96, biasbuf = packed
    b = x.shape[0]
    state = x[:, :STATE_DIM].reshape(b, 1, STATE_DIM).astype(jnp.float32)
    img = x[:, STATE_DIM:].reshape(b, IN_CH * CAMERA_NUM, IMG, IMG)        # torch NCHW view
    img = jnp.transpose(img, (0, 2, 3, 1))                                 # NHWC
    patches = _conv1_patches(img)                                          # (B, 256, K1) bf16

    out = pl.pallas_call(
        _loco_encoder_kernel,
        grid=(b,),
        in_specs=[
            pl.BlockSpec((1, 256, K1), lambda i: (i, 0, 0)),
            pl.BlockSpec((1, 1, STATE_DIM), lambda i: (i, 0, 0)),
            pl.BlockSpec(mat32.shape, lambda i: (0, 0)),
            pl.BlockSpec(mat64.shape, lambda i: (0, 0)),
            pl.BlockSpec(mat96.shape, lambda i: (0, 0)),
            pl.BlockSpec(biasbuf.shape, lambda i: (0, 0)),
        ],
        out_specs=pl.BlockSpec((1, 1, ENC_OUT), lambda i: (i, 0, 0)),
        out_shape=jax.ShapeDtypeStruct((b, 1, ENC_OUT), jnp.float32),
        scratch_shapes=[pltpu.VMEM((4, 64, 32), jnp.bfloat16),   # conv1 out (phase planes)
                        pltpu.VMEM((6, 8, 64), jnp.bfloat16)],   # conv2 out (wb padded to 8)
        compiler_params=pltpu.CompilerParams(dimension_semantics=("parallel",)),
    )(patches, state, mat32, mat64, mat96, biasbuf)
    return out.reshape(b, ENC_OUT)


# ----------------------------------------------------------------------------
# Weight packing (done once, outside jit)
# ----------------------------------------------------------------------------
def pack_params(p):
    bf = jnp.bfloat16
    mat32 = jnp.concatenate([
        p["w1"],                              # 256 rows
        p["wup"],                             # 64
        p["wp"],                              # 64
        p["wo"].reshape(N_LAYERS * 32, 32),   # 64
        p["wf2"].reshape(N_LAYERS * 64, 32),  # 128
        p["wout"],                            # 64
    ], axis=0).astype(bf)
    mat64 = jnp.concatenate([
        p["w2"].reshape(16 * 32, 64),         # 512
        p["w3"].reshape(9 * 64, 64),          # 576
        p["wm1"], p["wm2"],                   # 32 + 64
        p["wf1"].reshape(N_LAYERS * 32, 64),  # 64
    ], axis=0).astype(bf)
    mat96 = p["wqkv"].reshape(N_LAYERS * 32, 3 * TOKEN_DIM).astype(bf)
    assert mat32.shape == (M32_ROWS, 32) and mat64.shape == (M64_ROWS, 64)
    assert mat96.shape == (M96_ROWS, 3 * TOKEN_DIM)

    def brow(a):
        a = jnp.asarray(a, jnp.float32).reshape(1, -1)
        return jnp.pad(a, ((0, 0), (0, 128 - a.shape[1])))

    rows = [p["b1"], p["b2"], p["b3"], p["bup"], p["bm1"], p["bm2"], p["bp"],
            p["bqkv"][0], p["bqkv"][1], p["bo"][0], p["bo"][1],
            p["l1g"][0], p["l1g"][1], p["l1b"][0], p["l1b"][1],
            p["bf1"][0], p["bf1"][1], p["bf2"][0], p["bf2"][1],
            p["l2g"][0], p["l2g"][1], p["l2b"][0], p["l2b"][1], p["bout"]]
    biasbuf = jnp.concatenate([brow(r) for r in rows], axis=0)
    assert biasbuf.shape == (BIAS_ROWS, 128)
    return mat32, mat64, mat96, biasbuf


# ----------------------------------------------------------------------------
# Pure-JAX f32 reference (mirrors the torch module) for the correctness check
# ----------------------------------------------------------------------------
def reference_forward(p, x):
    b = x.shape[0]
    state = x[:, :STATE_DIM].astype(jnp.float32)
    img = x[:, STATE_DIM:].reshape(b, IN_CH, IMG, IMG).astype(jnp.float32)
    img = jnp.transpose(img, (0, 2, 3, 1))

    def conv(xin, w, bias, stride):
        y = jax.lax.conv_general_dilated(xin, w, (stride, stride), "VALID",
                                         dimension_numbers=("NHWC", "HWIO", "NHWC"))
        return jax.nn.relu(y + bias.reshape(1, 1, 1, -1))

    y = conv(img, p["w1"].reshape(8, 8, IN_CH, 32), p["b1"], 4)
    y = conv(y, p["w2"], p["b2"], 2)
    y = conv(y, p["w3"], p["b3"], 1)                               # (B, 4, 4, 64)
    vis = y.reshape(b, 16, 64) @ p["wup"] + p["bup"]               # (B, 16, 32)

    s = jax.nn.relu(state @ p["wm1"] + p["bm1"])
    s = jax.nn.relu(s @ p["wm2"] + p["bm2"])
    s = jax.nn.relu(s @ p["wp"] + p["bp"])                         # (B, 32)
    xx = jnp.concatenate([s[:, None, :], vis], axis=1)             # (B, 17, 32), state first

    def ln(t, g, bb):
        mu = t.mean(-1, keepdims=True)
        var = ((t - mu) ** 2).mean(-1, keepdims=True)
        return (t - mu) / jnp.sqrt(var + 1e-5) * g + bb

    for l in range(N_LAYERS):
        qkv = xx @ p["wqkv"][l] + p["bqkv"][l]
        q, k, v = qkv[..., :32], qkv[..., 32:64], qkv[..., 64:]

        def split(t):
            return t.reshape(b, N_TOKENS, N_HEADS, HEAD_DIM).transpose(0, 2, 1, 3)

        sc = jnp.einsum("bhqd,bhkd->bhqk", split(q), split(k)) / math.sqrt(HEAD_DIM)
        pr = jax.nn.softmax(sc, axis=-1)
        oh = jnp.einsum("bhqk,bhkd->bhqd", pr, split(v)).transpose(0, 2, 1, 3)
        attn = oh.reshape(b, N_TOKENS, TOKEN_DIM) @ p["wo"][l] + p["bo"][l]
        xx = ln(xx + attn, p["l1g"][l], p["l1b"][l])
        ff = jax.nn.relu(xx @ p["wf1"][l] + p["bf1"][l]) @ p["wf2"][l] + p["bf2"][l]
        xx = ln(xx + ff, p["l2g"][l], p["l2b"][l])

    out_state = xx[:, 0, :]
    out_vis = xx[:, 1:1 + N_VIS_TOK, :].max(axis=1)
    return jnp.concatenate([out_state, out_vis], axis=-1) @ p["wout"] + p["bout"]


# ----------------------------------------------------------------------------
# Deterministic synthetic parameters (torch layouts converted to matmul layout)
# ----------------------------------------------------------------------------
def init_params(key):
    keys = iter(jax.random.split(key, 32))

    def normal(shape, fan_in):
        return jax.random.normal(next(keys), shape, jnp.float32) / np.sqrt(fan_in)

    p = {}
    w1 = normal((32, IN_CH, 8, 8), IN_CH * 64)
    p["w1"] = jnp.transpose(w1, (2, 3, 1, 0)).reshape(K1, 32)
    p["b1"] = normal((1, 32), 1.0) * 0.01
    w2 = normal((64, 32, 4, 4), 32 * 16)
    p["w2"] = jnp.transpose(w2, (2, 3, 1, 0))                      # (4,4,32,64)
    p["b2"] = normal((1, 64), 1.0) * 0.01
    w3 = normal((64, 64, 3, 3), 64 * 9)
    p["w3"] = jnp.transpose(w3, (2, 3, 1, 0))                      # (3,3,64,64)
    p["b3"] = normal((1, 64), 1.0) * 0.01
    wup = normal((TOKEN_DIM, 64, 1, 1), 64)
    p["wup"] = jnp.transpose(wup[:, :, 0, 0], (1, 0))              # (64, 32)
    p["bup"] = normal((1, TOKEN_DIM), 1.0) * 0.01
    p["wm1"] = jnp.transpose(normal((HIDDEN_DIMS[0], STATE_DIM), STATE_DIM), (1, 0))
    p["bm1"] = normal((1, HIDDEN_DIMS[0]), 1.0) * 0.01
    p["wm2"] = jnp.transpose(normal((HIDDEN_DIMS[1], HIDDEN_DIMS[0]), HIDDEN_DIMS[0]), (1, 0))
    p["bm2"] = normal((1, HIDDEN_DIMS[1]), 1.0) * 0.01
    p["wp"] = jnp.transpose(normal((TOKEN_DIM, HIDDEN_DIMS[1]), HIDDEN_DIMS[1]), (1, 0))
    p["bp"] = normal((1, TOKEN_DIM), 1.0) * 0.01
    e = TOKEN_DIM
    p["wqkv"] = jnp.transpose(normal((N_LAYERS, 3 * e, e), e), (0, 2, 1))   # (L, E, 3E)
    p["bqkv"] = normal((N_LAYERS, 1, 3 * e), 1.0) * 0.01
    p["wo"] = jnp.transpose(normal((N_LAYERS, e, e), e), (0, 2, 1))
    p["bo"] = normal((N_LAYERS, 1, e), 1.0) * 0.01
    p["l1g"] = jnp.ones((N_LAYERS, 1, e), jnp.float32)
    p["l1b"] = jnp.zeros((N_LAYERS, 1, e), jnp.float32)
    p["wf1"] = jnp.transpose(normal((N_LAYERS, DIM_FF, e), e), (0, 2, 1))
    p["bf1"] = normal((N_LAYERS, 1, DIM_FF), 1.0) * 0.01
    p["wf2"] = jnp.transpose(normal((N_LAYERS, e, DIM_FF), DIM_FF), (0, 2, 1))
    p["bf2"] = normal((N_LAYERS, 1, e), 1.0) * 0.01
    p["l2g"] = jnp.ones((N_LAYERS, 1, e), jnp.float32)
    p["l2b"] = jnp.zeros((N_LAYERS, 1, e), jnp.float32)
    p["wout"] = jnp.transpose(normal((ENC_OUT, 2 * TOKEN_DIM), 2 * TOKEN_DIM), (1, 0))
    p["bout"] = normal((1, ENC_OUT), 1.0) * 0.01
    return p


if __name__ == "__main__":
    key = jax.random.PRNGKey(0)
    kp, kx = jax.random.split(key)
    params = init_params(kp)
    packed = pack_params(params)
    # x = [state (32) | visual (4 x 64 x 64 flattened)]  => (2, 16416)
    x = jax.random.normal(kx, (BATCH, STATE_DIM + VISUAL_DIM), jnp.float32)

    out = jax.jit(loco_transformer_encoder)(packed, x)
    out = jax.block_until_ready(out)
    assert out.shape == (BATCH, ENC_OUT), out.shape
    assert bool(jnp.all(jnp.isfinite(out)))

    # Numerical check vs a pure-JAX f32 reference (kernel matmuls run in bf16).
    ref = jax.block_until_ready(reference_forward(params, x))
    err = float(jnp.max(jnp.abs(out - ref)))
    scale = float(jnp.max(jnp.abs(ref)))
    assert np.isfinite(err) and err <= 0.1 * scale + 0.05, (err, scale)

    print("KERNEL_OK")
</pallas_src>

<mosaic_0001>
module attributes {stable_mosaic.version = 11 : i64} {
  func.func @_loco_encoder_kernel(%arg0: i32, %arg1: memref<1x256x256xbf16, #tpu.memory_space<vmem>>, %arg2: memref<1x1x32xf32, #tpu.memory_space<vmem>>, %arg3: memref<640x32xbf16, #tpu.memory_space<vmem>>, %arg4: memref<1248x64xbf16, #tpu.memory_space<vmem>>, %arg5: memref<64x96xbf16, #tpu.memory_space<vmem>>, %arg6: memref<24x128xf32, #tpu.memory_space<vmem>>, %arg7: memref<1x1x32xf32, #tpu.memory_space<vmem>>, %arg8: memref<4x64x32xbf16, #tpu.memory_space<vmem>>, %arg9: memref<6x8x64xbf16, #tpu.memory_space<vmem>>) attributes {dimension_semantics = [#tpu.dimension_semantics<parallel>], iteration_bounds = array<i64: 2>, scalar_prefetch = 0 : i64, scratch_operands = 2 : i64, tpu.core_type = #tpu.core_type<tc>, window_params = [{transform_indices = @transform_0, window_bounds = array<i64: 1, 256, 256>}, {transform_indices = @transform_1, window_bounds = array<i64: 1, 1, 32>}, {pipeline_mode = #tpu.pipeline_mode<synchronous>, transform_indices = @transform_2, window_bounds = array<i64: 640, 32>}, {pipeline_mode = #tpu.pipeline_mode<synchronous>, transform_indices = @transform_3, window_bounds = array<i64: 1248, 64>}, {pipeline_mode = #tpu.pipeline_mode<synchronous>, transform_indices = @transform_4, window_bounds = array<i64: 64, 96>}, {pipeline_mode = #tpu.pipeline_mode<synchronous>, transform_indices = @transform_5, window_bounds = array<i64: 24, 128>}, {transform_indices = @transform_6, window_bounds = array<i64: 1, 1, 32>}]} {
    %c0 = arith.constant 0 : index
    %c0_0 = arith.constant 0 : index
    %c0_1 = arith.constant 0 : index
    %0 = vector.load %arg1[%c0, %c0_0, %c0_1] : memref<1x256x256xbf16, #tpu.memory_space<vmem>>, vector<1x256x256xbf16>
    %1 = vector.shape_cast %0 : vector<1x256x256xbf16> to vector<256x256xbf16>
    %c0_2 = arith.constant 0 : index
    %c0_3 = arith.constant 0 : index
    %2 = vector.load %arg3[%c0_2, %c0_3] : memref<640x32xbf16, #tpu.memory_space<vmem>>, vector<256x32xbf16>
    %cst = arith.constant dense<0.000000e+00> : vector<256x32xf32>
    %3 = tpu.matmul %1, %2, %cst {dimension_numbers = #tpu.dot_dimension_numbers<[1], [0], [0], [1], [0, 0, 1, 1], [], []>} : vector<256x256xbf16>, vector<256x32xbf16>, vector<256x32xf32> -> vector<256x32xf32>
    %c0_4 = arith.constant 0 : index
    %c0_5 = arith.constant 0 : index
    %4 = vector.load %arg6[%c0_4, %c0_5] : memref<24x128xf32, #tpu.memory_space<vmem>>, vector<1x32xf32>
    %5 = vector.broadcast %4 : vector<1x32xf32> to vector<256x32xf32>
    %6 = arith.addf %3, %5 : vector<256x32xf32>
    %cst_6 = arith.constant 0.000000e+00 : f32
    %7 = vector.broadcast %cst_6 : f32 to vector<256x32xf32>
    %8 = arith.maximumf %6, %7 : vector<256x32xf32>
    %9 = arith.truncf %8 : vector<256x32xf32> to vector<256x32xbf16>
    %10 = vector.shape_cast %9 : vector<256x32xbf16> to vector<4x64x32xbf16>
    %c0_7 = arith.constant 0 : index
    %c0_8 = arith.constant 0 : index
    %c0_9 = arith.constant 0 : index
    %11 = vector.load %arg8[%c0_7, %c0_8, %c0_9] : memref<4x64x32xbf16, #tpu.memory_space<vmem>>, vector<4x64x32xbf16>
    tpu.vector_store %arg8[%c0_7, %c0_8, %c0_9], %10 {strides = array<i32>} : memref<4x64x32xbf16, #tpu.memory_space<vmem>>, vector<4x64x32xbf16>,
    %cst_10 = arith.constant 0.000000e+00 : f32
    %12 = vector.broadcast %cst_10 : f32 to vector<6x6x64xf32>
    %c0_11 = arith.constant 0 : index
    %c0_12 = arith.constant 0 : index
    %13 = vector.load %arg4[%c0_11, %c0_12] : memref<1248x64xbf16, #tpu.memory_space<vmem>>, vector<32x64xbf16>
    %c0_13 = arith.constant 0 : index
    %c0_14 = arith.constant 0 : index
    %c0_15 = arith.constant 0 : index
    %14 = vector.load %arg8[%c0_13, %c0_14, %c0_15] : memref<4x64x32xbf16, #tpu.memory_space<vmem>>, vector<1x64x32xbf16>
    %15 = vector.shape_cast %14 : vector<1x64x32xbf16> to vector<64x32xbf16>
    %cst_16 = arith.constant dense<0.000000e+00> : vector<64x64xf32>
    %16 = tpu.matmul %15, %13, %cst_16 {dimension_numbers = #tpu.dot_dimension_numbers<[1], [0], [0], [1], [0, 0, 1, 1], [], []>} : vector<64x32xbf16>, vector<32x64xbf16>, vector<64x64xf32> -> vector<64x64xf32>
    %17 = vector.shape_cast %16 : vector<64x64xf32> to vector<8x8x64xf32>
    %18 = vector.extract_strided_slice %17 {offsets = [0, 0, 0], sizes = [6, 6, 64], strides = [1, 1, 1]} : vector<8x8x64xf32> to vector<6x6x64xf32>
    %19 = arith.addf %12, %18 : vector<6x6x64xf32>
    %c32 = arith.constant 32 : index
    %c0_17 = arith.constant 0 : index
    %20 = vector.load %arg4[%c32, %c0_17] : memref<1248x64xbf16, #tpu.memory_space<vmem>>, vector<32x64xbf16>
    %c1 = arith.constant 1 : index
    %c0_18 = arith.constant 0 : index
    %c0_19 = arith.constant 0 : index
    %21 = vector.load %arg8[%c1, %c0_18, %c0_19] : memref<4x64x32xbf16, #tpu.memory_space<vmem>>, vector<1x64x32xbf16>
    %22 = vector.shape_cast %21 : vector<1x64x32xbf16> to vector<64x32xbf16>
    %cst_20 = arith.constant dense<0.000000e+00> : vector<64x64xf32>
    %23 = tpu.matmul %22, %20, %cst_20 {dimension_numbers = #tpu.dot_dimension_numbers<[1], [0], [0], [1], [0, 0, 1, 1], [], []>} : vector<64x32xbf16>, vector<32x64xbf16>, vector<64x64xf32> -> vector<64x64xf32>
    %24 = vector.shape_cast %23 : vector<64x64xf32> to vector<8x8x64xf32>
    %25 = vector.extract_strided_slice %24 {offsets = [0, 0, 0], sizes = [6, 6, 64], strides = [1, 1, 1]} : vector<8x8x64xf32> to vector<6x6x64xf32>
    %26 = arith.addf %19, %25 : vector<6x6x64xf32>
    %c64 = arith.constant 64 : index
    %c0_21 = arith.constant 0 : index
    %27 = vector.load %arg4[%c64, %c0_21] : memref<1248x64xbf16, #tpu.memory_space<vmem>>, vector<32x64xbf16>
    %c0_22 = arith.constant 0 : index
    %c0_23 = arith.constant 0 : index
    %c0_24 = arith.constant 0 : index
    %28 = vector.load %arg8[%c0_22, %c0_23, %c0_24] : memref<4x64x32xbf16, #tpu.memory_space<vmem>>, vector<1x64x32xbf16>
    %29 = vector.shape_cast %28 : vector<1x64x32xbf16> to vector<64x32xbf16>
    %cst_25 = arith.constant dense<0.000000e+00> : vector<64x64xf32>
    %30 = tpu.matmul %29, %27, %cst_25 {dimension_numbers = #tpu.dot_dimension_numbers<[1], [0], [0], [1], [0, 0, 1, 1], [], []>} : vector<64x32xbf16>, vector<32x64xbf16>, vector<64x64xf32> -> vector<64x64xf32>
    %31 = vector.shape_cast %30 : vector<64x64xf32> to vector<8x8x64xf32>
    %32 = vector.extract_strided_slice %31 {offsets = [0, 1, 0], sizes = [6, 6, 64], strides = [1, 1, 1]} : vector<8x8x64xf32> to vector<6x6x64xf32>
    %33 = arith.addf %26, %32 : vector<6x6x64xf32>
    %c96 = arith.constant 96 : index
    %c0_26 = arith.constant 0 : index
    %34 = vector.load %arg4[%c96, %c0_26] : memref<1248x64xbf16, #tpu.memory_space<vmem>>, vector<32x64xbf16>
    %c1_27 = arith.constant 1 : index
    %c0_28 = arith.constant 0 : index
    %c0_29 = arith.constant 0 : index
    %35 = vector.load %arg8[%c1_27, %c0_28, %c0_29] : memref<4x64x32xbf16, #tpu.memory_space<vmem>>, vector<1x64x32xbf16>
    %36 = vector.shape_cast %35 : vector<1x64x32xbf16> to vector<64x32xbf16>
    %cst_30 = arith.constant dense<0.000000e+00> : vector<64x64xf32>
    %37 = tpu.matmul %36, %34, %cst_30 {dimension_numbers = #tpu.dot_dimension_numbers<[1], [0], [0], [1], [0, 0, 1, 1], [], []>} : vector<64x32xbf16>, vector<32x64xbf16>, vector<64x64xf32> -> vector<64x64xf32>
    %38 = vector.shape_cast %37 : vector<64x64xf32> to vector<8x8x64xf32>
    %39 = vector.extract_strided_slice %38 {offsets = [0, 1, 0], sizes = [6, 6, 64], strides = [1, 1, 1]} : vector<8x8x64xf32> to vector<6x6x64xf32>
    %40 = arith.addf %33, %39 : vector<6x6x64xf32>
    %c128 = arith.constant 128 : index
    %c0_31 = arith.constant 0 : index
    %41 = vector.load %arg4[%c128, %c0_31] : memref<1248x64xbf16, #tpu.memory_space<vmem>>, vector<32x64xbf16>
    %c2 = arith.constant 2 : index
    %c0_32 = arith.constant 0 : index
    %c0_33 = arith.constant 0 : index
    %42 = vector.load %arg8[%c2, %c0_32, %c0_33] : memref<4x64x32xbf16, #tpu.memory_space<vmem>>, vector<1x64x32xbf16>
    %43 = vector.shape_cast %42 : vector<1x64x32xbf16> to vector<64x32xbf16>
    %cst_34 = arith.constant dense<0.000000e+00> : vector<64x64xf32>
    %44 = tpu.matmul %43, %41, %cst_34 {dimension_numbers = #tpu.dot_dimension_numbers<[1], [0], [0], [1], [0, 0, 1, 1], [], []>} : vector<64x32xbf16>, vector<32x64xbf16>, vector<64x64xf32> -> vector<64x64xf32>
    %45 = vector.shape_cast %44 : vector<64x64xf32> to vector<8x8x64xf32>
    %46 = vector.extract_strided_slice %45 {offsets = [0, 0, 0], sizes = [6, 6, 64], strides = [1, 1, 1]} : vector<8x8x64xf32> to vector<6x6x64xf32>
    %47 = arith.addf %40, %46 : vector<6x6x64xf32>
    %c160 = arith.constant 160 : index
    %c0_35 = arith.constant 0 : index
    %48 = vector.load %arg4[%c160, %c0_35] : memref<1248x64xbf16, #tpu.memory_space<vmem>>, vector<32x64xbf16>
    %c3 = arith.constant 3 : index
    %c0_36 = arith.constant 0 : index
    %c0_37 = arith.constant 0 : index
    %49 = vector.load %arg8[%c3, %c0_36, %c0_37] : memref<4x64x32xbf16, #tpu.memory_space<vmem>>, vector<1x64x32xbf16>
    %50 = vector.shape_cast %49 : vector<1x64x32xbf16> to vector<64x32xbf16>
    %cst_38 = arith.constant dense<0.000000e+00> : vector<64x64xf32>
    %51 = tpu.matmul %50, %48, %cst_38 {dimension_numbers = #tpu.dot_dimension_numbers<[1], [0], [0], [1], [0, 0, 1, 1], [], []>} : vector<64x32xbf16>, vector<32x64xbf16>, vector<64x64xf32> -> vector<64x64xf32>
    %52 = vector.shape_cast %51 : vector<64x64xf32> to vector<8x8x64xf32>
    %53 = vector.extract_strided_slice %52 {offsets = [0, 0, 0], sizes = [6, 6, 64], strides = [1, 1, 1]} : vector<8x8x64xf32> to vector<6x6x64xf32>
    %54 = arith.addf %47, %53 : vector<6x6x64xf32>
    %c192 = arith.constant 192 : index
    %c0_39 = arith.constant 0 : index
    %55 = vector.load %arg4[%c192, %c0_39] : memref<1248x64xbf16, #tpu.memory_space<vmem>>, vector<32x64xbf16>
    %c2_40 = arith.constant 2 : index
    %c0_41 = arith.constant 0 : index
    %c0_42 = arith.constant 0 : index
    %56 = vector.load %arg8[%c2_40, %c0_41, %c0_42] : memref<4x64x32xbf16, #tpu.memory_space<vmem>>, vector<1x64x32xbf16>
    %57 = vector.shape_cast %56 : vector<1x64x32xbf16> to vector<64x32xbf16>
    %cst_43 = arith.constant dense<0.000000e+00> : vector<64x64xf32>
    %58 = tpu.matmul %57, %55, %cst_43 {dimension_numbers = #tpu.dot_dimension_numbers<[1], [0], [0], [1], [0, 0, 1, 1], [], []>} : vector<64x32xbf16>, vector<32x64xbf16>, vector<64x64xf32> -> vector<64x64xf32>
    %59 = vector.shape_cast %58 : vector<64x64xf32> to vector<8x8x64xf32>
    %60 = vector.extract_strided_slice %59 {offsets = [0, 1, 0], sizes = [6, 6, 64], strides = [1, 1, 1]} : vector<8x8x64xf32> to vector<6x6x64xf32>
    %61 = arith.addf %54, %60 : vector<6x6x64xf32>
    %c224 = arith.constant 224 : index
    %c0_44 = arith.constant 0 : index
    %62 = vector.load %arg4[%c224, %c0_44] : memref<1248x64xbf16, #tpu.memory_space<vmem>>, vector<32x64xbf16>
    %c3_45 = arith.constant 3 : index
    %c0_46 = arith.constant 0 : index
    %c0_47 = arith.constant 0 : index
    %63 = vector.load %arg8[%c3_45, %c0_46, %c0_47] : memref<4x64x32xbf16, #tpu.memory_space<vmem>>, vector<1x64x32xbf16>
    %64 = vector.shape_cast %63 : vector<1x64x32xbf16> to vector<64x32xbf16>
    %cst_48 = arith.constant dense<0.000000e+00> : vector<64x64xf32>
    %65 = tpu.matmul %64, %62, %cst_48 {dimension_numbers = #tpu.dot_dimension_numbers<[1], [0], [0], [1], [0, 0, 1, 1], [], []>} : vector<64x32xbf16>, vector<32x64xbf16>, vector<64x64xf32> -> vector<64x64xf32>
    %66 = vector.shape_cast %65 : vector<64x64xf32> to vector<8x8x64xf32>
    %67 = vector.extract_strided_slice %66 {offsets = [0, 1, 0], sizes = [6, 6, 64], strides = [1, 1, 1]} : vector<8x8x64xf32> to vector<6x6x64xf32>
    %68 = arith.addf %61, %67 : vector<6x6x64xf32>
    %c256 = arith.constant 256 : index
    %c0_49 = arith.constant 0 : index
    %69 = vector.load %arg4[%c256, %c0_49] : memref<1248x64xbf16, #tpu.memory_space<vmem>>, vector<32x64xbf16>
    %c0_50 = arith.constant 0 : index
    %c0_51 = arith.constant 0 : index
    %c0_52 = arith.constant 0 : index
    %70 = vector.load %arg8[%c0_50, %c0_51, %c0_52] : memref<4x64x32xbf16, #tpu.memory_space<vmem>>, vector<1x64x32xbf16>
    %71 = vector.shape_cast %70 : vector<1x64x32xbf16> to vector<64x32xbf16>
    %cst_53 = arith.constant dense<0.000000e+00> : vector<64x64xf32>
    %72 = tpu.matmul %71, %69, %cst_53 {dimension_numbers = #tpu.dot_dimension_numbers<[1], [0], [0], [1], [0, 0, 1, 1], [], []>} : vector<64x32xbf16>, vector<32x64xbf16>, vector<64x64xf32> -> vector<64x64xf32>
    %73 = vector.shape_cast %72 : vector<64x64xf32> to vector<8x8x64xf32>
    %74 = vector.extract_strided_slice %73 {offsets = [1, 0, 0], sizes = [6, 6, 64], strides = [1, 1, 1]} : vector<8x8x64xf32> to vector<6x6x64xf32>
    %75 = arith.addf %68, %74 : vector<6x6x64xf32>
    %c288 = arith.constant 288 : index
    %c0_54 = arith.constant 0 : index
    %76 = vector.load %arg4[%c288, %c0_54] : memref<1248x64xbf16, #tpu.memory_space<vmem>>, vector<32x64xbf16>
    %c1_55 = arith.constant 1 : index
    %c0_56 = arith.constant 0 : index
    %c0_57 = arith.constant 0 : index
    %77 = vector.load %arg8[%c1_55, %c0_56, %c0_57] : memref<4x64x32xbf16, #tpu.memory_space<vmem>>, vector<1x64x32xbf16>
    %78 = vector.shape_cast %77 : vector<1x64x32xbf16> to vector<64x32xbf16>
    %cst_58 = arith.constant dense<0.000000e+00> : vector<64x64xf32>
    %79 = tpu.matmul %78, %76, %cst_58 {dimension_numbers = #tpu.dot_dimension_numbers<[1], [0], [0], [1], [0, 0, 1, 1], [], []>} : vector<64x32xbf16>, vector<32x64xbf16>, vector<64x64xf32> -> vector<64x64xf32>
    %80 = vector.shape_cast %79 : vector<64x64xf32> to vector<8x8x64xf32>
    %81 = vector.extract_strided_slice %80 {offsets = [1, 0, 0], sizes = [6, 6, 64], strides = [1, 1, 1]} : vector<8x8x64xf32> to vector<6x6x64xf32>
    %82 = arith.addf %75, %81 : vector<6x6x64xf32>
    %c320 = arith.constant 320 : index
    %c0_59 = arith.constant 0 : index
    %83 = vector.load %arg4[%c320, %c0_59] : memref<1248x64xbf16, #tpu.memory_space<vmem>>, vector<32x64xbf16>
    %c0_60 = arith.constant 0 : index
    %c0_61 = arith.constant 0 : index
    %c0_62 = arith.constant 0 : index
    %84 = vector.load %arg8[%c0_60, %c0_61, %c0_62] : memref<4x64x32xbf16, #tpu.memory_space<vmem>>, vector<1x64x32xbf16>
    %85 = vector.shape_cast %84 : vector<1x64x32xbf16> to vector<64x32xbf16>
    %cst_63 = arith.constant dense<0.000000e+00> : vector<64x64xf32>
    %86 = tpu.matmul %85, %83, %cst_63 {dimension_numbers = #tpu.dot_dimension_numbers<[1], [0], [0], [1], [0, 0, 1, 1], [], []>} : vector<64x32xbf16>, vector<32x64xbf16>, vector<64x64xf32> -> vector<64x64xf32>
    %87 = vector.shape_cast %86 : vector<64x64xf32> to vector<8x8x64xf32>
    %88 = vector.extract_strided_slice %87 {offsets = [1, 1, 0], sizes = [6, 6, 64], strides = [1, 1, 1]} : vector<8x8x64xf32> to vector<6x6x64xf32>
    %89 = arith.addf %82, %88 : vector<6x6x64xf32>
    %c352 = arith.constant 352 : index
    %c0_64 = arith.constant 0 : index
    %90 = vector.load %arg4[%c352, %c0_64] : memref<1248x64xbf16, #tpu.memory_space<vmem>>, vector<32x64xbf16>
    %c1_65 = arith.constant 1 : index
    %c0_66 = arith.constant 0 : index
    %c0_67 = arith.constant 0 : index
    %91 = vector.load %arg8[%c1_65, %c0_66, %c0_67] : memref<4x64x32xbf16, #tpu.memory_space<vmem>>, vector<1x64x32xbf16>
    %92 = vector.shape_cast %91 : vector<1x64x32xbf16> to vector<64x32xbf16>
    %cst_68 = arith.constant dense<0.000000e+00> : vector<64x64xf32>
    %93 = tpu.matmul %92, %90, %cst_68 {dimension_numbers = #tpu.dot_dimension_numbers<[1], [0], [0], [1], [0, 0, 1, 1], [], []>} : vector<64x32xbf16>, vector<32x64xbf16>, vector<64x64xf32> -> vector<64x64xf32>
    %94 = vector.shape_cast %93 : vector<64x64xf32> to vector<8x8x64xf32>
    %95 = vector.extract_strided_slice %94 {offsets = [1, 1, 0], sizes = [6, 6, 64], strides = [1, 1, 1]} : vector<8x8x64xf32> to vector<6x6x64xf32>
    %96 = arith.addf %89, %95 : vector<6x6x64xf32>
    %c384 = arith.constant 384 : index
    %c0_69 = arith.constant 0 : index
    %97 = vector.load %arg4[%c384, %c0_69] : memref<1248x64xbf16, #tpu.memory_space<vmem>>, vector<32x64xbf16>
    %c2_70 = arith.constant 2 : index
    %c0_71 = arith.constant 0 : index
    %c0_72 = arith.constant 0 : index
    %98 = vector.load %arg8[%c2_70, %c0_71, %c0_72] : memref<4x64x32xbf16, #tpu.memory_space<vmem>>, vector<1x64x32xbf16>
    %99 = vector.shape_cast %98 : vector<1x64x32xbf16> to vector<64x32xbf16>
    %cst_73 = arith.constant dense<0.000000e+00> : vector<64x64xf32>
    %100 = tpu.matmul %99, %97, %cst_73 {dimension_numbers = #tpu.dot_dimension_numbers<[1], [0], [0], [1], [0, 0, 1, 1], [], []>} : vector<64x32xbf16>, vector<32x64xbf16>, vector<64x64xf32> -> vector<64x64xf32>
    %101 = vector.shape_cast %100 : vector<64x64xf32> to vector<8x8x64xf32>
    %102 = vector.extract_strided_slice %101 {offsets = [1, 0, 0], sizes = [6, 6, 64], strides = [1, 1, 1]} : vector<8x8x64xf32> to vector<6x6x64xf32>
    %103 = arith.addf %96, %102 : vector<6x6x64xf32>
    %c416 = arith.constant 416 : index
    %c0_74 = arith.constant 0 : index
    %104 = vector.load %arg4[%c416, %c0_74] : memref<1248x64xbf16, #tpu.memory_space<vmem>>, vector<32x64xbf16>
    %c3_75 = arith.constant 3 : index
    %c0_76 = arith.constant 0 : index
    %c0_77 = arith.constant 0 : index
    %105 = vector.load %arg8[%c3_75, %c0_76, %c0_77] : memref<4x64x32xbf16, #tpu.memory_space<vmem>>, vector<1x64x32xbf16>
    %106 = vector.shape_cast %105 : vector<1x64x32xbf16> to vector<64x32xbf16>
    %cst_78 = arith.constant dense<0.000000e+00> : vector<64x64xf32>
    %107 = tpu.matmul %106, %104, %cst_78 {dimension_numbers = #tpu.dot_dimension_numbers<[1], [0], [0], [1], [0, 0, 1, 1], [], []>} : vector<64x32xbf16>, vector<32x64xbf16>, vector<64x64xf32> -> vector<64x64xf32>
    %108 = vector.shape_cast %107 : vector<64x64xf32> to vector<8x8x64xf32>
    %109 = vector.extract_strided_slice %108 {offsets = [1, 0, 0], sizes = [6, 6, 64], strides = [1, 1, 1]} : vector<8x8x64xf32> to vector<6x6x64xf32>
    %110 = arith.addf %103, %109 : vector<6x6x64xf32>
    %c448 = arith.constant 448 : index
    %c0_79 = arith.constant 0 : index
    %111 = vector.load %arg4[%c448, %c0_79] : memref<1248x64xbf16, #tpu.memory_space<vmem>>, vector<32x64xbf16>
    %c2_80 = arith.constant 2 : index
    %c0_81 = arith.constant 0 : index
    %c0_82 = arith.constant 0 : index
    %112 = vector.load %arg8[%c2_80, %c0_81, %c0_82] : memref<4x64x32xbf16, #tpu.memory_space<vmem>>, vector<1x64x32xbf16>
    %113 = vector.shape_cast %112 : vector<1x64x32xbf16> to vector<64x32xbf16>
    %cst_83 = arith.constant dense<0.000000e+00> : vector<64x64xf32>
    %114 = tpu.matmul %113, %111, %cst_83 {dimension_numbers = #tpu.dot_dimension_numbers<[1], [0], [0], [1], [0, 0, 1, 1], [], []>} : vector<64x32xbf16>, vector<32x64xbf16>, vector<64x64xf32> -> vector<64x64xf32>
    %115 = vector.shape_cast %114 : vector<64x64xf32> to vector<8x8x64xf32>
    %116 = vector.extract_strided_slice %115 {offsets = [1, 1, 0], sizes = [6, 6, 64], strides = [1, 1, 1]} : vector<8x8x64xf32> to vector<6x6x64xf32>
    %117 = arith.addf %110, %116 : vector<6x6x64xf32>
    %c480 = arith.constant 480 : index
    %c0_84 = arith.constant 0 : index
    %118 = vector.load %arg4[%c480, %c0_84] : memref<1248x64xbf16, #tpu.memory_space<vmem>>, vector<32x64xbf16>
    %c3_85 = arith.constant 3 : index
    %c0_86 = arith.constant 0 : index
    %c0_87 = arith.constant 0 : index
    %119 = vector.load %arg8[%c3_85, %c0_86, %c0_87] : memref<4x64x32xbf16, #tpu.memory_space<vmem>>, vector<1x64x32xbf16>
    %120 = vector.shape_cast %119 : vector<1x64x32xbf16> to vector<64x32xbf16>
    %cst_88 = arith.constant dense<0.000000e+00> : vector<64x64xf32>
    %121 = tpu.matmul %120, %118, %cst_88 {dimension_numbers = #tpu.dot_dimension_numbers<[1], [0], [0], [1], [0, 0, 1, 1], [], []>} : vector<64x32xbf16>, vector<32x64xbf16>, vector<64x64xf32> -> vector<64x64xf32>
    %122 = vector.shape_cast %121 : vector<64x64xf32> to vector<8x8x64xf32>
    %123 = vector.extract_strided_slice %122 {offsets = [1, 1, 0], sizes = [6, 6, 64], strides = [1, 1, 1]} : vector<8x8x64xf32> to vector<6x6x64xf32>
    %124 = arith.addf %117, %123 : vector<6x6x64xf32>
    %c1_89 = arith.constant 1 : index
    %c0_90 = arith.constant 0 : index
    %125 = vector.load %arg6[%c1_89, %c0_90] : memref<24x128xf32, #tpu.memory_space<vmem>>, vector<1x64xf32>
    %126 = vector.shape_cast %125 : vector<1x64xf32> to vector<1x1x64xf32>
    %127 = vector.broadcast %126 : vector<1x1x64xf32> to vector<6x6x64xf32>
    %128 = arith.addf %124, %127 : vector<6x6x64xf32>
    %cst_91 = arith.constant 0.000000e+00 : f32
    %129 = vector.broadcast %cst_91 : f32 to vector<6x6x64xf32>
    %130 = arith.maximumf %128, %129 : vector<6x6x64xf32>
    %cst_92 = arith.constant 0.000000e+00 : f32
    %131 = vector.broadcast %cst_92 : f32 to vector<6x2x64xf32>
    %132 = tpu.concatenate %130, %131 in 1 : vector<6x6x64xf32>, vector<6x2x64xf32> -> vector<6x8x64xf32>
    %133 = arith.truncf %132 : vector<6x8x64xf32> to vector<6x8x64xbf16>
    %c0_93 = arith.constant 0 : index
    %c0_94 = arith.constant 0 : index
    %c0_95 = arith.constant 0 : index
    %134 = vector.load %arg9[%c0_93, %c0_94, %c0_95] : memref<6x8x64xbf16, #tpu.memory_space<vmem>>, vector<6x8x64xbf16>
    tpu.vector_store %arg9[%c0_93, %c0_94, %c0_95], %133 {strides = array<i32>} : memref<6x8x64xbf16, #tpu.memory_space<vmem>>, vector<6x8x64xbf16>,
    %cst_96 = arith.constant 0.000000e+00 : f32
    %135 = vector.broadcast %cst_96 : f32 to vector<4x4x64xf32>
    %c512 = arith.constant 512 : index
    %c0_97 = arith.constant 0 : index
    %136 = vector.load %arg4[%c512, %c0_97] : memref<1248x64xbf16, #tpu.memory_space<vmem>>, vector<64x64xbf16>
    %c0_98 = arith.constant 0 : index
    %c0_99 = arith.constant 0 : index
    %c0_100 = arith.constant 0 : index
    %137 = vector.load %arg9[%c0_98, %c0_99, %c0_100] : memref<6x8x64xbf16, #tpu.memory_space<vmem>>, vector<4x8x64xbf16>
    %138 = vector.shape_cast %137 : vector<4x8x64xbf16> to vector<32x64xbf16>
    %cst_101 = arith.constant dense<0.000000e+00> : vector<32x64xf32>
    %139 = tpu.matmul %138, %136, %cst_101 {dimension_numbers = #tpu.dot_dimension_numbers<[1], [0], [0], [1], [0, 0, 1, 1], [], []>} : vector<32x64xbf16>, vector<64x64xbf16>, vector<32x64xf32> -> vector<32x64xf32>
    %140 = vector.shape_cast %139 : vector<32x64xf32> to vector<4x8x64xf32>
    %141 = vector.extract_strided_slice %140 {offsets = [0, 0, 0], sizes = [4, 4, 64], strides = [1, 1, 1]} : vector<4x8x64xf32> to vector<4x4x64xf32>
    %142 = arith.addf %135, %141 : vector<4x4x64xf32>
    %c576 = arith.constant 576 : index
    %c0_102 = arith.constant 0 : index
    %143 = vector.load %arg4[%c576, %c0_102] : memref<1248x64xbf16, #tpu.memory_space<vmem>>, vector<64x64xbf16>
    %c0_103 = arith.constant 0 : index
    %c0_104 = arith.constant 0 : index
    %c0_105 = arith.constant 0 : index
    %144 = vector.load %arg9[%c0_103, %c0_104, %c0_105] : memref<6x8x64xbf16, #tpu.memory_space<vmem>>, vector<4x8x64xbf16>
    %145 = vector.shape_cast %144 : vector<4x8x64xbf16> to vector<32x64xbf16>
    %cst_106 = arith.constant dense<0.000000e+00> : vector<32x64xf32>
    %146 = tpu.matmul %145, %143, %cst_106 {dimension_numbers = #tpu.dot_dimension_numbers<[1], [0], [0], [1], [0, 0, 1, 1], [], []>} : vector<32x64xbf16>, vector<64x64xbf16>, vector<32x64xf32> -> vector<32x64xf32>
    %147 = vector.shape_cast %146 : vector<32x64xf32> to vector<4x8x64xf32>
    %148 = vector.extract_strided_slice %147 {offsets = [0, 1, 0], sizes = [4, 4, 64], strides = [1, 1, 1]} : vector<4x8x64xf32> to vector<4x4x64xf32>
    %149 = arith.addf %142, %148 : vector<4x4x64xf32>
    %c640 = arith.constant 640 : index
    %c0_107 = arith.constant 0 : index
    %150 = vector.load %arg4[%c640, %c0_107] : memref<1248x64xbf16, #tpu.memory_space<vmem>>, vector<64x64xbf16>
    %c0_108 = arith.constant 0 : index
    %c0_109 = arith.constant 0 : index
    %c0_110 = arith.constant 0 : index
    %151 = vector.load %arg9[%c0_108, %c0_109, %c0_110] : memref<6x8x64xbf16, #tpu.memory_space<vmem>>, vector<4x8x64xbf16>
    %152 = vector.shape_cast %151 : vector<4x8x64xbf16> to vector<32x64xbf16>
    %cst_111 = arith.constant dense<0.000000e+00> : vector<32x64xf32>
    %153 = tpu.matmul %152, %150, %cst_111 {dimension_numbers = #tpu.dot_dimension_numbers<[1], [0], [0], [1], [0, 0, 1, 1], [], []>} : vector<32x64xbf16>, vector<64x64xbf16>, vector<32x64xf32> -> vector<32x64xf32>
    %154 = vector.shape_cast %153 : vector<32x64xf32> to vector<4x8x64xf32>
    %155 = vector.extract_strided_slice %154 {offsets = [0, 2, 0], sizes = [4, 4, 64], strides = [1, 1, 1]} : vector<4x8x64xf32> to vector<4x4x64xf32>
    %156 = arith.addf %149, %155 : vector<4x4x64xf32>
    %c704 = arith.constant 704 : index
    %c0_112 = arith.constant 0 : index
    %157 = vector.load %arg4[%c704, %c0_112] : memref<1248x64xbf16, #tpu.memory_space<vmem>>, vector<64x64xbf16>
    %c1_113 = arith.constant 1 : index
    %c0_114 = arith.constant 0 : index
    %c0_115 = arith.constant 0 : index
    %158 = vector.load %arg9[%c1_113, %c0_114, %c0_115] : memref<6x8x64xbf16, #tpu.memory_space<vmem>>, vector<4x8x64xbf16>
    %159 = vector.shape_cast %158 : vector<4x8x64xbf16> to vector<32x64xbf16>
    %cst_116 = arith.constant dense<0.000000e+00> : vector<32x64xf32>
    %160 = tpu.matmul %159, %157, %cst_116 {dimension_numbers = #tpu.dot_dimension_numbers<[1], [0], [0], [1], [0, 0, 1, 1], [], []>} : vector<32x64xbf16>, vector<64x64xbf16>, vector<32x64xf32> -> vector<32x64xf32>
    %161 = vector.shape_cast %160 : vector<32x64xf32> to vector<4x8x64xf32>
    %162 = vector.extract_strided_slice %161 {offsets = [0, 0, 0], sizes = [4, 4, 64], strides = [1, 1, 1]} : vector<4x8x64xf32> to vector<4x4x64xf32>
    %163 = arith.addf %156, %162 : vector<4x4x64xf32>
    %c768 = arith.constant 768 : index
    %c0_117 = arith.constant 0 : index
    %164 = vector.load %arg4[%c768, %c0_117] : memref<1248x64xbf16, #tpu.memory_space<vmem>>, vector<64x64xbf16>
    %c1_118 = arith.constant 1 : index
    %c0_119 = arith.constant 0 : index
    %c0_120 = arith.constant 0 : index
    %165 = vector.load %arg9[%c1_118, %c0_119, %c0_120] : memref<6x8x64xbf16, #tpu.memory_space<vmem>>, vector<4x8x64xbf16>
    %166 = vector.shape_cast %165 : vector<4x8x64xbf16> to vector<32x64xbf16>
    %cst_121 = arith.constant dense<0.000000e+00> : vector<32x64xf32>
    %167 = tpu.matmul %166, %164, %cst_121 {dimension_numbers = #tpu.dot_dimension_numbers<[1], [0], [0], [1], [0, 0, 1, 1], [], []>} : vector<32x64xbf16>, vector<64x64xbf16>, vector<32x64xf32> -> vector<32x64xf32>
    %168 = vector.shape_cast %167 : vector<32x64xf32> to vector<4x8x64xf32>
    %169 = vector.extract_strided_slice %168 {offsets = [0, 1, 0], sizes = [4, 4, 64], strides = [1, 1, 1]} : vector<4x8x64xf32> to vector<4x4x64xf32>
    %170 = arith.addf %163, %169 : vector<4x4x64xf32>
    %c832 = arith.constant 832 : index
    %c0_122 = arith.constant 0 : index
    %171 = vector.load %arg4[%c832, %c0_122] : memref<1248x64xbf16, #tpu.memory_space<vmem>>, vector<64x64xbf16>
    %c1_123 = arith.constant 1 : index
    %c0_124 = arith.constant 0 : index
    %c0_125 = arith.constant 0 : index
    %172 = vector.load %arg9[%c1_123, %c0_124, %c0_125] : memref<6x8x64xbf16, #tpu.memory_space<vmem>>, vector<4x8x64xbf16>
    %173 = vector.shape_cast %172 : vector<4x8x64xbf16> to vector<32x64xbf16>
    %cst_126 = arith.constant dense<0.000000e+00> : vector<32x64xf32>
    %174 = tpu.matmul %173, %171, %cst_126 {dimension_numbers = #tpu.dot_dimension_numbers<[1], [0], [0], [1], [0, 0, 1, 1], [], []>} : vector<32x64xbf16>, vector<64x64xbf16>, vector<32x64xf32> -> vector<32x64xf32>
    %175 = vector.shape_cast %174 : vector<32x64xf32> to vector<4x8x64xf32>
    %176 = vector.extract_strided_slice %175 {offsets = [0, 2, 0], sizes = [4, 4, 64], strides = [1, 1, 1]} : vector<4x8x64xf32> to vector<4x4x64xf32>
    %177 = arith.addf %170, %176 : vector<4x4x64xf32>
    %c896 = arith.constant 896 : index
    %c0_127 = arith.constant 0 : index
    %178 = vector.load %arg4[%c896, %c0_127] : memref<1248x64xbf16, #tpu.memory_space<vmem>>, vector<64x64xbf16>
    %c2_128 = arith.constant 2 : index
    %c0_129 = arith.constant 0 : index
    %c0_130 = arith.constant 0 : index
    %179 = vector.load %arg9[%c2_128, %c0_129, %c0_130] : memref<6x8x64xbf16, #tpu.memory_space<vmem>>, vector<4x8x64xbf16>
    %180 = vector.shape_cast %179 : vector<4x8x64xbf16> to vector<32x64xbf16>
    %cst_131 = arith.constant dense<0.000000e+00> : vector<32x64xf32>
    %181 = tpu.matmul %180, %178, %cst_131 {dimension_numbers = #tpu.dot_dimension_numbers<[1], [0], [0], [1], [0, 0, 1, 1], [], []>} : vector<32x64xbf16>, vector<64x64xbf16>, vector<32x64xf32> -> vector<32x64xf32>
    %182 = vector.shape_cast %181 : vector<32x64xf32> to vector<4x8x64xf32>
    %183 = vector.extract_strided_slice %182 {offsets = [0, 0, 0], sizes = [4, 4, 64], strides = [1, 1, 1]} : vector<4x8x64xf32> to vector<4x4x64xf32>
    %184 = arith.addf %177, %183 : vector<4x4x64xf32>
    %c960 = arith.constant 960 : index
    %c0_132 = arith.constant 0 : index
    %185 = vector.load %arg4[%c960, %c0_132] : memref<1248x64xbf16, #tpu.memory_space<vmem>>, vector<64x64xbf16>
    %c2_133 = arith.constant 2 : index
    %c0_134 = arith.constant 0 : index
    %c0_135 = arith.constant 0 : index
    %186 = vector.load %arg9[%c2_133, %c0_134, %c0_135] : memref<6x8x64xbf16, #tpu.memory_space<vmem>>, vector<4x8x64xbf16>
    %187 = vector.shape_cast %186 : vector<4x8x64xbf16> to vector<32x64xbf16>
    %cst_136 = arith.constant dense<0.000000e+00> : vector<32x64xf32>
    %188 = tpu.matmul %187, %185, %cst_136 {dimension_numbers = #tpu.dot_dimension_numbers<[1], [0], [0], [1], [0, 0, 1, 1], [], []>} : vector<32x64xbf16>, vector<64x64xbf16>, vector<32x64xf32> -> vector<32x64xf32>
    %189 = vector.shape_cast %188 : vector<32x64xf32> to vector<4x8x64xf32>
    %190 = vector.extract_strided_slice %189 {offsets = [0, 1, 0], sizes = [4, 4, 64], strides = [1, 1, 1]} : vector<4x8x64xf32> to vector<4x4x64xf32>
    %191 = arith.addf %184, %190 : vector<4x4x64xf32>
    %c1024 = arith.constant 1024 : index
    %c0_137 = arith.constant 0 : index
    %192 = vector.load %arg4[%c1024, %c0_137] : memref<1248x64xbf16, #tpu.memory_space<vmem>>, vector<64x64xbf16>
    %c2_138 = arith.constant 2 : index
    %c0_139 = arith.constant 0 : index
    %c0_140 = arith.constant 0 : index
    %193 = vector.load %arg9[%c2_138, %c0_139, %c0_140] : memref<6x8x64xbf16, #tpu.memory_space<vmem>>, vector<4x8x64xbf16>
    %194 = vector.shape_cast %193 : vector<4x8x64xbf16> to vector<32x64xbf16>
    %cst_141 = arith.constant dense<0.000000e+00> : vector<32x64xf32>
    %195 = tpu.matmul %194, %192, %cst_141 {dimension_numbers = #tpu.dot_dimension_numbers<[1], [0], [0], [1], [0, 0, 1, 1], [], []>} : vector<32x64xbf16>, vector<64x64xbf16>, vector<32x64xf32> -> vector<32x64xf32>
    %196 = vector.shape_cast %195 : vector<32x64xf32> to vector<4x8x64xf32>
    %197 = vector.extract_strided_slice %196 {offsets = [0, 2, 0], sizes = [4, 4, 64], strides = [1, 1, 1]} : vector<4x8x64xf32> to vector<4x4x64xf32>
    %198 = arith.addf %191, %197 : vector<4x4x64xf32>
    %c2_142 = arith.constant 2 : index
    %c0_143 = arith.constant 0 : index
    %199 = vector.load %arg6[%c2_142, %c0_143] : memref<24x128xf32, #tpu.memory_space<vmem>>, vector<1x64xf32>
    %200 = vector.shape_cast %199 : vector<1x64xf32> to vector<1x1x64xf32>
    %201 = vector.broadcast %200 : vector<1x1x64xf32> to vector<4x4x64xf32>
    %202 = arith.addf %198, %201 : vector<4x4x64xf32>
    %cst_144 = arith.constant 0.000000e+00 : f32
    %203 = vector.broadcast %cst_144 : f32 to vector<4x4x64xf32>
    %204 = arith.maximumf %202, %203 : vector<4x4x64xf32>
    %205 = vector.extract_strided_slice %204 {offsets = [0, 0, 0], sizes = [1, 4, 64], strides = [1, 1, 1]} : vector<4x4x64xf32> to vector<1x4x64xf32>
    %206 = vector.shape_cast %205 : vector<1x4x64xf32> to vector<4x64xf32>
    %207 = vector.extract_strided_slice %204 {offsets = [1, 0, 0], sizes = [1, 4, 64], strides = [1, 1, 1]} : vector<4x4x64xf32> to vector<1x4x64xf32>
    %208 = vector.shape_cast %207 : vector<1x4x64xf32> to vector<4x64xf32>
    %209 = vector.extract_strided_slice %204 {offsets = [2, 0, 0], sizes = [1, 4, 64], strides = [1, 1, 1]} : vector<4x4x64xf32> to vector<1x4x64xf32>
    %210 = vector.shape_cast %209 : vector<1x4x64xf32> to vector<4x64xf32>
    %211 = vector.extract_strided_slice %204 {offsets = [3, 0, 0], sizes = [1, 4, 64], strides = [1, 1, 1]} : vector<4x4x64xf32> to vector<1x4x64xf32>
    %212 = vector.shape_cast %211 : vector<1x4x64xf32> to vector<4x64xf32>
    %213 = tpu.concatenate %206, %208, %210, %212 in 0 : vector<4x64xf32>, vector<4x64xf32>, vector<4x64xf32>, vector<4x64xf32> -> vector<16x64xf32>
    %c256_145 = arith.constant 256 : index
    %c0_146 = arith.constant 0 : index
    %214 = vector.load %arg3[%c256_145, %c0_146] : memref<640x32xbf16, #tpu.memory_space<vmem>>, vector<64x32xbf16>
    %215 = arith.truncf %213 : vector<16x64xf32> to vector<16x64xbf16>
    %cst_147 = arith.constant dense<0.000000e+00> : vector<16x32xf32>
    %216 = tpu.matmul %215, %214, %cst_147 {dimension_numbers = #tpu.dot_dimension_numbers<[1], [0], [0], [1], [0, 0, 1, 1], [], []>} : vector<16x64xbf16>, vector<64x32xbf16>, vector<16x32xf32> -> vector<16x32xf32>
    %c3_148 = arith.constant 3 : index
    %c0_149 = arith.constant 0 : index
    %217 = vector.load %arg6[%c3_148, %c0_149] : memref<24x128xf32, #tpu.memory_space<vmem>>, vector<1x32xf32>
    %218 = vector.broadcast %217 : vector<1x32xf32> to vector<16x32xf32>
    %219 = arith.addf %216, %218 : vector<16x32xf32>
    %c0_150 = arith.constant 0 : index
    %c0_151 = arith.constant 0 : index
    %c0_152 = arith.constant 0 : index
    %220 = vector.load %arg2[%c0_150, %c0_151, %c0_152] : memref<1x1x32xf32, #tpu.memory_space<vmem>>, vector<1x1x32xf32>
    %221 = vector.shape_cast %220 : vector<1x1x32xf32> to vector<1x32xf32>
    %c1088 = arith.constant 1088 : index
    %c0_153 = arith.constant 0 : index
    %222 = vector.load %arg4[%c1088, %c0_153] : memref<1248x64xbf16, #tpu.memory_space<vmem>>, vector<32x64xbf16>
    %223 = arith.truncf %221 : vector<1x32xf32> to vector<1x32xbf16>
    %cst_154 = arith.constant dense<0.000000e+00> : vector<1x64xf32>
    %224 = tpu.matmul %223, %222, %cst_154 {dimension_numbers = #tpu.dot_dimension_numbers<[1], [0], [0], [1], [0, 0, 1, 1], [], []>} : vector<1x32xbf16>, vector<32x64xbf16>, vector<1x64xf32> -> vector<1x64xf32>
    %c4 = arith.constant 4 : index
    %c0_155 = arith.constant 0 : index
    %225 = vector.load %arg6[%c4, %c0_155] : memref<24x128xf32, #tpu.memory_space<vmem>>, vector<1x64xf32>
    %226 = arith.addf %224, %225 : vector<1x64xf32>
    %cst_156 = arith.constant 0.000000e+00 : f32
    %227 = vector.broadcast %cst_156 : f32 to vector<1x64xf32>
    %228 = arith.maximumf %226, %227 : vector<1x64xf32>
    %c1120 = arith.constant 1120 : index
    %c0_157 = arith.constant 0 : index
    %229 = vector.load %arg4[%c1120, %c0_157] : memref<1248x64xbf16, #tpu.memory_space<vmem>>, vector<64x64xbf16>
    %230 = arith.truncf %228 : vector<1x64xf32> to vector<1x64xbf16>
    %cst_158 = arith.constant dense<0.000000e+00> : vector<1x64xf32>
    %231 = tpu.matmul %230, %229, %cst_158 {dimension_numbers = #tpu.dot_dimension_numbers<[1], [0], [0], [1], [0, 0, 1, 1], [], []>} : vector<1x64xbf16>, vector<64x64xbf16>, vector<1x64xf32> -> vector<1x64xf32>
    %c5 = arith.constant 5 : index
    %c0_159 = arith.constant 0 : index
    %232 = vector.load %arg6[%c5, %c0_159] : memref<24x128xf32, #tpu.memory_space<vmem>>, vector<1x64xf32>
    %233 = arith.addf %231, %232 : vector<1x64xf32>
    %cst_160 = arith.constant 0.000000e+00 : f32
    %234 = vector.broadcast %cst_160 : f32 to vector<1x64xf32>
    %235 = arith.maximumf %233, %234 : vector<1x64xf32>
    %c320_161 = arith.constant 320 : index
    %c0_162 = arith.constant 0 : index
    %236 = vector.load %arg3[%c320_161, %c0_162] : memref<640x32xbf16, #tpu.memory_space<vmem>>, vector<64x32xbf16>
    %237 = arith.truncf %235 : vector<1x64xf32> to vector<1x64xbf16>
    %cst_163 = arith.constant dense<0.000000e+00> : vector<1x32xf32>
    %238 = tpu.matmul %237, %236, %cst_163 {dimension_numbers = #tpu.dot_dimension_numbers<[1], [0], [0], [1], [0, 0, 1, 1], [], []>} : vector<1x64xbf16>, vector<64x32xbf16>, vector<1x32xf32> -> vector<1x32xf32>
    %c6 = arith.constant 6 : index
    %c0_164 = arith.constant 0 : index
    %239 = vector.load %arg6[%c6, %c0_164] : memref<24x128xf32, #tpu.memory_space<vmem>>, vector<1x32xf32>
    %240 = arith.addf %238, %239 : vector<1x32xf32>
    %cst_165 = arith.constant 0.000000e+00 : f32
    %241 = vector.broadcast %cst_165 : f32 to vector<1x32xf32>
    %242 = arith.maximumf %240, %241 : vector<1x32xf32>
    %243 = tpu.concatenate %219, %242 in 0 : vector<16x32xf32>, vector<1x32xf32> -> vector<17x32xf32>
    %c0_166 = arith.constant 0 : index
    %c0_167 = arith.constant 0 : index
    %244 = vector.load %arg5[%c0_166, %c0_167] : memref<64x96xbf16, #tpu.memory_space<vmem>>, vector<32x96xbf16>
    %245 = arith.truncf %243 : vector<17x32xf32> to vector<17x32xbf16>
    %cst_168 = arith.constant dense<0.000000e+00> : vector<17x96xf32>
    %246 = tpu.matmul %245, %244, %cst_168 {dimension_numbers = #tpu.dot_dimension_numbers<[1], [0], [0], [1], [0, 0, 1, 1], [], []>} : vector<17x32xbf16>, vector<32x96xbf16>, vector<17x96xf32> -> vector<17x96xf32>
    %c7 = arith.constant 7 : index
    %c0_169 = arith.constant 0 : index
    %247 = vector.load %arg6[%c7, %c0_169] : memref<24x128xf32, #tpu.memory_space<vmem>>, vector<1x96xf32>
    %248 = vector.broadcast %247 : vector<1x96xf32> to vector<17x96xf32>
    %249 = arith.addf %246, %248 : vector<17x96xf32>
    %250 = vector.extract_strided_slice %249 {offsets = [0, 0], sizes = [17, 16], strides = [1, 1]} : vector<17x96xf32> to vector<17x16xf32>
    %251 = vector.extract_strided_slice %249 {offsets = [0, 32], sizes = [17, 16], strides = [1, 1]} : vector<17x96xf32> to vector<17x16xf32>
    %252 = vector.extract_strided_slice %249 {offsets = [0, 64], sizes = [17, 16], strides = [1, 1]} : vector<17x96xf32> to vector<17x16xf32>
    %253 = arith.truncf %250 : vector<17x16xf32> to vector<17x16xbf16>
    %254 = arith.truncf %251 : vector<17x16xf32> to vector<17x16xbf16>
    %cst_170 = arith.constant dense<0.000000e+00> : vector<17x17xf32>
    %255 = tpu.matmul %253, %254, %cst_170 {dimension_numbers = #tpu.dot_dimension_numbers<[1], [1], [0], [0], [0, 0, 1, 0], [], []>} : vector<17x16xbf16>, vector<17x16xbf16>, vector<17x17xf32> -> vector<17x17xf32>
    %cst_171 = arith.constant 2.500000e-01 : f32
    %256 = vector.broadcast %cst_171 : f32 to vector<17x17xf32>
    %257 = arith.mulf %255, %256 : vector<17x17xf32>
    %cst_172 = arith.constant dense<0xFF800000> : vector<17xf32>
    %258 = vector.multi_reduction <maximumf>, %257, %cst_172 [1] : vector<17x17xf32> to vector<17xf32>
    %259 = vector.shape_cast %258 : vector<17xf32> to vector<17x1xf32>
    %260 = vector.broadcast %259 : vector<17x1xf32> to vector<17x17xf32>
    %261 = arith.subf %257, %260 : vector<17x17xf32>
    %262 = math.exp %261 : vector<17x17xf32>
    %cst_173 = arith.constant dense<0.000000e+00> : vector<17xf32>
    %263 = vector.multi_reduction <add>, %262, %cst_173 [1] : vector<17x17xf32> to vector<17xf32>
    %264 = vector.shape_cast %263 : vector<17xf32> to vector<17x1xf32>
    %265 = tpu.reciprocal %264 {approx = true} : vector<17x1xf32> -> vector<17x1xf32>
    %266 = vector.broadcast %265 : vector<17x1xf32> to vector<17x17xf32>
    %267 = arith.mulf %262, %266 : vector<17x17xf32>
    %268 = arith.truncf %267 : vector<17x17xf32> to vector<17x17xbf16>
    %269 = arith.truncf %252 : vector<17x16xf32> to vector<17x16xbf16>
    %cst_174 = arith.constant dense<0.000000e+00> : vector<17x16xf32>
    %270 = tpu.matmul %268, %269, %cst_174 {dimension_numbers = #tpu.dot_dimension_numbers<[1], [0], [0], [1], [0, 0, 1, 1], [], []>} : vector<17x17xbf16>, vector<17x16xbf16>, vector<17x16xf32> -> vector<17x16xf32>
    %271 = vector.extract_strided_slice %249 {offsets = [0, 16], sizes = [17, 16], strides = [1, 1]} : vector<17x96xf32> to vector<17x16xf32>
    %272 = vector.extract_strided_slice %249 {offsets = [0, 48], sizes = [17, 16], strides = [1, 1]} : vector<17x96xf32> to vector<17x16xf32>
    %273 = vector.extract_strided_slice %249 {offsets = [0, 80], sizes = [17, 16], strides = [1, 1]} : vector<17x96xf32> to vector<17x16xf32>
    %274 = arith.truncf %271 : vector<17x16xf32> to vector<17x16xbf16>
    %275 = arith.truncf %272 : vector<17x16xf32> to vector<17x16xbf16>
    %cst_175 = arith.constant dense<0.000000e+00> : vector<17x17xf32>
    %276 = tpu.matmul %274, %275, %cst_175 {dimension_numbers = #tpu.dot_dimension_numbers<[1], [1], [0], [0], [0, 0, 1, 0], [], []>} : vector<17x16xbf16>, vector<17x16xbf16>, vector<17x17xf32> -> vector<17x17xf32>
    %cst_176 = arith.constant 2.500000e-01 : f32
    %277 = vector.broadcast %cst_176 : f32 to vector<17x17xf32>
    %278 = arith.mulf %276, %277 : vector<17x17xf32>
    %cst_177 = arith.constant dense<0xFF800000> : vector<17xf32>
    %279 = vector.multi_reduction <maximumf>, %278, %cst_177 [1] : vector<17x17xf32> to vector<17xf32>
    %280 = vector.shape_cast %279 : vector<17xf32> to vector<17x1xf32>
    %281 = vector.broadcast %280 : vector<17x1xf32> to vector<17x17xf32>
    %282 = arith.subf %278, %281 : vector<17x17xf32>
    %283 = math.exp %282 : vector<17x17xf32>
    %cst_178 = arith.constant dense<0.000000e+00> : vector<17xf32>
    %284 = vector.multi_reduction <add>, %283, %cst_178 [1] : vector<17x17xf32> to vector<17xf32>
    %285 = vector.shape_cast %284 : vector<17xf32> to vector<17x1xf32>
    %286 = tpu.reciprocal %285 {approx = true} : vector<17x1xf32> -> vector<17x1xf32>
    %287 = vector.broadcast %286 : vector<17x1xf32> to vector<17x17xf32>
    %288 = arith.mulf %283, %287 : vector<17x17xf32>
    %289 = arith.truncf %288 : vector<17x17xf32> to vector<17x17xbf16>
    %290 = arith.truncf %273 : vector<17x16xf32> to vector<17x16xbf16>
    %cst_179 = arith.constant dense<0.000000e+00> : vector<17x16xf32>
    %291 = tpu.matmul %289, %290, %cst_179 {dimension_numbers = #tpu.dot_dimension_numbers<[1], [0], [0], [1], [0, 0, 1, 1], [], []>} : vector<17x17xbf16>, vector<17x16xbf16>, vector<17x16xf32> -> vector<17x16xf32>
    %292 = tpu.concatenate %270, %291 in 1 : vector<17x16xf32>, vector<17x16xf32> -> vector<17x32xf32>
    %c384_180 = arith.constant 384 : index
    %c0_181 = arith.constant 0 : index
    %293 = vector.load %arg3[%c384_180, %c0_181] : memref<640x32xbf16, #tpu.memory_space<vmem>>, vector<32x32xbf16>
    %294 = arith.truncf %292 : vector<17x32xf32> to vector<17x32xbf16>
    %cst_182 = arith.constant dense<0.000000e+00> : vector<17x32xf32>
    %295 = tpu.matmul %294, %293, %cst_182 {dimension_numbers = #tpu.dot_dimension_numbers<[1], [0], [0], [1], [0, 0, 1, 1], [], []>} : vector<17x32xbf16>, vector<32x32xbf16>, vector<17x32xf32> -> vector<17x32xf32>
    %c9 = arith.constant 9 : index
    %c0_183 = arith.constant 0 : index
    %296 = vector.load %arg6[%c9, %c0_183] : memref<24x128xf32, #tpu.memory_space<vmem>>, vector<1x32xf32>
    %297 = vector.broadcast %296 : vector<1x32xf32> to vector<17x32xf32>
    %298 = arith.addf %295, %297 : vector<17x32xf32>
    %299 = arith.addf %243, %298 : vector<17x32xf32>
    %c11 = arith.constant 11 : index
    %c0_184 = arith.constant 0 : index
    %300 = vector.load %arg6[%c11, %c0_184] : memref<24x128xf32, #tpu.memory_space<vmem>>, vector<1x32xf32>
    %c13 = arith.constant 13 : index
    %c0_185 = arith.constant 0 : index
    %301 = vector.load %arg6[%c13, %c0_185] : memref<24x128xf32, #tpu.memory_space<vmem>>, vector<1x32xf32>
    %cst_186 = arith.constant dense<0.000000e+00> : vector<17xf32>
    %302 = vector.multi_reduction <add>, %299, %cst_186 [1] : vector<17x32xf32> to vector<17xf32>
    %303 = vector.shape_cast %302 : vector<17xf32> to vector<17x1xf32>
    %cst_187 = arith.constant 3.200000e+01 : f32
    %304 = vector.broadcast %cst_187 : f32 to vector<17x1xf32>
    %305 = arith.divf %303, %304 : vector<17x1xf32>
    %306 = vector.broadcast %305 : vector<17x1xf32> to vector<17x32xf32>
    %307 = arith.subf %299, %306 : vector<17x32xf32>
    %308 = arith.mulf %307, %307 : vector<17x32xf32>
    %cst_188 = arith.constant dense<0.000000e+00> : vector<17xf32>
    %309 = vector.multi_reduction <add>, %308, %cst_188 [1] : vector<17x32xf32> to vector<17xf32>
    %310 = vector.shape_cast %309 : vector<17xf32> to vector<17x1xf32>
    %cst_189 = arith.constant 3.200000e+01 : f32
    %311 = vector.broadcast %cst_189 : f32 to vector<17x1xf32>
    %312 = arith.divf %310, %311 : vector<17x1xf32>
    %313 = vector.broadcast %305 : vector<17x1xf32> to vector<17x32xf32>
    %314 = arith.subf %299, %313 : vector<17x32xf32>
    %cst_190 = arith.constant 9.99999974E-6 : f32
    %315 = vector.broadcast %cst_190 : f32 to vector<17x1xf32>
    %316 = arith.addf %312, %315 : vector<17x1xf32>
    %317 = math.rsqrt %316 : vector<17x1xf32>
    %318 = vector.broadcast %317 : vector<17x1xf32> to vector<17x32xf32>
    %319 = arith.mulf %314, %318 : vector<17x32xf32>
    %320 = vector.broadcast %300 : vector<1x32xf32> to vector<17x32xf32>
    %321 = arith.mulf %319, %320 : vector<17x32xf32>
    %322 = vector.broadcast %301 : vector<1x32xf32> to vector<17x32xf32>
    %323 = arith.addf %321, %322 : vector<17x32xf32>
    %c1184 = arith.constant 1184 : index
    %c0_191 = arith.constant 0 : index
    %324 = vector.load %arg4[%c1184, %c0_191] : memref<1248x64xbf16, #tpu.memory_space<vmem>>, vector<32x64xbf16>
    %325 = arith.truncf %323 : vector<17x32xf32> to vector<17x32xbf16>
    %cst_192 = arith.constant dense<0.000000e+00> : vector<17x64xf32>
    %326 = tpu.matmul %325, %324, %cst_192 {dimension_numbers = #tpu.dot_dimension_numbers<[1], [0], [0], [1], [0, 0, 1, 1], [], []>} : vector<17x32xbf16>, vector<32x64xbf16>, vector<17x64xf32> -> vector<17x64xf32>
    %c15 = arith.constant 15 : index
    %c0_193 = arith.constant 0 : index
    %327 = vector.load %arg6[%c15, %c0_193] : memref<24x128xf32, #tpu.memory_space<vmem>>, vector<1x64xf32>
    %328 = vector.broadcast %327 : vector<1x64xf32> to vector<17x64xf32>
    %329 = arith.addf %326, %328 : vector<17x64xf32>
    %cst_194 = arith.constant 0.000000e+00 : f32
    %330 = vector.broadcast %cst_194 : f32 to vector<17x64xf32>
    %331 = arith.maximumf %329, %330 : vector<17x64xf32>
    %c448_195 = arith.constant 448 : index
    %c0_196 = arith.constant 0 : index
    %332 = vector.load %arg3[%c448_195, %c0_196] : memref<640x32xbf16, #tpu.memory_space<vmem>>, vector<64x32xbf16>
    %333 = arith.truncf %331 : vector<17x64xf32> to vector<17x64xbf16>
    %cst_197 = arith.constant dense<0.000000e+00> : vector<17x32xf32>
    %334 = tpu.matmul %333, %332, %cst_197 {dimension_numbers = #tpu.dot_dimension_numbers<[1], [0], [0], [1], [0, 0, 1, 1], [], []>} : vector<17x64xbf16>, vector<64x32xbf16>, vector<17x32xf32> -> vector<17x32xf32>
    %c17 = arith.constant 17 : index
    %c0_198 = arith.constant 0 : index
    %335 = vector.load %arg6[%c17, %c0_198] : memref<24x128xf32, #tpu.memory_space<vmem>>, vector<1x32xf32>
    %336 = vector.broadcast %335 : vector<1x32xf32> to vector<17x32xf32>
    %337 = arith.addf %334, %336 : vector<17x32xf32>
    %338 = arith.addf %323, %337 : vector<17x32xf32>
    %c19 = arith.constant 19 : index
    %c0_199 = arith.constant 0 : index
    %339 = vector.load %arg6[%c19, %c0_199] : memref<24x128xf32, #tpu.memory_space<vmem>>, vector<1x32xf32>
    %c21 = arith.constant 21 : index
    %c0_200 = arith.constant 0 : index
    %340 = vector.load %arg6[%c21, %c0_200] : memref<24x128xf32, #tpu.memory_space<vmem>>, vector<1x32xf32>
    %cst_201 = arith.constant dense<0.000000e+00> : vector<17xf32>
    %341 = vector.multi_reduction <add>, %338, %cst_201 [1] : vector<17x32xf32> to vector<17xf32>
    %342 = vector.shape_cast %341 : vector<17xf32> to vector<17x1xf32>
    %cst_202 = arith.constant 3.200000e+01 : f32
    %343 = vector.broadcast %cst_202 : f32 to vector<17x1xf32>
    %344 = arith.divf %342, %343 : vector<17x1xf32>
    %345 = vector.broadcast %344 : vector<17x1xf32> to vector<17x32xf32>
    %346 = arith.subf %338, %345 : vector<17x32xf32>
    %347 = arith.mulf %346, %346 : vector<17x32xf32>
    %cst_203 = arith.constant dense<0.000000e+00> : vector<17xf32>
    %348 = vector.multi_reduction <add>, %347, %cst_203 [1] : vector<17x32xf32> to vector<17xf32>
    %349 = vector.shape_cast %348 : vector<17xf32> to vector<17x1xf32>
    %cst_204 = arith.constant 3.200000e+01 : f32
    %350 = vector.broadcast %cst_204 : f32 to vector<17x1xf32>
    %351 = arith.divf %349, %350 : vector<17x1xf32>
    %352 = vector.broadcast %344 : vector<17x1xf32> to vector<17x32xf32>
    %353 = arith.subf %338, %352 : vector<17x32xf32>
    %cst_205 = arith.constant 9.99999974E-6 : f32
    %354 = vector.broadcast %cst_205 : f32 to vector<17x1xf32>
    %355 = arith.addf %351, %354 : vector<17x1xf32>
    %356 = math.rsqrt %355 : vector<17x1xf32>
    %357 = vector.broadcast %356 : vector<17x1xf32> to vector<17x32xf32>
    %358 = arith.mulf %353, %357 : vector<17x32xf32>
    %359 = vector.broadcast %339 : vector<1x32xf32> to vector<17x32xf32>
    %360 = arith.mulf %358, %359 : vector<17x32xf32>
    %361 = vector.broadcast %340 : vector<1x32xf32> to vector<17x32xf32>
    %362 = arith.addf %360, %361 : vector<17x32xf32>
    %c32_206 = arith.constant 32 : index
    %c0_207 = arith.constant 0 : index
    %363 = vector.load %arg5[%c32_206, %c0_207] : memref<64x96xbf16, #tpu.memory_space<vmem>>, vector<32x96xbf16>
    %364 = arith.truncf %362 : vector<17x32xf32> to vector<17x32xbf16>
    %cst_208 = arith.constant dense<0.000000e+00> : vector<17x96xf32>
    %365 = tpu.matmul %364, %363, %cst_208 {dimension_numbers = #tpu.dot_dimension_numbers<[1], [0], [0], [1], [0, 0, 1, 1], [], []>} : vector<17x32xbf16>, vector<32x96xbf16>, vector<17x96xf32> -> vector<17x96xf32>
    %c8 = arith.constant 8 : index
    %c0_209 = arith.constant 0 : index
    %366 = vector.load %arg6[%c8, %c0_209] : memref<24x128xf32, #tpu.memory_space<vmem>>, vector<1x96xf32>
    %367 = vector.broadcast %366 : vector<1x96xf32> to vector<17x96xf32>
    %368 = arith.addf %365, %367 : vector<17x96xf32>
    %369 = vector.extract_strided_slice %368 {offsets = [0, 0], sizes = [17, 16], strides = [1, 1]} : vector<17x96xf32> to vector<17x16xf32>
    %370 = vector.extract_strided_slice %368 {offsets = [0, 32], sizes = [17, 16], strides = [1, 1]} : vector<17x96xf32> to vector<17x16xf32>
    %371 = vector.extract_strided_slice %368 {offsets = [0, 64], sizes = [17, 16], strides = [1, 1]} : vector<17x96xf32> to vector<17x16xf32>
    %372 = arith.truncf %369 : vector<17x16xf32> to vector<17x16xbf16>
    %373 = arith.truncf %370 : vector<17x16xf32> to vector<17x16xbf16>
    %cst_210 = arith.constant dense<0.000000e+00> : vector<17x17xf32>
    %374 = tpu.matmul %372, %373, %cst_210 {dimension_numbers = #tpu.dot_dimension_numbers<[1], [1], [0], [0], [0, 0, 1, 0], [], []>} : vector<17x16xbf16>, vector<17x16xbf16>, vector<17x17xf32> -> vector<17x17xf32>
    %cst_211 = arith.constant 2.500000e-01 : f32
    %375 = vector.broadcast %cst_211 : f32 to vector<17x17xf32>
    %376 = arith.mulf %374, %375 : vector<17x17xf32>
    %cst_212 = arith.constant dense<0xFF800000> : vector<17xf32>
    %377 = vector.multi_reduction <maximumf>, %376, %cst_212 [1] : vector<17x17xf32> to vector<17xf32>
    %378 = vector.shape_cast %377 : vector<17xf32> to vector<17x1xf32>
    %379 = vector.broadcast %378 : vector<17x1xf32> to vector<17x17xf32>
    %380 = arith.subf %376, %379 : vector<17x17xf32>
    %381 = math.exp %380 : vector<17x17xf32>
    %cst_213 = arith.constant dense<0.000000e+00> : vector<17xf32>
    %382 = vector.multi_reduction <add>, %381, %cst_213 [1] : vector<17x17xf32> to vector<17xf32>
    %383 = vector.shape_cast %382 : vector<17xf32> to vector<17x1xf32>
    %384 = tpu.reciprocal %383 {approx = true} : vector<17x1xf32> -> vector<17x1xf32>
    %385 = vector.broadcast %384 : vector<17x1xf32> to vector<17x17xf32>
    %386 = arith.mulf %381, %385 : vector<17x17xf32>
    %387 = arith.truncf %386 : vector<17x17xf32> to vector<17x17xbf16>
    %388 = arith.truncf %371 : vector<17x16xf32> to vector<17x16xbf16>
    %cst_214 = arith.constant dense<0.000000e+00> : vector<17x16xf32>
    %389 = tpu.matmul %387, %388, %cst_214 {dimension_numbers = #tpu.dot_dimension_numbers<[1], [0], [0], [1], [0, 0, 1, 1], [], []>} : vector<17x17xbf16>, vector<17x16xbf16>, vector<17x16xf32> -> vector<17x16xf32>
    %390 = vector.extract_strided_slice %368 {offsets = [0, 16], sizes = [17, 16], strides = [1, 1]} : vector<17x96xf32> to vector<17x16xf32>
    %391 = vector.extract_strided_slice %368 {offsets = [0, 48], sizes = [17, 16], strides = [1, 1]} : vector<17x96xf32> to vector<17x16xf32>
    %392 = vector.extract_strided_slice %368 {offsets = [0, 80], sizes = [17, 16], strides = [1, 1]} : vector<17x96xf32> to vector<17x16xf32>
    %393 = arith.truncf %390 : vector<17x16xf32> to vector<17x16xbf16>
    %394 = arith.truncf %391 : vector<17x16xf32> to vector<17x16xbf16>
    %cst_215 = arith.constant dense<0.000000e+00> : vector<17x17xf32>
    %395 = tpu.matmul %393, %394, %cst_215 {dimension_numbers = #tpu.dot_dimension_numbers<[1], [1], [0], [0], [0, 0, 1, 0], [], []>} : vector<17x16xbf16>, vector<17x16xbf16>, vector<17x17xf32> -> vector<17x17xf32>
    %cst_216 = arith.constant 2.500000e-01 : f32
    %396 = vector.broadcast %cst_216 : f32 to vector<17x17xf32>
    %397 = arith.mulf %395, %396 : vector<17x17xf32>
    %cst_217 = arith.constant dense<0xFF800000> : vector<17xf32>
    %398 = vector.multi_reduction <maximumf>, %397, %cst_217 [1] : vector<17x17xf32> to vector<17xf32>
    %399 = vector.shape_cast %398 : vector<17xf32> to vector<17x1xf32>
    %400 = vector.broadcast %399 : vector<17x1xf32> to vector<17x17xf32>
    %401 = arith.subf %397, %400 : vector<17x17xf32>
    %402 = math.exp %401 : vector<17x17xf32>
    %cst_218 = arith.constant dense<0.000000e+00> : vector<17xf32>
    %403 = vector.multi_reduction <add>, %402, %cst_218 [1] : vector<17x17xf32> to vector<17xf32>
    %404 = vector.shape_cast %403 : vector<17xf32> to vector<17x1xf32>
    %405 = tpu.reciprocal %404 {approx = true} : vector<17x1xf32> -> vector<17x1xf32>
    %406 = vector.broadcast %405 : vector<17x1xf32> to vector<17x17xf32>
    %407 = arith.mulf %402, %406 : vector<17x17xf32>
    %408 = arith.truncf %407 : vector<17x17xf32> to vector<17x17xbf16>
    %409 = arith.truncf %392 : vector<17x16xf32> to vector<17x16xbf16>
    %cst_219 = arith.constant dense<0.000000e+00> : vector<17x16xf32>
    %410 = tpu.matmul %408, %409, %cst_219 {dimension_numbers = #tpu.dot_dimension_numbers<[1], [0], [0], [1], [0, 0, 1, 1], [], []>} : vector<17x17xbf16>, vector<17x16xbf16>, vector<17x16xf32> -> vector<17x16xf32>
    %411 = tpu.concatenate %389, %410 in 1 : vector<17x16xf32>, vector<17x16xf32> -> vector<17x32xf32>
    %c416_220 = arith.constant 416 : index
    %c0_221 = arith.constant 0 : index
    %412 = vector.load %arg3[%c416_220, %c0_221] : memref<640x32xbf16, #tpu.memory_space<vmem>>, vector<32x32xbf16>
    %413 = arith.truncf %411 : vector<17x32xf32> to vector<17x32xbf16>
    %cst_222 = arith.constant dense<0.000000e+00> : vector<17x32xf32>
    %414 = tpu.matmul %413, %412, %cst_222 {dimension_numbers = #tpu.dot_dimension_numbers<[1], [0], [0], [1], [0, 0, 1, 1], [], []>} : vector<17x32xbf16>, vector<32x32xbf16>, vector<17x32xf32> -> vector<17x32xf32>
    %c10 = arith.constant 10 : index
    %c0_223 = arith.constant 0 : index
    %415 = vector.load %arg6[%c10, %c0_223] : memref<24x128xf32, #tpu.memory_space<vmem>>, vector<1x32xf32>
    %416 = vector.broadcast %415 : vector<1x32xf32> to vector<17x32xf32>
    %417 = arith.addf %414, %416 : vector<17x32xf32>
    %418 = arith.addf %362, %417 : vector<17x32xf32>
    %c12 = arith.constant 12 : index
    %c0_224 = arith.constant 0 : index
    %419 = vector.load %arg6[%c12, %c0_224] : memref<24x128xf32, #tpu.memory_space<vmem>>, vector<1x32xf32>
    %c14 = arith.constant 14 : index
    %c0_225 = arith.constant 0 : index
    %420 = vector.load %arg6[%c14, %c0_225] : memref<24x128xf32, #tpu.memory_space<vmem>>, vector<1x32xf32>
    %cst_226 = arith.constant dense<0.000000e+00> : vector<17xf32>
    %421 = vector.multi_reduction <add>, %418, %cst_226 [1] : vector<17x32xf32> to vector<17xf32>
    %422 = vector.shape_cast %421 : vector<17xf32> to vector<17x1xf32>
    %cst_227 = arith.constant 3.200000e+01 : f32
    %423 = vector.broadcast %cst_227 : f32 to vector<17x1xf32>
    %424 = arith.divf %422, %423 : vector<17x1xf32>
    %425 = vector.broadcast %424 : vector<17x1xf32> to vector<17x32xf32>
    %426 = arith.subf %418, %425 : vector<17x32xf32>
    %427 = arith.mulf %426, %426 : vector<17x32xf32>
    %cst_228 = arith.constant dense<0.000000e+00> : vector<17xf32>
    %428 = vector.multi_reduction <add>, %427, %cst_228 [1] : vector<17x32xf32> to vector<17xf32>
    %429 = vector.shape_cast %428 : vector<17xf32> to vector<17x1xf32>
    %cst_229 = arith.constant 3.200000e+01 : f32
    %430 = vector.broadcast %cst_229 : f32 to vector<17x1xf32>
    %431 = arith.divf %429, %430 : vector<17x1xf32>
    %432 = vector.broadcast %424 : vector<17x1xf32> to vector<17x32xf32>
    %433 = arith.subf %418, %432 : vector<17x32xf32>
    %cst_230 = arith.constant 9.99999974E-6 : f32
    %434 = vector.broadcast %cst_230 : f32 to vector<17x1xf32>
    %435 = arith.addf %431, %434 : vector<17x1xf32>
    %436 = math.rsqrt %435 : vector<17x1xf32>
    %437 = vector.broadcast %436 : vector<17x1xf32> to vector<17x32xf32>
    %438 = arith.mulf %433, %437 : vector<17x32xf32>
    %439 = vector.broadcast %419 : vector<1x32xf32> to vector<17x32xf32>
    %440 = arith.mulf %438, %439 : vector<17x32xf32>
    %441 = vector.broadcast %420 : vector<1x32xf32> to vector<17x32xf32>
    %442 = arith.addf %440, %441 : vector<17x32xf32>
    %c1216 = arith.constant 1216 : index
    %c0_231 = arith.constant 0 : index
    %443 = vector.load %arg4[%c1216, %c0_231] : memref<1248x64xbf16, #tpu.memory_space<vmem>>, vector<32x64xbf16>
    %444 = arith.truncf %442 : vector<17x32xf32> to vector<17x32xbf16>
    %cst_232 = arith.constant dense<0.000000e+00> : vector<17x64xf32>
    %445 = tpu.matmul %444, %443, %cst_232 {dimension_numbers = #tpu.dot_dimension_numbers<[1], [0], [0], [1], [0, 0, 1, 1], [], []>} : vector<17x32xbf16>, vector<32x64xbf16>, vector<17x64xf32> -> vector<17x64xf32>
    %c16 = arith.constant 16 : index
    %c0_233 = arith.constant 0 : index
    %446 = vector.load %arg6[%c16, %c0_233] : memref<24x128xf32, #tpu.memory_space<vmem>>, vector<1x64xf32>
    %447 = vector.broadcast %446 : vector<1x64xf32> to vector<17x64xf32>
    %448 = arith.addf %445, %447 : vector<17x64xf32>
    %cst_234 = arith.constant 0.000000e+00 : f32
    %449 = vector.broadcast %cst_234 : f32 to vector<17x64xf32>
    %450 = arith.maximumf %448, %449 : vector<17x64xf32>
    %c512_235 = arith.constant 512 : index
    %c0_236 = arith.constant 0 : index
    %451 = vector.load %arg3[%c512_235, %c0_236] : memref<640x32xbf16, #tpu.memory_space<vmem>>, vector<64x32xbf16>
    %452 = arith.truncf %450 : vector<17x64xf32> to vector<17x64xbf16>
    %cst_237 = arith.constant dense<0.000000e+00> : vector<17x32xf32>
    %453 = tpu.matmul %452, %451, %cst_237 {dimension_numbers = #tpu.dot_dimension_numbers<[1], [0], [0], [1], [0, 0, 1, 1], [], []>} : vector<17x64xbf16>, vector<64x32xbf16>, vector<17x32xf32> -> vector<17x32xf32>
    %c18 = arith.constant 18 : index
    %c0_238 = arith.constant 0 : index
    %454 = vector.load %arg6[%c18, %c0_238] : memref<24x128xf32, #tpu.memory_space<vmem>>, vector<1x32xf32>
    %455 = vector.broadcast %454 : vector<1x32xf32> to vector<17x32xf32>
    %456 = arith.addf %453, %455 : vector<17x32xf32>
    %457 = arith.addf %442, %456 : vector<17x32xf32>
    %c20 = arith.constant 20 : index
    %c0_239 = arith.constant 0 : index
    %458 = vector.load %arg6[%c20, %c0_239] : memref<24x128xf32, #tpu.memory_space<vmem>>, vector<1x32xf32>
    %c22 = arith.constant 22 : index
    %c0_240 = arith.constant 0 : index
    %459 = vector.load %arg6[%c22, %c0_240] : memref<24x128xf32, #tpu.memory_space<vmem>>, vector<1x32xf32>
    %cst_241 = arith.constant dense<0.000000e+00> : vector<17xf32>
    %460 = vector.multi_reduction <add>, %457, %cst_241 [1] : vector<17x32xf32> to vector<17xf32>
    %461 = vector.shape_cast %460 : vector<17xf32> to vector<17x1xf32>
    %cst_242 = arith.constant 3.200000e+01 : f32
    %462 = vector.broadcast %cst_242 : f32 to vector<17x1xf32>
    %463 = arith.divf %461, %462 : vector<17x1xf32>
    %464 = vector.broadcast %463 : vector<17x1xf32> to vector<17x32xf32>
    %465 = arith.subf %457, %464 : vector<17x32xf32>
    %466 = arith.mulf %465, %465 : vector<17x32xf32>
    %cst_243 = arith.constant dense<0.000000e+00> : vector<17xf32>
    %467 = vector.multi_reduction <add>, %466, %cst_243 [1] : vector<17x32xf32> to vector<17xf32>
    %468 = vector.shape_cast %467 : vector<17xf32> to vector<17x1xf32>
    %cst_244 = arith.constant 3.200000e+01 : f32
    %469 = vector.broadcast %cst_244 : f32 to vector<17x1xf32>
    %470 = arith.divf %468, %469 : vector<17x1xf32>
    %471 = vector.broadcast %463 : vector<17x1xf32> to vector<17x32xf32>
    %472 = arith.subf %457, %471 : vector<17x32xf32>
    %cst_245 = arith.constant 9.99999974E-6 : f32
    %473 = vector.broadcast %cst_245 : f32 to vector<17x1xf32>
    %474 = arith.addf %470, %473 : vector<17x1xf32>
    %475 = math.rsqrt %474 : vector<17x1xf32>
    %476 = vector.broadcast %475 : vector<17x1xf32> to vector<17x32xf32>
    %477 = arith.mulf %472, %476 : vector<17x32xf32>
    %478 = vector.broadcast %458 : vector<1x32xf32> to vector<17x32xf32>
    %479 = arith.mulf %477, %478 : vector<17x32xf32>
    %480 = vector.broadcast %459 : vector<1x32xf32> to vector<17x32xf32>
    %481 = arith.addf %479, %480 : vector<17x32xf32>
    %482 = vector.extract_strided_slice %481 {offsets = [16, 0], sizes = [1, 32], strides = [1, 1]} : vector<17x32xf32> to vector<1x32xf32>
    %483 = vector.extract_strided_slice %481 {offsets = [0, 0], sizes = [16, 32], strides = [1, 1]} : vector<17x32xf32> to vector<16x32xf32>
    %cst_246 = arith.constant dense<0xFF800000> : vector<32xf32>
    %484 = vector.multi_reduction <maximumf>, %483, %cst_246 [0] : vector<16x32xf32> to vector<32xf32>
    %485 = vector.shape_cast %484 : vector<32xf32> to vector<1x32xf32>
    %486 = tpu.concatenate %482, %485 in 1 : vector<1x32xf32>, vector<1x32xf32> -> vector<1x64xf32>
    %c576_247 = arith.constant 576 : index
    %c0_248 = arith.constant 0 : index
    %487 = vector.load %arg3[%c576_247, %c0_248] : memref<640x32xbf16, #tpu.memory_space<vmem>>, vector<64x32xbf16>
    %488 = arith.truncf %486 : vector<1x64xf32> to vector<1x64xbf16>
    %cst_249 = arith.constant dense<0.000000e+00> : vector<1x32xf32>
    %489 = tpu.matmul %488, %487, %cst_249 {dimension_numbers = #tpu.dot_dimension_numbers<[1], [0], [0], [1], [0, 0, 1, 1], [], []>} : vector<1x64xbf16>, vector<64x32xbf16>, vector<1x32xf32> -> vector<1x32xf32>
    %c23 = arith.constant 23 : index
    %c0_250 = arith.constant 0 : index
    %490 = vector.load %arg6[%c23, %c0_250] : memref<24x128xf32, #tpu.memory_space<vmem>>, vector<1x32xf32>
    %491 = arith.addf %489, %490 : vector<1x32xf32>
    %c0_251 = arith.constant 0 : index
    %c0_252 = arith.constant 0 : index
    %c0_253 = arith.constant 0 : index
    %492 = vector.load %arg7[%c0_251, %c0_252, %c0_253] : memref<1x1x32xf32, #tpu.memory_space<vmem>>, vector<1x1x32xf32>
    %493 = vector.shape_cast %492 : vector<1x1x32xf32> to vector<1x32xf32>
    %494 = vector.shape_cast %491 : vector<1x32xf32> to vector<1x1x32xf32>
    tpu.vector_store %arg7[%c0_251, %c0_252, %c0_253], %494 {strides = array<i32>} : memref<1x1x32xf32, #tpu.memory_space<vmem>>, vector<1x1x32xf32>,
    return
  }
  func.func @transform_0(%arg0: i32) -> (i32, i32, i32) {
    %c0_i32 = arith.constant 0 : i32
    %c0_i32_0 = arith.constant 0 : i32
    %c0_i32_1 = arith.constant 0 : i32
    return %arg0, %c0_i32, %c0_i32_0 : i32, i32, i32
  }
  func.func @transform_1(%arg0: i32) -> (i32, i32, i32) {
    %c0_i32 = arith.constant 0 : i32
    %c0_i32_0 = arith.constant 0 : i32
    %c0_i32_1 = arith.constant 0 : i32
    return %arg0, %c0_i32, %c0_i32_0 : i32, i32, i32
  }
  func.func @transform_2(%arg0: i32) -> (i32, i32) {
    %c0_i32 = arith.constant 0 : i32
    %c0_i32_0 = arith.constant 0 : i32
    %c0_i32_1 = arith.constant 0 : i32
    return %c0_i32, %c0_i32_0 : i32, i32
  }
  func.func @transform_3(%arg0: i32) -> (i32, i32) {
    %c0_i32 = arith.constant 0 : i32
    %c0_i32_0 = arith.constant 0 : i32
    %c0_i32_1 = arith.constant 0 : i32
    return %c0_i32, %c0_i32_0 : i32, i32
  }
  func.func @transform_4(%arg0: i32) -> (i32, i32) {
    %c0_i32 = arith.constant 0 : i32
    %c0_i32_0 = arith.constant 0 : i32
    %c0_i32_1 = arith.constant 0 : i32
    return %c0_i32, %c0_i32_0 : i32, i32
  }
  func.func @transform_5(%arg0: i32) -> (i32, i32) {
    %c0_i32 = arith.constant 0 : i32
    %c0_i32_0 = arith.constant 0 : i32
    %c0_i32_1 = arith.constant 0 : i32
    return %c0_i32, %c0_i32_0 : i32, i32
  }
  func.func @transform_6(%arg0: i32) -> (i32, i32, i32) {
    %c0_i32 = arith.constant 0 : i32
    %c0_i32_0 = arith.constant 0 : i32
    %c0_i32_1 = arith.constant 0 : i32
    return %arg0, %c0_i32, %c0_i32_0 : i32, i32, i32
  }
}

</mosaic_0001>

<llo_original>
// kernel: loco_transformer_encoder.1
$region0: #{loco_transformer_encoder.1}
  #allocation0 [shape = 'u32[]', space=smem, size = 0x4, offset = 0x4, fixed_abs, tag = 'smem constant byte address 0x4 - core index']
  #allocation1 [shape = 'u32[144,128]{1,0:T(1,128)}', space=vmem, size = 0x12000, scoped, tag = 'internal scratch']
  #allocation2 [shape = 'bf16[4,64,32]{2,1,0:T(16,128)(2,1)}', space=vmem, size = 0x10000, scoped, tag = 'scratch operand']
  #allocation3 [shape = 'bf16[6,8,64]{2,1,0:T(8,128)(2,1)}', space=vmem, size = 0x3000, scoped, tag = 'scratch operand']
  %s0 = inlined_call_operand.vmem [shape: bf16[2,256,256], index: 0, kind: input, shape index: {}]
  %s1 = inlined_call_operand.vmem [shape: f32[2,1,32], index: 1, kind: input, shape index: {}]
  %s2 = inlined_call_operand.vmem [shape: bf16[640,32], index: 2, kind: input, shape index: {}]
  %s3 = inlined_call_operand.vmem [shape: bf16[1248,64], index: 3, kind: input, shape index: {}]
  %s4 = inlined_call_operand.vmem [shape: bf16[64,96], index: 4, kind: input, shape index: {}]
  %s5 = inlined_call_operand.vmem [shape: f32[24,128], index: 5, kind: input, shape index: {}]
  %s6 = inlined_call_operand.hbm [shape: f32[2,1,32], index: 6, kind: output, shape index: {}]
  %s7 = sld [smem:[#allocation0]]
  $region57: #{loco_transformer_encoder.1} parent=0
    _
  %s9 = ssub.s32 1, %s7
  %s10 = scalar_select 0, %s9, %s7
  $region1: #{loco_transformer_encoder.1} parent=0
    #allocation4 [shape = 'u8[1024]{0}', space=vmem, size = 0x400, scoped, tag = 'output window, operand 0']
    #allocation5 [shape = 's32[2]{0}', space=sflag, size = 0x8, scoped, tag = 'scoped memory for loco_transformer_encoder.1']
    %11 = vsyncpa [#allocation5], 0
    %s12 = scalar_lea.sflag [#allocation5], 1
    %13 = vsyncpa %s12, 0
    loop: start=0, step=1, limit=4
    $region2: #{loco_transformer_encoder.1} parent=1 // loop_pre_header
      _
    $region3: #{loco_transformer_encoder.1} parent=1 // loop_header
      %s15 = sphi 0, %s19
      %p16 = scmp.ge.s32.totalorder %s15, 4
      %s25 = sphi 0, %s27
      %s28 = sphi 0, %s25
      %s29 = sphi 0, %s28
      %s45 = sphi 0, %s29
      %s51 = sphi 0, %s53
      %s54 = sphi 0, %s51
      %s55 = sphi 0, %s54
      %s71 = sphi 0, %s55
      %s75 = sphi 0, %s75
      %s77 = sphi 0, %s75
      %s78 = sphi 0, %s77
      %s92 = sphi 0, %s78
      %s96 = sphi 0, %s96
      %s98 = sphi 0, %s96
      %s99 = sphi 0, %s98
      %s113 = sphi 0, %s99
      %s117 = sphi 0, %s117
      %s119 = sphi 0, %s117
      %s120 = sphi 0, %s119
      %s134 = sphi 0, %s120
      %s138 = sphi 0, %s138
      %s140 = sphi 0, %s138
      %s141 = sphi 0, %s140
      %s155 = sphi 0, %s141
      %s161 = sphi 0, %s163
      %s164 = sphi 0, %s161
      %s165 = sphi 0, %s164
      %s181 = sphi 0, %s165
    $region4: #{loco_transformer_encoder.1} parent=1 // loop_header_branch
      %18 = sbr.rel (%p16) target = $region8
    $region5: #{loco_transformer_encoder.1} parent=1 // loop_body
      %s20 = ssub.s32 %s15, 1
      %s21 = ssub.s32 %s15, 2
      %s22 = sadd.s32 %s15, 1
      %s23 = ssub.s32 %s15, %s22
      %p24 = scmp.eq.s32.totalorder %s23, 0
      %s26 = sadd.s32 %s25, 1
      %s27 = scalar_select %p24, %s25, %s26
      %p30 = pneg %p24
      %p31 = scmp.eq.s32.totalorder %s15, 1
      %p32 = por %p30, %p31
      %p33 = scmp.ne.s32.totalorder %s25, %s28
      %p34 = scmp.eq.s32.totalorder %s15, 0
      %p35 = por %p33, %p34
      %p36 = scmp.ne.s32.totalorder %s25, %s28
      %p37 = scmp.eq.s32.totalorder %s20, 1
      %p38 = por %p36, %p37
      %p39 = scmp.ne.s32.totalorder %s28, %s29
      %p40 = scmp.eq.s32.totalorder %s20, 0
      %p41 = por %p39, %p40
      %p42 = scmp.ne.s32.totalorder %s28, %s29
      %p43 = scmp.eq.s32.totalorder %s21, 1
      %p44 = por %p42, %p43
      %p46 = scmp.ne.s32.totalorder %s29, %s45
      %p47 = scmp.eq.s32.totalorder %s21, 0
      %p48 = por %p46, %p47
      %s49 = ssub.s32 %s15, %s22
      %p50 = scmp.eq.s32.totalorder %s49, 0
      %s52 = sadd.s32 %s51, 1
      %s53 = scalar_select %p50, %s51, %s52
      %p56 = pneg %p50
      %p57 = scmp.eq.s32.totalorder %s15, 1
      %p58 = por %p56, %p57
      %p59 = scmp.ne.s32.totalorder %s51, %s54
      %p60 = scmp.eq.s32.totalorder %s15, 0
      %p61 = por %p59, %p60
      %p62 = scmp.ne.s32.totalorder %s51, %s54
      %p63 = scmp.eq.s32.totalorder %s20, 1
      %p64 = por %p62, %p63
      %p65 = scmp.ne.s32.totalorder %s54, %s55
      %p66 = scmp.eq.s32.totalorder %s20, 0
      %p67 = por %p65, %p66
      %p68 = scmp.ne.s32.totalorder %s54, %s55
      %p69 = scmp.eq.s32.totalorder %s21, 1
      %p70 = por %p68, %p69
      %p72 = scmp.ne.s32.totalorder %s55, %s71
      %p73 = scmp.eq.s32.totalorder %s21, 0
      %p74 = por %p72, %p73
      %s76 = sadd.s32 %s75, 1
      %p79 = scmp.eq.s32.totalorder %s15, 1
      %p80 = scmp.ne.s32.totalorder %s75, %s77
      %p81 = scmp.eq.s32.totalorder %s15, 0
      %p82 = por %p80, %p81
      %p83 = scmp.ne.s32.totalorder %s75, %s77
      %p84 = scmp.eq.s32.totalorder %s20, 1
      %p85 = por %p83, %p84
      %p86 = scmp.ne.s32.totalorder %s77, %s78
      %p87 = scmp.eq.s32.totalorder %s20, 0
      %p88 = por %p86, %p87
      %p89 = scmp.ne.s32.totalorder %s77, %s78
      %p90 = scmp.eq.s32.totalorder %s21, 1
      %p91 = por %p89, %p90
      %p93 = scmp.ne.s32.totalorder %s78, %s92
      %p94 = scmp.eq.s32.totalorder %s21, 0
      %p95 = por %p93, %p94
      %s97 = sadd.s32 %s96, 1
      %p100 = scmp.eq.s32.totalorder %s15, 1
      %p101 = scmp.ne.s32.totalorder %s96, %s98
      %p102 = scmp.eq.s32.totalorder %s15, 0
      %p103 = por %p101, %p102
      %p104 = scmp.ne.s32.totalorder %s96, %s98
      %p105 = scmp.eq.s32.totalorder %s20, 1
      %p106 = por %p104, %p105
      %p107 = scmp.ne.s32.totalorder %s98, %s99
      %p108 = scmp.eq.s32.totalorder %s20, 0
      %p109 = por %p107, %p108
      %p110 = scmp.ne.s32.totalorder %s98, %s99
      %p111 = scmp.eq.s32.totalorder %s21, 1
      %p112 = por %p110, %p111
      %p114 = scmp.ne.s32.totalorder %s99, %s113
      %p115 = scmp.eq.s32.totalorder %s21, 0
      %p116 = por %p114, %p115
      %s118 = sadd.s32 %s117, 1
      %p121 = scmp.eq.s32.totalorder %s15, 1
      %p122 = scmp.ne.s32.totalorder %s117, %s119
      %p123 = scmp.eq.s32.totalorder %s15, 0
      %p124 = por %p122, %p123
      %p125 = scmp.ne.s32.totalorder %s117, %s119
      %p126 = scmp.eq.s32.totalorder %s20, 1
      %p127 = por %p125, %p126
      %p128 = scmp.ne.s32.totalorder %s119, %s120
      %p129 = scmp.eq.s32.totalorder %s20, 0
      %p130 = por %p128, %p129
      %p131 = scmp.ne.s32.totalorder %s119, %s120
      %p132 = scmp.eq.s32.totalorder %s21, 1
      %p133 = por %p131, %p132
      %p135 = scmp.ne.s32.totalorder %s120, %s134
      %p136 = scmp.eq.s32.totalorder %s21, 0
      %p137 = por %p135, %p136
      %s139 = sadd.s32 %s138, 1
      %p142 = scmp.eq.s32.totalorder %s15, 1
      %p143 = scmp.ne.s32.totalorder %s138, %s140
      %p144 = scmp.eq.s32.totalorder %s15, 0
      %p145 = por %p143, %p144
      %p146 = scmp.ne.s32.totalorder %s138, %s140
      %p147 = scmp.eq.s32.totalorder %s20, 1
      %p148 = por %p146, %p147
      %p149 = scmp.ne.s32.totalorder %s140, %s141
      %p150 = scmp.eq.s32.totalorder %s20, 0
      %p151 = por %p149, %p150
      %p152 = scmp.ne.s32.totalorder %s140, %s141
      %p153 = scmp.eq.s32.totalorder %s21, 1
      %p154 = por %p152, %p153
      %p156 = scmp.ne.s32.totalorder %s141, %s155
      %p157 = scmp.eq.s32.totalorder %s21, 0
      %p158 = por %p156, %p157
      %s159 = ssub.s32 %s15, %s22
      %p160 = scmp.eq.s32.totalorder %s159, 0
      %s162 = sadd.s32 %s161, 1
      %s163 = scalar_select %p160, %s161, %s162
      %p166 = pneg %p160
      %p167 = scmp.eq.s32.totalorder %s15, 1
      %p168 = por %p166, %p167
      %p169 = scmp.ne.s32.totalorder %s161, %s164
      %p170 = scmp.eq.s32.totalorder %s15, 0
      %p171 = por %p169, %p170
      %p172 = scmp.ne.s32.totalorder %s161, %s164
      %p173 = scmp.eq.s32.totalorder %s20, 1
      %p174 = por %p172, %p173
      %p175 = scmp.ne.s32.totalorder %s164, %s165
      %p176 = scmp.eq.s32.totalorder %s20, 0
      %p177 = por %p175, %p176
      %p178 = scmp.ne.s32.totalorder %s164, %s165
      %p179 = scmp.eq.s32.totalorder %s21, 1
      %p180 = por %p178, %p179
      %p182 = scmp.ne.s32.totalorder %s165, %s181
      %p183 = scmp.eq.s32.totalorder %s21, 0
      %p184 = por %p182, %p183
      %p185 = scmp.le.s32.totalorder 1, %s15
      %p186 = scmp.lt.s32.totalorder %s15, 3
      %p187 = pnand %p185, %p186
      %p188 = pneg %p187
      // Predicated region
      $region9: #{loco_transformer_encoder.1} parent=5 // pred_check
        _
      $region10: #{loco_transformer_encoder.1} parent=5 // pred_check_branch
        %190 = sbr.rel (%p187) target = $region12
      $region11: #{loco_transformer_encoder.1} parent=5 // pred_region
        %s191 = ssub.s32 %s15, 1
        // Predicated region
        $region13: #{loco_transformer_encoder.1} parent=11 // pred_check
          %p192 = pneg %p88
        $region14: #{loco_transformer_encoder.1} parent=11 // pred_check_branch
          %194 = sbr.rel (%p192) target = $region16
        $region15: #{loco_transformer_encoder.1} parent=11 // pred_region
          _
        $region16: #{loco_transformer_encoder.1} parent=11 // pred_fallthru
          _
        // Predicated region
        $region17: #{loco_transformer_encoder.1} parent=11 // pred_check
          %p195 = pneg %p109
        $region18: #{loco_transformer_encoder.1} parent=11 // pred_check_branch
          %197 = sbr.rel (%p195) target = $region20
        $region19: #{loco_transformer_encoder.1} parent=11 // pred_region
          _
        $region20: #{loco_transformer_encoder.1} parent=11 // pred_fallthru
          _
        // Predicated region
        $region21: #{loco_transformer_encoder.1} parent=11 // pred_check
          %p198 = pneg %p130
        $region22: #{loco_transformer_encoder.1} parent=11 // pred_check_branch
          %200 = sbr.rel (%p198) target = $region24
        $region23: #{loco_transformer_encoder.1} parent=11 // pred_region
          _
        $region24: #{loco_transformer_encoder.1} parent=11 // pred_fallthru
          _
        // Predicated region
        $region25: #{loco_transformer_encoder.1} parent=11 // pred_check
          %p201 = pneg %p151
        $region26: #{loco_transformer_encoder.1} parent=11 // pred_check_branch
          %203 = sbr.rel (%p201) target = $region28
        $region27: #{loco_transformer_encoder.1} parent=11 // pred_region
          _
        $region28: #{loco_transformer_encoder.1} parent=11 // pred_fallthru
          _
      $region12: #{loco_transformer_encoder.1} parent=5 // pred_fallthru
        _
      %p204 = scmp.lt.s32.totalorder %s15, 2
      // Predicated region
      $region29: #{loco_transformer_encoder.1} parent=5 // pred_check
        %p205 = pneg %p204
      $region30: #{loco_transformer_encoder.1} parent=5 // pred_check_branch
        %207 = sbr.rel (%p205) target = $region32
      $region31: #{loco_transformer_encoder.1} parent=5 // pred_region
        // Predicated region
        $region33: #{loco_transformer_encoder.1} parent=31 // pred_check
          %p208 = pneg %p35
        $region34: #{loco_transformer_encoder.1} parent=31 // pred_check_branch
          %210 = sbr.rel (%p208) target = $region36
        $region35: #{loco_transformer_encoder.1} parent=31 // pred_region
          %p211 = scmp.lt.s32.totalorder %s15, 1
          %s212 = scalar_select %p211, %s15, 1
          %s213 = smul.addr %s212, 64
          %s214 = smul.addr %s213, 4
          %s215 = scalar_lea.vmem %s0, %s214
        $region36: #{loco_transformer_encoder.1} parent=31 // pred_fallthru
          _
        // Predicated region
        $region37: #{loco_transformer_encoder.1} parent=31 // pred_check
          %p216 = pneg %p61
        $region38: #{loco_transformer_encoder.1} parent=31 // pred_check_branch
          %218 = sbr.rel (%p216) target = $region40
        $region39: #{loco_transformer_encoder.1} parent=31 // pred_region
          %p219 = scmp.lt.s32.totalorder %s15, 1
          %s220 = scalar_select %p219, %s15, 1
          %s221 = scalar_lea.vmem %s1, %s220
        $region40: #{loco_transformer_encoder.1} parent=31 // pred_fallthru
          _
      $region32: #{loco_transformer_encoder.1} parent=5 // pred_fallthru
        _
      %p222 = scmp.le.s32.totalorder 1, %s15
      %p223 = scmp.lt.s32.totalorder %s15, 3
      %p224 = pnand %p222, %p223
      %p225 = pneg %p224
      // Predicated region
      $region41: #{loco_transformer_encoder.1} parent=5 // pred_check
        _
      $region42: #{loco_transformer_encoder.1} parent=5 // pred_check_branch
        %227 = sbr.rel (%p224) target = $region44
      $region43: #{loco_transformer_encoder.1} parent=5 // pred_region
        %s228 = ssub.s32 %s15, 1
        %p229 = scmp.lt.s32.totalorder %s20, 1
        %s230 = scalar_select %p229, %s20, 1
        %s231 = smul.addr %s230, 64
        %s232 = smul.addr %s231, 4
        %s233 = scalar_lea.vmem %s0, %s232
        %p234 = pneg %p41
        %p235 = pneg %p38
        %p236 = scmp.lt.s32.totalorder %s20, 1
        %s237 = scalar_select %p236, %s20, 1
        %s238 = scalar_lea.vmem %s1, %s237
        %p239 = pneg %p67
        %p240 = pneg %p64
        %p241 = pneg %p88
        %p242 = pneg %p85
        %p243 = pneg %p109
        %p244 = pneg %p106
        %p245 = pneg %p130
        %p246 = pneg %p127
        %p247 = pneg %p151
        %p248 = pneg %p148
        %p249 = pneg %p177
        %p250 = pneg %p174
        %s251 = sand.u32 %s164, 1
        %s252 = scalar_lea.sflag [#allocation5], %s251
        %s253 = sand.u32 %s164, 1
        %s254 = scalar_lea.vmem [#allocation4], %s253
        %p255 = scmp.lt.s32.totalorder %s20, 1
        %s256 = scalar_select %p255, %s20, 1
        %s257 = smul.addr %s256, 64
        %s258 = smul.addr %s257, 4
        %s259 = scalar_lea.vmem %s0, %s258
        %p260 = scmp.lt.s32.totalorder %s20, 1
        %s261 = scalar_select %p260, %s20, 1
        %s262 = scalar_lea.vmem %s1, %s261
        %v264 = vld [vmem:[%s259] sm:$0xff]
        %v265 = vld [vmem:[%s259 + $0x8] sm:$0xff]
        %v266 = vld [vmem:[%s259 + $0x10] sm:$0xff]
        %v267 = vld [vmem:[%s259 + $0x18] sm:$0xff]
        %v268 = vld [vmem:[%s259 + $0x20] sm:$0xff]
        %v269 = vld [vmem:[%s259 + $0x28] sm:$0xff]
        %v270 = vld [vmem:[%s259 + $0x30] sm:$0xff]
        %v271 = vld [vmem:[%s259 + $0x38] sm:$0xff]
        %v272 = vld [vmem:[%s259 + $0x40] sm:$0xff]
        %v273 = vld [vmem:[%s259 + $0x48] sm:$0xff]
        %v274 = vld [vmem:[%s259 + $0x50] sm:$0xff]
        %v275 = vld [vmem:[%s259 + $0x58] sm:$0xff]
        %v276 = vld [vmem:[%s259 + $0x60] sm:$0xff]
        %v277 = vld [vmem:[%s259 + $0x68] sm:$0xff]
        %v278 = vld [vmem:[%s259 + $0x70] sm:$0xff]
        %v279 = vld [vmem:[%s259 + $0x78] sm:$0xff]
        %v280 = vld [vmem:[%s259 + $0x80] sm:$0xff]
        %v281 = vld [vmem:[%s259 + $0x88] sm:$0xff]
        %v282 = vld [vmem:[%s259 + $0x90] sm:$0xff]
        %v283 = vld [vmem:[%s259 + $0x98] sm:$0xff]
        %v284 = vld [vmem:[%s259 + $0xa0] sm:$0xff]
        %v285 = vld [vmem:[%s259 + $0xa8] sm:$0xff]
        %v286 = vld [vmem:[%s259 + $0xb0] sm:$0xff]
        %v287 = vld [vmem:[%s259 + $0xb8] sm:$0xff]
        %v288 = vld [vmem:[%s259 + $0xc0] sm:$0xff]
        %v289 = vld [vmem:[%s259 + $0xc8] sm:$0xff]
        %v290 = vld [vmem:[%s259 + $0xd0] sm:$0xff]
        %v291 = vld [vmem:[%s259 + $0xd8] sm:$0xff]
        %v292 = vld [vmem:[%s259 + $0xe0] sm:$0xff]
        %v293 = vld [vmem:[%s259 + $0xe8] sm:$0xff]
        %v294 = vld [vmem:[%s259 + $0xf0] sm:$0xff]
        %v295 = vld [vmem:[%s259 + $0xf8] sm:$0xff]
        %v296 = vld [vmem:[%s2] sm:$0xf]
        %v297 = vld [vmem:[%s2 + $0x4] sm:$0xf]
        %v298 = vld [vmem:[%s2 + $0x8] sm:$0xf]
        %v299 = vld [vmem:[%s2 + $0xc] sm:$0xf]
        %v300 = vld [vmem:[%s2 + $0x10] sm:$0xf]
        %v301 = vld [vmem:[%s2 + $0x14] sm:$0xf]
        %v302 = vld [vmem:[%s2 + $0x18] sm:$0xf]
        %v303 = vld [vmem:[%s2 + $0x1c] sm:$0xf]
        %v304 = vld [vmem:[%s2 + $0x20] sm:$0xf]
        %v305 = vld [vmem:[%s2 + $0x24] sm:$0xf]
        %v306 = vld [vmem:[%s2 + $0x28] sm:$0xf]
        %v307 = vld [vmem:[%s2 + $0x2c] sm:$0xf]
        %v308 = vld [vmem:[%s2 + $0x30] sm:$0xf]
        %v309 = vld [vmem:[%s2 + $0x34] sm:$0xf]
        %v310 = vld [vmem:[%s2 + $0x38] sm:$0xf]
        %v311 = vld [vmem:[%s2 + $0x3c] sm:$0xf]
        %v312 = vld [vmem:[%s2 + $0x40] sm:$0xf]
        %v313 = vld [vmem:[%s2 + $0x44] sm:$0xf]
        %v314 = vld [vmem:[%s2 + $0x48] sm:$0xf]
        %v315 = vld [vmem:[%s2 + $0x4c] sm:$0xf]
        %v316 = vld [vmem:[%s2 + $0x50] sm:$0xf]
        %v317 = vld [vmem:[%s2 + $0x54] sm:$0xf]
        %v318 = vld [vmem:[%s2 + $0x58] sm:$0xf]
        %v319 = vld [vmem:[%s2 + $0x5c] sm:$0xf]
        %v320 = vld [vmem:[%s2 + $0x60] sm:$0xf]
        %v321 = vld [vmem:[%s2 + $0x64] sm:$0xf]
        %v322 = vld [vmem:[%s2 + $0x68] sm:$0xf]
        %v323 = vld [vmem:[%s2 + $0x6c] sm:$0xf]
        %v324 = vld [vmem:[%s2 + $0x70] sm:$0xf]
        %v325 = vld [vmem:[%s2 + $0x74] sm:$0xf]
        %v326 = vld [vmem:[%s2 + $0x78] sm:$0xf]
        %v327 = vld [vmem:[%s2 + $0x7c] sm:$0xf]
        %v328 = vld [vmem:[%s5] sm:$0x1]
        %v329 = vlaneseq
        %v330 = vshrl.u32 %v329, 7
        %v331 = vsub.s32 0, %v330
        %v332 = vrot.slane %v328, %v331
        %v365 = vunpack.c.l.b16 %v264
        %v366 = vunpack.c.h.b16 %v264
        %v367 = vunpack.c.l.b16 %v265
        %v368 = vunpack.c.h.b16 %v265
        %v369 = vunpack.c.l.b16 %v266
        %v370 = vunpack.c.h.b16 %v266
        %v371 = vunpack.c.l.b16 %v267
        %v372 = vunpack.c.h.b16 %v267
        %v373 = vunpack.c.l.b16 %v268
        %v374 = vunpack.c.h.b16 %v268
        %v375 = vunpack.c.l.b16 %v269
        %v376 = vunpack.c.h.b16 %v269
        %v377 = vunpack.c.l.b16 %v270
        %v378 = vunpack.c.h.b16 %v270
        %v379 = vunpack.c.l.b16 %v271
        %v380 = vunpack.c.h.b16 %v271
        %v381 = vunpack.c.l.b16 %v272
        %v382 = vunpack.c.h.b16 %v272
        %v383 = vunpack.c.l.b16 %v273
        %v384 = vunpack.c.h.b16 %v273
        %v385 = vunpack.c.l.b16 %v274
        %v386 = vunpack.c.h.b16 %v274
        %v387 = vunpack.c.l.b16 %v275
        %v388 = vunpack.c.h.b16 %v275
        %v389 = vunpack.c.l.b16 %v276
        %v390 = vunpack.c.h.b16 %v276
        %v391 = vunpack.c.l.b16 %v277
        %v392 = vunpack.c.h.b16 %v277
        %v393 = vunpack.c.l.b16 %v278
        %v394 = vunpack.c.h.b16 %v278
        %v395 = vunpack.c.l.b16 %v279
        %v396 = vunpack.c.h.b16 %v279
        %v397 = vunpack.c.l.b16 %v280
        %v398 = vunpack.c.h.b16 %v280
        %v399 = vunpack.c.l.b16 %v281
        %v400 = vunpack.c.h.b16 %v281
        %v401 = vunpack.c.l.b16 %v282
        %v402 = vunpack.c.h.b16 %v282
        %v403 = vunpack.c.l.b16 %v283
        %v404 = vunpack.c.h.b16 %v283
        %v405 = vunpack.c.l.b16 %v284
        %v406 = vunpack.c.h.b16 %v284
        %v407 = vunpack.c.l.b16 %v285
        %v408 = vunpack.c.h.b16 %v285
        %v409 = vunpack.c.l.b16 %v286
        %v410 = vunpack.c.h.b16 %v286
        %v411 = vunpack.c.l.b16 %v287
        %v412 = vunpack.c.h.b16 %v287
        %v413 = vunpack.c.l.b16 %v288
        %v414 = vunpack.c.h.b16 %v288
        %v415 = vunpack.c.l.b16 %v289
        %v416 = vunpack.c.h.b16 %v289
        %v417 = vunpack.c.l.b16 %v290
        %v418 = vunpack.c.h.b16 %v290
        %v419 = vunpack.c.l.b16 %v291
        %v420 = vunpack.c.h.b16 %v291
        %v421 = vunpack.c.l.b16 %v292
        %v422 = vunpack.c.h.b16 %v292
        %v423 = vunpack.c.l.b16 %v293
        %v424 = vunpack.c.h.b16 %v293
        %v425 = vunpack.c.l.b16 %v294
        %v426 = vunpack.c.h.b16 %v294
        %v427 = vunpack.c.l.b16 %v295
        %v428 = vunpack.c.h.b16 %v295
        %v429 = vpack.c.b16 %v367, %v365
        %v430 = vpack.c.b16 %v368, %v366
        %v431 = vpack.c.b16 %v371, %v369
        %v432 = vpack.c.b16 %v372, %v370
        %v433 = vpack.c.b16 %v375, %v373
        %v434 = vpack.c.b16 %v376, %v374
        %v435 = vpack.c.b16 %v379, %v377
        %v436 = vpack.c.b16 %v380, %v378
        %v437 = vpack.c.b16 %v383, %v381
        %v438 = vpack.c.b16 %v384, %v382
        %v439 = vpack.c.b16 %v387, %v385
        %v440 = vpack.c.b16 %v388, %v386
        %v441 = vpack.c.b16 %v391, %v389
        %v442 = vpack.c.b16 %v392, %v390
        %v443 = vpack.c.b16 %v395, %v393
        %v444 = vpack.c.b16 %v396, %v394
        %v445 = vpack.c.b16 %v399, %v397
        %v446 = vpack.c.b16 %v400, %v398
        %v447 = vpack.c.b16 %v403, %v401
        %v448 = vpack.c.b16 %v404, %v402
        %v449 = vpack.c.b16 %v407, %v405
        %v450 = vpack.c.b16 %v408, %v406
        %v451 = vpack.c.b16 %v411, %v409
        %v452 = vpack.c.b16 %v412, %v410
        %v453 = vpack.c.b16 %v415, %v413
        %v454 = vpack.c.b16 %v416, %v414
        %v455 = vpack.c.b16 %v419, %v417
        %v456 = vpack.c.b16 %v420, %v418
        %v457 = vpack.c.b16 %v423, %v421
        %v458 = vpack.c.b16 %v424, %v422
        %v459 = vpack.c.b16 %v427, %v425
        %v460 = vpack.c.b16 %v428, %v426
        %v525 = vunpack.c.l.b16 %v296
        %v526 = vunpack.c.l.b16 %v297
        %v527 = vunpack.c.l.b16 %v298
        %v528 = vunpack.c.l.b16 %v299
        %v529 = vunpack.c.l.b16 %v300
        %v530 = vunpack.c.l.b16 %v301
        %v531 = vunpack.c.l.b16 %v302
        %v532 = vunpack.c.l.b16 %v303
        %v533 = vunpack.c.l.b16 %v304
        %v534 = vunpack.c.l.b16 %v305
        %v535 = vunpack.c.l.b16 %v306
        %v536 = vunpack.c.l.b16 %v307
        %v537 = vunpack.c.l.b16 %v308
        %v538 = vunpack.c.l.b16 %v309
        %v539 = vunpack.c.l.b16 %v310
        %v540 = vunpack.c.l.b16 %v311
        %v541 = vunpack.c.l.b16 %v312
        %v542 = vunpack.c.l.b16 %v313
        %v543 = vunpack.c.l.b16 %v314
        %v544 = vunpack.c.l.b16 %v315
        %v545 = vunpack.c.l.b16 %v316
        %v546 = vunpack.c.l.b16 %v317
        %v547 = vunpack.c.l.b16 %v318
        %v548 = vunpack.c.l.b16 %v319
        %v549 = vunpack.c.l.b16 %v320
        %v550 = vunpack.c.l.b16 %v321
        %v551 = vunpack.c.l.b16 %v322
        %v552 = vunpack.c.l.b16 %v323
        %v553 = vunpack.c.l.b16 %v324
        %v554 = vunpack.c.l.b16 %v325
        %v555 = vunpack.c.l.b16 %v326
        %v556 = vunpack.c.l.b16 %v327
        %v557 = vpack.c.b16 %v526, %v525
        %v558 = vpack.c.b16 %v528, %v527
        %v559 = vpack.c.b16 %v530, %v529
        %v560 = vpack.c.b16 %v532, %v531
        %v561 = vpack.c.b16 %v534, %v533
        %v562 = vpack.c.b16 %v536, %v535
        %v563 = vpack.c.b16 %v538, %v537
        %v564 = vpack.c.b16 %v540, %v539
        %v565 = vpack.c.b16 %v542, %v541
        %v566 = vpack.c.b16 %v544, %v543
        %v567 = vpack.c.b16 %v546, %v545
        %v568 = vpack.c.b16 %v548, %v547
        %v569 = vpack.c.b16 %v550, %v549
        %v570 = vpack.c.b16 %v552, %v551
        %v571 = vpack.c.b16 %v554, %v553
        %v572 = vpack.c.b16 %v556, %v555
        %589 = vmatprep.subr.bf16.mxu0 0
        %590 = vmatpush1.bf16.msra.mxu0 %v557
        %591 = vmatprep.subr.bf16.mxu0 0
        %592 = vmatpush1.bf16.msra.mxu0 %v558
        %593 = vmatprep.subr.bf16.mxu0 0
        %594 = vmatpush1.bf16.msra.mxu0 %v559
        %595 = vmatprep.subr.bf16.mxu0 0
        %596 = vmatpush1.bf16.msra.mxu0 %v560
        %597 = vmatprep.subr.bf16.mxu0 0
        %598 = vmatpush1.bf16.msra.mxu0 %v561
        %599 = vmatprep.subr.bf16.mxu0 0
        %600 = vmatpush1.bf16.msra.mxu0 %v562
        %601 = vmatprep.subr.bf16.mxu0 0
        %602 = vmatpush1.bf16.msra.mxu0 %v563
        %603 = vmatprep.subr.bf16.mxu0 0
        %604 = vmatpush1.bf16.msra.mxu0 %v564
        %605 = vmatprep.subr.bf16.mxu0 0
        %606 = vmatpush1.bf16.msra.mxu0 %v565
        %607 = vmatprep.subr.bf16.mxu0 0
        %608 = vmatpush1.bf16.msra.mxu0 %v566
        %609 = vmatprep.subr.bf16.mxu0 0
        %610 = vmatpush1.bf16.msra.mxu0 %v567
        %611 = vmatprep.subr.bf16.mxu0 0
        %612 = vmatpush1.bf16.msra.mxu0 %v568
        %613 = vmatprep.subr.bf16.mxu0 0
        %614 = vmatpush1.bf16.msra.mxu0 %v569
        %615 = vmatprep.subr.bf16.mxu0 0
        %616 = vmatpush1.bf16.msra.mxu0 %v570
        %617 = vmatprep.subr.bf16.mxu0 0
        %618 = vmatpush1.bf16.msra.mxu0 %v571
        %619 = vmatprep.subr.bf16.mxu0 0
        %620 = vmatpush1.bf16.msra.mxu0 %v572
        %621 = vmatprep.mubr.bf16.mxu0 %v430
        %622 = vmatmul.mubr.bf16.gmra.mrb[0].mxu0 %v429
        %v623 = vpop.f32.mrb[0].mxu0
        %v624 = vadd.f32 %v332, %v623
        %v625 = vpop.f32.mrb[0].mxu0
        %v626 = vpop.f32.mrb[0].mxu0
        %v627 = vadd.f32 %v332, %v626
        %v628 = vpop.f32.mrb[0].mxu0
        %629 = vmatprep.mubr.bf16.mxu0 %v432
        %630 = vmatmul.mubr.bf16.gmra.mrb[0].mxu0 %v431
        %v631 = vpop.f32.mrb[0].mxu0
        %v632 = vadd.f32 %v332, %v631
        %v633 = vpop.f32.mrb[0].mxu0
        %v634 = vpop.f32.mrb[0].mxu0
        %v635 = vadd.f32 %v332, %v634
        %v636 = vpop.f32.mrb[0].mxu0
        %637 = vmatprep.mubr.bf16.mxu0 %v434
        %638 = vmatmul.mubr.bf16.gmra.mrb[0].mxu0 %v433
        %v639 = vpop.f32.mrb[0].mxu0
        %v640 = vadd.f32 %v332, %v639
        %v641 = vpop.f32.mrb[0].mxu0
        %v642 = vpop.f32.mrb[0].mxu0
        %v643 = vadd.f32 %v332, %v642
        %v644 = vpop.f32.mrb[0].mxu0
        %645 = vmatprep.mubr.bf16.mxu0 %v436
        %646 = vmatmul.mubr.bf16.gmra.mrb[0].mxu0 %v435
        %v647 = vpop.f32.mrb[0].mxu0
        %v648 = vadd.f32 %v332, %v647
        %v649 = vpop.f32.mrb[0].mxu0
        %v650 = vpop.f32.mrb[0].mxu0
        %v651 = vadd.f32 %v332, %v650
        %v652 = vpop.f32.mrb[0].mxu0
        %653 = vmatprep.mubr.bf16.mxu0 %v438
        %654 = vmatmul.mubr.bf16.gmra.mrb[0].mxu0 %v437
        %v655 = vpop.f32.mrb[0].mxu0
        %v656 = vadd.f32 %v332, %v655
        %v657 = vpop.f32.mrb[0].mxu0
        %v658 = vpop.f32.mrb[0].mxu0
        %v659 = vadd.f32 %v332, %v658
        %v660 = vpop.f32.mrb[0].mxu0
        %661 = vmatprep.mubr.bf16.mxu0 %v440
        %662 = vmatmul.mubr.bf16.gmra.mrb[0].mxu0 %v439
        %v663 = vpop.f32.mrb[0].mxu0
        %v664 = vadd.f32 %v332, %v663
        %v665 = vpop.f32.mrb[0].mxu0
        %v666 = vpop.f32.mrb[0].mxu0
        %v667 = vadd.f32 %v332, %v666
        %v668 = vpop.f32.mrb[0].mxu0
        %669 = vmatprep.mubr.bf16.mxu0 %v442
        %670 = vmatmul.mubr.bf16.gmra.mrb[0].mxu0 %v441
        %v671 = vpop.f32.mrb[0].mxu0
        %v672 = vadd.f32 %v332, %v671
        %v673 = vpop.f32.mrb[0].mxu0
        %v674 = vpop.f32.mrb[0].mxu0
        %v675 = vadd.f32 %v332, %v674
        %v676 = vpop.f32.mrb[0].mxu0
        %677 = vmatprep.mubr.bf16.mxu0 %v444
        %678 = vmatmul.mubr.bf16.gmra.mrb[0].mxu0 %v443
        %v679 = vpop.f32.mrb[0].mxu0
        %v680 = vadd.f32 %v332, %v679
        %v681 = vpop.f32.mrb[0].mxu0
        %v682 = vpop.f32.mrb[0].mxu0
        %v683 = vadd.f32 %v332, %v682
        %v684 = vpop.f32.mrb[0].mxu0
        %685 = vmatprep.mubr.bf16.mxu0 %v446
        %686 = vmatmul.mubr.bf16.gmra.mrb[0].mxu0 %v445
        %v687 = vpop.f32.mrb[0].mxu0
        %v688 = vadd.f32 %v332, %v687
        %v689 = vpop.f32.mrb[0].mxu0
        %v690 = vpop.f32.mrb[0].mxu0
        %v691 = vadd.f32 %v332, %v690
        %v692 = vpop.f32.mrb[0].mxu0
        %693 = vmatprep.mubr.bf16.mxu0 %v448
        %694 = vmatmul.mubr.bf16.gmra.mrb[0].mxu0 %v447
        %v695 = vpop.f32.mrb[0].mxu0
        %v696 = vadd.f32 %v332, %v695
        %v697 = vpop.f32.mrb[0].mxu0
        %v698 = vpop.f32.mrb[0].mxu0
        %v699 = vadd.f32 %v332, %v698
        %v700 = vpop.f32.mrb[0].mxu0
        %701 = vmatprep.mubr.bf16.mxu0 %v450
        %702 = vmatmul.mubr.bf16.gmra.mrb[0].mxu0 %v449
        %v703 = vpop.f32.mrb[0].mxu0
        %v704 = vadd.f32 %v332, %v703
        %v705 = vpop.f32.mrb[0].mxu0
        %v706 = vpop.f32.mrb[0].mxu0
        %v707 = vadd.f32 %v332, %v706
        %v708 = vpop.f32.mrb[0].mxu0
        %709 = vmatprep.mubr.bf16.mxu0 %v452
        %710 = vmatmul.mubr.bf16.gmra.mrb[0].mxu0 %v451
        %v711 = vpop.f32.mrb[0].mxu0
        %v712 = vadd.f32 %v332, %v711
        %v713 = vpop.f32.mrb[0].mxu0
        %v714 = vpop.f32.mrb[0].mxu0
        %v715 = vadd.f32 %v332, %v714
        %v716 = vpop.f32.mrb[0].mxu0
        %717 = vmatprep.mubr.bf16.mxu0 %v454
        %718 = vmatmul.mubr.bf16.gmra.mrb[0].mxu0 %v453
        %v719 = vpop.f32.mrb[0].mxu0
        %v720 = vadd.f32 %v332, %v719
        %v721 = vpop.f32.mrb[0].mxu0
        %v722 = vpop.f32.mrb[0].mxu0
        %v723 = vadd.f32 %v332, %v722
        %v724 = vpop.f32.mrb[0].mxu0
        %725 = vmatprep.mubr.bf16.mxu0 %v456
        %726 = vmatmul.mubr.bf16.gmra.mrb[0].mxu0 %v455
        %v727 = vpop.f32.mrb[0].mxu0
        %v728 = vadd.f32 %v332, %v727
        %v729 = vpop.f32.mrb[0].mxu0
        %v730 = vpop.f32.mrb[0].mxu0
        %v731 = vadd.f32 %v332, %v730
        %v732 = vpop.f32.mrb[0].mxu0
        %733 = vmatprep.mubr.bf16.mxu0 %v458
        %734 = vmatmul.mubr.bf16.gmra.mrb[0].mxu0 %v457
        %v735 = vpop.f32.mrb[0].mxu0
        %v736 = vadd.f32 %v332, %v735
        %v737 = vpop.f32.mrb[0].mxu0
        %v738 = vpop.f32.mrb[0].mxu0
        %v739 = vadd.f32 %v332, %v738
        %v740 = vpop.f32.mrb[0].mxu0
        %741 = vmatprep.mubr.bf16.mxu0 %v460
        %742 = vmatmul.mubr.bf16.gmra.mrb[0].mxu0 %v459
        %v743 = vpop.f32.mrb[0].mxu0
        %v744 = vadd.f32 %v332, %v743
        %v745 = vpop.f32.mrb[0].mxu0
        %v746 = vpop.f32.mrb[0].mxu0
        %v747 = vadd.f32 %v332, %v746
        %v748 = vpop.f32.mrb[0].mxu0
        %749 = vdwg.mxu0
        %v750 = vmax.f32 %v624, 0.0
        %v751 = vmax.f32 %v627, 0.0
        %v752 = vmax.f32 %v632, 0.0
        %v753 = vmax.f32 %v635, 0.0
        %v754 = vmax.f32 %v640, 0.0
        %v755 = vmax.f32 %v643, 0.0
        %v756 = vmax.f32 %v648, 0.0
        %v757 = vmax.f32 %v651, 0.0
        %v758 = vmax.f32 %v656, 0.0
        %v759 = vmax.f32 %v659, 0.0
        %v760 = vmax.f32 %v664, 0.0
        %v761 = vmax.f32 %v667, 0.0
        %v762 = vmax.f32 %v672, 0.0
        %v763 = vmax.f32 %v675, 0.0
        %v764 = vmax.f32 %v680, 0.0
        %v765 = vmax.f32 %v683, 0.0
        %v766 = vmax.f32 %v688, 0.0
        %v767 = vmax.f32 %v691, 0.0
        %v768 = vmax.f32 %v696, 0.0
        %v769 = vmax.f32 %v699, 0.0
        %v770 = vmax.f32 %v704, 0.0
        %v771 = vmax.f32 %v707, 0.0
        %v772 = vmax.f32 %v712, 0.0
        %v773 = vmax.f32 %v715, 0.0
        %v774 = vmax.f32 %v720, 0.0
        %v775 = vmax.f32 %v723, 0.0
        %v776 = vmax.f32 %v728, 0.0
        %v777 = vmax.f32 %v731, 0.0
        %v778 = vmax.f32 %v736, 0.0
        %v779 = vmax.f32 %v739, 0.0
        %v780 = vmax.f32 %v744, 0.0
        %v781 = vmax.f32 %v747, 0.0
        %v782 = vpack.c.bf16 %v751, %v750
        %v783 = vpack.c.bf16 %v753, %v752
        %v784 = vpack.c.bf16 %v755, %v754
        %v785 = vpack.c.bf16 %v757, %v756
        %v786 = vpack.c.bf16 %v759, %v758
        %v787 = vpack.c.bf16 %v761, %v760
        %v788 = vpack.c.bf16 %v763, %v762
        %v789 = vpack.c.bf16 %v765, %v764
        %v790 = vpack.c.bf16 %v767, %v766
        %v791 = vpack.c.bf16 %v769, %v768
        %v792 = vpack.c.bf16 %v771, %v770
        %v793 = vpack.c.bf16 %v773, %v772
        %v794 = vpack.c.bf16 %v775, %v774
        %v795 = vpack.c.bf16 %v777, %v776
        %v796 = vpack.c.bf16 %v779, %v778
        %v797 = vpack.c.bf16 %v781, %v780
        %vm798 = vcmask 261120
        %799 = vst.msk [vmem:[#allocation2] sm:$0xff] %vm798, %v782
        %800 = vst.msk [vmem:[#allocation2 + $0x8] sm:$0xff] %vm798, %v783
        %801 = vst.msk [vmem:[#allocation2 + $0x10] sm:$0xff] %vm798, %v784
        %802 = vst.msk [vmem:[#allocation2 + $0x18] sm:$0xff] %vm798, %v785
        %803 = vst.msk [vmem:[#allocation2 + $0x20] sm:$0xff] %vm798, %v786
        %804 = vst.msk [vmem:[#allocation2 + $0x28] sm:$0xff] %vm798, %v787
        %805 = vst.msk [vmem:[#allocation2 + $0x30] sm:$0xff] %vm798, %v788
        %806 = vst.msk [vmem:[#allocation2 + $0x38] sm:$0xff] %vm798, %v789
        %807 = vst.msk [vmem:[#allocation2 + $0x40] sm:$0xff] %vm798, %v790
        %808 = vst.msk [vmem:[#allocation2 + $0x48] sm:$0xff] %vm798, %v791
        %809 = vst.msk [vmem:[#allocation2 + $0x50] sm:$0xff] %vm798, %v792
        %810 = vst.msk [vmem:[#allocation2 + $0x58] sm:$0xff] %vm798, %v793
        %811 = vst.msk [vmem:[#allocation2 + $0x60] sm:$0xff] %vm798, %v794
        %812 = vst.msk [vmem:[#allocation2 + $0x68] sm:$0xff] %vm798, %v795
        %813 = vst.msk [vmem:[#allocation2 + $0x70] sm:$0xff] %vm798, %v796
        %814 = vst.msk [vmem:[#allocation2 + $0x78] sm:$0xff] %vm798, %v797
        %v815 = vld [vmem:[%s3] sm:$0xf]
        %v816 = vld [vmem:[%s3 + $0x4] sm:$0xf]
        %v817 = vld [vmem:[%s3 + $0x8] sm:$0xf]
        %v818 = vld [vmem:[%s3 + $0xc] sm:$0xf]
        %v819 = vld [vmem:[#allocation2] sm:$0xff]
        %v820 = vld [vmem:[#allocation2 + $0x8] sm:$0xff]
        %v821 = vld [vmem:[#allocation2 + $0x10] sm:$0xff]
        %v822 = vld [vmem:[#allocation2 + $0x18] sm:$0xff]
        %v827 = vunpack.c.l.b16 %v815
        %v828 = vunpack.c.l.b16 %v816
        %v829 = vunpack.c.l.b16 %v817
        %v830 = vunpack.c.l.b16 %v818
        %v831 = vpack.c.b16 %v828, %v827
        %v832 = vpack.c.b16 %v830, %v829
        %v836 = vsel %vm798, %v819, 0
        %v839 = vsel %vm798, %v820, 0
        %v842 = vsel %vm798, %v821, 0
        %v845 = vsel %vm798, %v822, 0
        %847 = vmatprep.subr.bf16.mxu0 0
        %848 = vmatpush1.bf16.msra.mxu0 %v831
        %849 = vmatprep.subr.bf16.mxu0 0
        %850 = vmatpush1.bf16.msra.mxu0 %v832
        %851 = vmatprep.subr.bf16.mxu0 0
        %852 = vmatpush1.bf16.msra.mxu0 0
        %853 = vmatprep.subr.bf16.mxu0 0
        %854 = vmatpush1.bf16.msra.mxu0 0
        %855 = vmatprep.subr.bf16.mxu0 0
        %856 = vmatpush1.bf16.msra.mxu0 0
        %857 = vmatprep.subr.bf16.mxu0 0
        %858 = vmatpush1.bf16.msra.mxu0 0
        %859 = vmatprep.subr.bf16.mxu0 0
        %860 = vmatpush1.bf16.msra.mxu0 0
        %861 = vmatprep.subr.bf16.mxu0 0
        %862 = vmatpush1.bf16.msra.mxu0 0
        %863 = vmatprep.subr.bf16.mxu0 0
        %864 = vmatpush1.bf16.msra.mxu0 0
        %865 = vmatprep.subr.bf16.mxu0 0
        %866 = vmatpush1.bf16.msra.mxu0 0
        %867 = vmatprep.subr.bf16.mxu0 0
        %868 = vmatpush1.bf16.msra.mxu0 0
        %869 = vmatprep.subr.bf16.mxu0 0
        %870 = vmatpush1.bf16.msra.mxu0 0
        %871 = vmatprep.subr.bf16.mxu0 0
        %872 = vmatpush1.bf16.msra.mxu0 0
        %873 = vmatprep.subr.bf16.mxu0 0
        %874 = vmatpush1.bf16.msra.mxu0 0
        %875 = vmatprep.subr.bf16.mxu0 0
        %876 = vmatpush1.bf16.msra.mxu0 0
        %877 = vmatprep.subr.bf16.mxu0 0
        %878 = vmatpush1.bf16.msra.mxu0 0
        %879 = vmatprep.mubr.bf16.mxu0 0
        %880 = vmatmul.mubr.bf16.gmra.mrb[0].mxu0 %v836
        %v881 = vpop.f32.mrb[0].mxu0
        %v882 = vadd.f32 0.0, %v881
        %v883 = vpop.f32.mrb[0].mxu0
        %v884 = vpop.f32.mrb[0].mxu0
        %v885 = vadd.f32 0.0, %v884
        %v886 = vpop.f32.mrb[0].mxu0
        %887 = vmatprep.mubr.bf16.mxu0 0
        %888 = vmatmul.mubr.bf16.gmra.mrb[0].mxu0 %v839
        %v889 = vpop.f32.mrb[0].mxu0
        %v890 = vadd.f32 0.0, %v889
        %v891 = vpop.f32.mrb[0].mxu0
        %v892 = vpop.f32.mrb[0].mxu0
        %v893 = vadd.f32 0.0, %v892
        %v894 = vpop.f32.mrb[0].mxu0
        %895 = vmatprep.mubr.bf16.mxu0 0
        %896 = vmatmul.mubr.bf16.gmra.mrb[0].mxu0 %v842
        %v897 = vpop.f32.mrb[0].mxu0
        %v898 = vadd.f32 0.0, %v897
        %v899 = vpop.f32.mrb[0].mxu0
        %v900 = vpop.f32.mrb[0].mxu0
        %v901 = vadd.f32 0.0, %v900
        %v902 = vpop.f32.mrb[0].mxu0
        %903 = vmatprep.mubr.bf16.mxu0 0
        %904 = vmatmul.mubr.bf16.gmra.mrb[0].mxu0 %v845
        %v905 = vpop.f32.mrb[0].mxu0
        %v906 = vpop.f32.mrb[0].mxu0
        %v907 = vpop.f32.mrb[0].mxu0
        %v908 = vpop.f32.mrb[0].mxu0
        %909 = vdwg.mxu0
        %v910 = vadd.f32 %v882, 0.0
        %v911 = vadd.f32 %v885, 0.0
        %v912 = vadd.f32 %v890, 0.0
        %v913 = vadd.f32 %v893, 0.0
        %v914 = vadd.f32 %v898, 0.0
        %v915 = vadd.f32 %v901, 0.0
        %v916 = vld [vmem:[%s3 + $0x10] sm:$0xf]
        %v917 = vld [vmem:[%s3 + $0x14] sm:$0xf]
        %v918 = vld [vmem:[%s3 + $0x18] sm:$0xf]
        %v919 = vld [vmem:[%s3 + $0x1c] sm:$0xf]
        %s920 = scalar_lea.vmem [#allocation2], 32
        %v921 = vld [vmem:[%s920] sm:$0xff]
        %v922 = vld [vmem:[%s920 + $0x8] sm:$0xff]
        %v923 = vld [vmem:[%s920 + $0x10] sm:$0xff]
        %v924 = vld [vmem:[%s920 + $0x18] sm:$0xff]
        %v929 = vunpack.c.l.b16 %v916
        %v930 = vunpack.c.l.b16 %v917
        %v931 = vunpack.c.l.b16 %v918
        %v932 = vunpack.c.l.b16 %v919
        %v933 = vpack.c.b16 %v930, %v929
        %v934 = vpack.c.b16 %v932, %v931
        %v938 = vsel %vm798, %v921, 0
        %v941 = vsel %vm798, %v922, 0
        %v944 = vsel %vm798, %v923, 0
        %v947 = vsel %vm798, %v924, 0
        %949 = vmatprep.subr.bf16.mxu0 0
        %950 = vmatpush1.bf16.msra.mxu0 %v933
        %951 = vmatprep.subr.bf16.mxu0 0
        %952 = vmatpush1.bf16.msra.mxu0 %v934
        %953 = vmatprep.subr.bf16.mxu0 0
        %954 = vmatpush1.bf16.msra.mxu0 0
        %955 = vmatprep.subr.bf16.mxu0 0
        %956 = vmatpush1.bf16.msra.mxu0 0
        %957 = vmatprep.subr.bf16.mxu0 0
        %958 = vmatpush1.bf16.msra.mxu0 0
        %959 = vmatprep.subr.bf16.mxu0 0
        %960 = vmatpush1.bf16.msra.mxu0 0
        %961 = vmatprep.subr.bf16.mxu0 0
        %962 = vmatpush1.bf16.msra.mxu0 0
        %963 = vmatprep.subr.bf16.mxu0 0
        %964 = vmatpush1.bf16.msra.mxu0 0
        %965 = vmatprep.subr.bf16.mxu0 0
        %966 = vmatpush1.bf16.msra.mxu0 0
        %967 = vmatprep.subr.bf16.mxu0 0
        %968 = vmatpush1.bf16.msra.mxu0 0
        %969 = vmatprep.subr.bf16.mxu0 0
        %970 = vmatpush1.bf16.msra.mxu0 0
        %971 = vmatprep.subr.bf16.mxu0 0
        %972 = vmatpush1.bf16.msra.mxu0 0
        %973 = vmatprep.subr.bf16.mxu0 0
        %974 = vmatpush1.bf16.msra.mxu0 0
        %975 = vmatprep.subr.bf16.mxu0 0
        %976 = vmatpush1.bf16.msra.mxu0 0
        %977 = vmatprep.subr.bf16.mxu0 0
        %978 = vmatpush1.bf16.msra.mxu0 0
        %979 = vmatprep.subr.bf16.mxu0 0
        %980 = vmatpush1.bf16.msra.mxu0 0
        %981 = vmatprep.mubr.bf16.mxu0 0
        %982 = vmatmul.mubr.bf16.gmra.mrb[0].mxu0 %v938
        %v983 = vpop.f32.mrb[0].mxu0
        %v984 = vadd.f32 0.0, %v983
        %v985 = vpop.f32.mrb[0].mxu0
        %v986 = vpop.f32.mrb[0].mxu0
        %v987 = vadd.f32 0.0, %v986
        %v988 = vpop.f32.mrb[0].mxu0
        %989 = vmatprep.mubr.bf16.mxu0 0
        %990 = vmatmul.mubr.bf16.gmra.mrb[0].mxu0 %v941
        %v991 = vpop.f32.mrb[0].mxu0
        %v992 = vadd.f32 0.0, %v991
        %v993 = vpop.f32.mrb[0].mxu0
        %v994 = vpop.f32.mrb[0].mxu0
        %v995 = vadd.f32 0.0, %v994
        %v996 = vpop.f32.mrb[0].mxu0
        %997 = vmatprep.mubr.bf16.mxu0 0
        %998 = vmatmul.mubr.bf16.gmra.mrb[0].mxu0 %v944
        %v999 = vpop.f32.mrb[0].mxu0
        %v1000 = vadd.f32 0.0, %v999
        %v1001 = vpop.f32.mrb[0].mxu0
        %v1002 = vpop.f32.mrb[0].mxu0
        %v1003 = vadd.f32 0.0, %v1002
        %v1004 = vpop.f32.mrb[0].mxu0
        %1005 = vmatprep.mubr.bf16.mxu0 0
        %1006 = vmatmul.mubr.bf16.gmra.mrb[0].mxu0 %v947
        %v1007 = vpop.f32.mrb[0].mxu0
        %v1008 = vpop.f32.mrb[0].mxu0
        %v1009 = vpop.f32.mrb[0].mxu0
        %v1010 = vpop.f32.mrb[0].mxu0
        %1011 = vdwg.mxu0
        %v1012 = vadd.f32 %v910, %v984
        %v1013 = vadd.f32 %v911, %v987
        %v1014 = vadd.f32 %v912, %v992
        %v1015 = vadd.f32 %v913, %v995
        %v1016 = vadd.f32 %v914, %v1000
        %v1017 = vadd.f32 %v915, %v1003
        %v1018 = vld [vmem:[%s3 + $0x20] sm:$0xf]
        %v1019 = vld [vmem:[%s3 + $0x24] sm:$0xf]
        %v1020 = vld [vmem:[%s3 + $0x28] sm:$0xf]
        %v1021 = vld [vmem:[%s3 + $0x2c] sm:$0xf]
        %v1026 = vunpack.c.l.b16 %v1018
        %v1027 = vunpack.c.l.b16 %v1019
        %v1028 = vunpack.c.l.b16 %v1020
        %v1029 = vunpack.c.l.b16 %v1021
        %v1030 = vpack.c.b16 %v1027, %v1026
        %v1031 = vpack.c.b16 %v1029, %v1028
        %1034 = vmatprep.subr.bf16.mxu0 0
        %1035 = vmatpush1.bf16.msra.mxu0 %v1030
        %1036 = vmatprep.subr.bf16.mxu0 0
        %1037 = vmatpush1.bf16.msra.mxu0 %v1031
        %1038 = vmatprep.subr.bf16.mxu0 0
        %1039 = vmatpush1.bf16.msra.mxu0 0
        %1040 = vmatprep.subr.bf16.mxu0 0
        %1041 = vmatpush1.bf16.msra.mxu0 0
        %1042 = vmatprep.subr.bf16.mxu0 0
        %1043 = vmatpush1.bf16.msra.mxu0 0
        %1044 = vmatprep.subr.bf16.mxu0 0
        %1045 = vmatpush1.bf16.msra.mxu0 0
        %1046 = vmatprep.subr.bf16.mxu0 0
        %1047 = vmatpush1.bf16.msra.mxu0 0
        %1048 = vmatprep.subr.bf16.mxu0 0
        %1049 = vmatpush1.bf16.msra.mxu0 0
        %1050 = vmatprep.subr.bf16.mxu0 0
        %1051 = vmatpush1.bf16.msra.mxu0 0
        %1052 = vmatprep.subr.bf16.mxu0 0
        %1053 = vmatpush1.bf16.msra.mxu0 0
        %1054 = vmatprep.subr.bf16.mxu0 0
        %1055 = vmatpush1.bf16.msra.mxu0 0
        %1056 = vmatprep.subr.bf16.mxu0 0
        %1057 = vmatpush1.bf16.msra.mxu0 0
        %1058 = vmatprep.subr.bf16.mxu0 0
        %1059 = vmatpush1.bf16.msra.mxu0 0
        %1060 = vmatprep.subr.bf16.mxu0 0
        %1061 = vmatpush1.bf16.msra.mxu0 0
        %1062 = vmatprep.subr.bf16.mxu0 0
        %1063 = vmatpush1.bf16.msra.mxu0 0
        %1064 = vmatprep.subr.bf16.mxu0 0
        %1065 = vmatpush1.bf16.msra.mxu0 0
        %1066 = vmatprep.mubr.bf16.mxu0 0
        %1067 = vmatmul.mubr.bf16.gmra.mrb[0].mxu0 %v836
        %v1068 = vpop.f32.mrb[0].mxu0
        %v1069 = vadd.f32 0.0, %v1068
        %v1070 = vpop.f32.mrb[0].mxu0
        %v1071 = vpop.f32.mrb[0].mxu0
        %v1072 = vadd.f32 0.0, %v1071
        %v1073 = vpop.f32.mrb[0].mxu0
        %1074 = vmatprep.mubr.bf16.mxu0 0
        %1075 = vmatmul.mubr.bf16.gmra.mrb[0].mxu0 %v839
        %v1076 = vpop.f32.mrb[0].mxu0
        %v1077 = vadd.f32 0.0, %v1076
        %v1078 = vpop.f32.mrb[0].mxu0
        %v1079 = vpop.f32.mrb[0].mxu0
        %v1080 = vadd.f32 0.0, %v1079
        %v1081 = vpop.f32.mrb[0].mxu0
        %1082 = vmatprep.mubr.bf16.mxu0 0
        %1083 = vmatmul.mubr.bf16.gmra.mrb[0].mxu0 %v842
        %v1084 = vpop.f32.mrb[0].mxu0
        %v1085 = vadd.f32 0.0, %v1084
        %v1086 = vpop.f32.mrb[0].mxu0
        %v1087 = vpop.f32.mrb[0].mxu0
        %v1088 = vadd.f32 0.0, %v1087
        %v1089 = vpop.f32.mrb[0].mxu0
        %1090 = vmatprep.mubr.bf16.mxu0 0
        %1091 = vmatmul.mubr.bf16.gmra.mrb[0].mxu0 %v845
        %v1092 = vpop.f32.mrb[0].mxu0
        %v1093 = vpop.f32.mrb[0].mxu0
        %v1094 = vpop.f32.mrb[0].mxu0
        %v1095 = vpop.f32.mrb[0].mxu0
        %1096 = vdwg.mxu0
        %v1103 = vrot.slane %v1069, 1
        %v1104 = vrot.slane %v1072, 1
        %v1105 = vrot.slane %v1077, 1
        %v1106 = vrot.slane %v1080, 1
        %v1107 = vrot.slane %v1085, 1
        %v1108 = vrot.slane %v1088, 1
        %v1115 = vadd.f32 %v1012, %v1103
        %v1116 = vadd.f32 %v1013, %v1104
        %v1117 = vadd.f32 %v1014, %v1105
        %v1118 = vadd.f32 %v1015, %v1106
        %v1119 = vadd.f32 %v1016, %v1107
        %v1120 = vadd.f32 %v1017, %v1108
        %v1121 = vld [vmem:[%s3 + $0x30] sm:$0xf]
        %v1122 = vld [vmem:[%s3 + $0x34] sm:$0xf]
        %v1123 = vld [vmem:[%s3 + $0x38] sm:$0xf]
        %v1124 = vld [vmem:[%s3 + $0x3c] sm:$0xf]
        %v1129 = vunpack.c.l.b16 %v1121
        %v1130 = vunpack.c.l.b16 %v1122
        %v1131 = vunpack.c.l.b16 %v1123
        %v1132 = vunpack.c.l.b16 %v1124
        %v1133 = vpack.c.b16 %v1130, %v1129
        %v1134 = vpack.c.b16 %v1132, %v1131
        %1137 = vmatprep.subr.bf16.mxu0 0
        %1138 = vmatpush1.bf16.msra.mxu0 %v1133
        %1139 = vmatprep.subr.bf16.mxu0 0
        %1140 = vmatpush1.bf16.msra.mxu0 %v1134
        %1141 = vmatprep.subr.bf16.mxu0 0
        %1142 = vmatpush1.bf16.msra.mxu0 0
        %1143 = vmatprep.subr.bf16.mxu0 0
        %1144 = vmatpush1.bf16.msra.mxu0 0
        %1145 = vmatprep.subr.bf16.mxu0 0
        %1146 = vmatpush1.bf16.msra.mxu0 0
        %1147 = vmatprep.subr.bf16.mxu0 0
        %1148 = vmatpush1.bf16.msra.mxu0 0
        %1149 = vmatprep.subr.bf16.mxu0 0
        %1150 = vmatpush1.bf16.msra.mxu0 0
        %1151 = vmatprep.subr.bf16.mxu0 0
        %1152 = vmatpush1.bf16.msra.mxu0 0
        %1153 = vmatprep.subr.bf16.mxu0 0
        %1154 = vmatpush1.bf16.msra.mxu0 0
        %1155 = vmatprep.subr.bf16.mxu0 0
        %1156 = vmatpush1.bf16.msra.mxu0 0
        %1157 = vmatprep.subr.bf16.mxu0 0
        %1158 = vmatpush1.bf16.msra.mxu0 0
        %1159 = vmatprep.subr.bf16.mxu0 0
        %1160 = vmatpush1.bf16.msra.mxu0 0
        %1161 = vmatprep.subr.bf16.mxu0 0
        %1162 = vmatpush1.bf16.msra.mxu0 0
        %1163 = vmatprep.subr.bf16.mxu0 0
        %1164 = vmatpush1.bf16.msra.mxu0 0
        %1165 = vmatprep.subr.bf16.mxu0 0
        %1166 = vmatpush1.bf16.msra.mxu0 0
        %1167 = vmatprep.subr.bf16.mxu0 0
        %1168 = vmatpush1.bf16.msra.mxu0 0
        %1169 = vmatprep.mubr.bf16.mxu0 0
        %1170 = vmatmul.mubr.bf16.gmra.mrb[0].mxu0 %v938
        %v1171 = vpop.f32.mrb[0].mxu0
        %v1172 = vadd.f32 0.0, %v1171
        %v1173 = vpop.f32.mrb[0].mxu0
        %v1174 = vpop.f32.mrb[0].mxu0
        %v1175 = vadd.f32 0.0, %v1174
        %v1176 = vpop.f32.mrb[0].mxu0
        %1177 = vmatprep.mubr.bf16.mxu0 0
        %1178 = vmatmul.mubr.bf16.gmra.mrb[0].mxu0 %v941
        %v1179 = vpop.f32.mrb[0].mxu0
        %v1180 = vadd.f32 0.0, %v1179
        %v1181 = vpop.f32.mrb[0].mxu0
        %v1182 = vpop.f32.mrb[0].mxu0
        %v1183 = vadd.f32 0.0, %v1182
        %v1184 = vpop.f32.mrb[0].mxu0
        %1185 = vmatprep.mubr.bf16.mxu0 0
        %1186 = vmatmul.mubr.bf16.gmra.mrb[0].mxu0 %v944
        %v1187 = vpop.f32.mrb[0].mxu0
        %v1188 = vadd.f32 0.0, %v1187
        %v1189 = vpop.f32.mrb[0].mxu0
        %v1190 = vpop.f32.mrb[0].mxu0
        %v1191 = vadd.f32 0.0, %v1190
        %v1192 = vpop.f32.mrb[0].mxu0
        %1193 = vmatprep.mubr.bf16.mxu0 0
        %1194 = vmatmul.mubr.bf16.gmra.mrb[0].mxu0 %v947
        %v1195 = vpop.f32.mrb[0].mxu0
        %v1196 = vpop.f32.mrb[0].mxu0
        %v1197 = vpop.f32.mrb[0].mxu0
        %v1198 = vpop.f32.mrb[0].mxu0
        %1199 = vdwg.mxu0
        %v1206 = vrot.slane %v1172, 1
        %v1207 = vrot.slane %v1175, 1
        %v1208 = vrot.slane %v1180, 1
        %v1209 = vrot.slane %v1183, 1
        %v1210 = vrot.slane %v1188, 1
        %v1211 = vrot.slane %v1191, 1
        %v1218 = vadd.f32 %v1115, %v1206
        %v1219 = vadd.f32 %v1116, %v1207
        %v1220 = vadd.f32 %v1117, %v1208
        %v1221 = vadd.f32 %v1118, %v1209
        %v1222 = vadd.f32 %v1119, %v1210
        %v1223 = vadd.f32 %v1120, %v1211
        %v1224 = vld [vmem:[%s3 + $0x40] sm:$0xf]
        %v1225 = vld [vmem:[%s3 + $0x44] sm:$0xf]
        %v1226 = vld [vmem:[%s3 + $0x48] sm:$0xf]
        %v1227 = vld [vmem:[%s3 + $0x4c] sm:$0xf]
        %s1228 = scalar_lea.vmem [#allocation2], 64
        %v1229 = vld [vmem:[%s1228] sm:$0xff]
        %v1230 = vld [vmem:[%s1228 + $0x8] sm:$0xff]
        %v1231 = vld [vmem:[%s1228 + $0x10] sm:$0xff]
        %v1232 = vld [vmem:[%s1228 + $0x18] sm:$0xff]
        %v1237 = vunpack.c.l.b16 %v1224
        %v1238 = vunpack.c.l.b16 %v1225
        %v1239 = vunpack.c.l.b16 %v1226
        %v1240 = vunpack.c.l.b16 %v1227
        %v1241 = vpack.c.b16 %v1238, %v1237
        %v1242 = vpack.c.b16 %v1240, %v1239
        %v1246 = vsel %vm798, %v1229, 0
        %v1249 = vsel %vm798, %v1230, 0
        %v1252 = vsel %vm798, %v1231, 0
        %v1255 = vsel %vm798, %v1232, 0
        %1257 = vmatprep.subr.bf16.mxu0 0
        %1258 = vmatpush1.bf16.msra.mxu0 %v1241
        %1259 = vmatprep.subr.bf16.mxu0 0
        %1260 = vmatpush1.bf16.msra.mxu0 %v1242
        %1261 = vmatprep.subr.bf16.mxu0 0
        %1262 = vmatpush1.bf16.msra.mxu0 0
        %1263 = vmatprep.subr.bf16.mxu0 0
        %1264 = vmatpush1.bf16.msra.mxu0 0
        %1265 = vmatprep.subr.bf16.mxu0 0
        %1266 = vmatpush1.bf16.msra.mxu0 0
        %1267 = vmatprep.subr.bf16.mxu0 0
        %1268 = vmatpush1.bf16.msra.mxu0 0
        %1269 = vmatprep.subr.bf16.mxu0 0
        %1270 = vmatpush1.bf16.msra.mxu0 0
        %1271 = vmatprep.subr.bf16.mxu0 0
        %1272 = vmatpush1.bf16.msra.mxu0 0
        %1273 = vmatprep.subr.bf16.mxu0 0
        %1274 = vmatpush1.bf16.msra.mxu0 0
        %1275 = vmatprep.subr.bf16.mxu0 0
        %1276 = vmatpush1.bf16.msra.mxu0 0
        %1277 = vmatprep.subr.bf16.mxu0 0
        %1278 = vmatpush1.bf16.msra.mxu0 0
        %1279 = vmatprep.subr.bf16.mxu0 0
        %1280 = vmatpush1.bf16.msra.mxu0 0
        %1281 = vmatprep.subr.bf16.mxu0 0
        %1282 = vmatpush1.bf16.msra.mxu0 0
        %1283 = vmatprep.subr.bf16.mxu0 0
        %1284 = vmatpush1.bf16.msra.mxu0 0
        %1285 = vmatprep.subr.bf16.mxu0 0
        %1286 = vmatpush1.bf16.msra.mxu0 0
        %1287 = vmatprep.subr.bf16.mxu0 0
        %1288 = vmatpush1.bf16.msra.mxu0 0
        %1289 = vmatprep.mubr.bf16.mxu0 0
        %1290 = vmatmul.mubr.bf16.gmra.mrb[0].mxu0 %v1246
        %v1291 = vpop.f32.mrb[0].mxu0
        %v1292 = vadd.f32 0.0, %v1291
        %v1293 = vpop.f32.mrb[0].mxu0
        %v1294 = vpop.f32.mrb[0].mxu0
        %v1295 = vadd.f32 0.0, %v1294
        %v1296 = vpop.f32.mrb[0].mxu0
        %1297 = vmatprep.mubr.bf16.mxu0 0
        %1298 = vmatmul.mubr.bf16.gmra.mrb[0].mxu0 %v1249
        %v1299 = vpop.f32.mrb[0].mxu0
        %v1300 = vadd.f32 0.0, %v1299
        %v1301 = vpop.f32.mrb[0].mxu0
        %v1302 = vpop.f32.mrb[0].mxu0
        %v1303 = vadd.f32 0.0, %v1302
        %v1304 = vpop.f32.mrb[0].mxu0
        %1305 = vmatprep.mubr.bf16.mxu0 0
        %1306 = vmatmul.mubr.bf16.gmra.mrb[0].mxu0 %v1252
        %v1307 = vpop.f32.mrb[0].mxu0
        %v1308 = vadd.f32 0.0, %v1307
        %v1309 = vpop.f32.mrb[0].mxu0
        %v1310 = vpop.f32.mrb[0].mxu0
        %v1311 = vadd.f32 0.0, %v1310
        %v1312 = vpop.f32.mrb[0].mxu0
        %1313 = vmatprep.mubr.bf16.mxu0 0
        %1314 = vmatmul.mubr.bf16.gmra.mrb[0].mxu0 %v1255
        %v1315 = vpop.f32.mrb[0].mxu0
        %v1316 = vpop.f32.mrb[0].mxu0
        %v1317 = vpop.f32.mrb[0].mxu0
        %v1318 = vpop.f32.mrb[0].mxu0
        %1319 = vdwg.mxu0
        %v1320 = vadd.f32 %v1218, %v1292
        %v1321 = vadd.f32 %v1219, %v1295
        %v1322 = vadd.f32 %v1220, %v1300
        %v1323 = vadd.f32 %v1221, %v1303
        %v1324 = vadd.f32 %v1222, %v1308
        %v1325 = vadd.f32 %v1223, %v1311
        %v1326 = vld [vmem:[%s3 + $0x50] sm:$0xf]
        %v1327 = vld [vmem:[%s3 + $0x54] sm:$0xf]
        %v1328 = vld [vmem:[%s3 + $0x58] sm:$0xf]
        %v1329 = vld [vmem:[%s3 + $0x5c] sm:$0xf]
        %s1330 = scalar_lea.vmem [#allocation2], 96
        %v1331 = vld [vmem:[%s1330] sm:$0xff]
        %v1332 = vld [vmem:[%s1330 + $0x8] sm:$0xff]
        %v1333 = vld [vmem:[%s1330 + $0x10] sm:$0xff]
        %v1334 = vld [vmem:[%s1330 + $0x18] sm:$0xff]
        %v1339 = vunpack.c.l.b16 %v1326
        %v1340 = vunpack.c.l.b16 %v1327
        %v1341 = vunpack.c.l.b16 %v1328
        %v1342 = vunpack.c.l.b16 %v1329
        %v1343 = vpack.c.b16 %v1340, %v1339
        %v1344 = vpack.c.b16 %v1342, %v1341
        %v1348 = vsel %vm798, %v1331, 0
        %v1351 = vsel %vm798, %v1332, 0
        %v1354 = vsel %vm798, %v1333, 0
        %v1357 = vsel %vm798, %v1334, 0
        %1359 = vmatprep.subr.bf16.mxu0 0
        %1360 = vmatpush1.bf16.msra.mxu0 %v1343
        %1361 = vmatprep.subr.bf16.mxu0 0
        %1362 = vmatpush1.bf16.msra.mxu0 %v1344
        %1363 = vmatprep.subr.bf16.mxu0 0
        %1364 = vmatpush1.bf16.msra.mxu0 0
        %1365 = vmatprep.subr.bf16.mxu0 0
        %1366 = vmatpush1.bf16.msra.mxu0 0
        %1367 = vmatprep.subr.bf16.mxu0 0
        %1368 = vmatpush1.bf16.msra.mxu0 0
        %1369 = vmatprep.subr.bf16.mxu0 0
        %1370 = vmatpush1.bf16.msra.mxu0 0
        %1371 = vmatprep.subr.bf16.mxu0 0
        %1372 = vmatpush1.bf16.msra.mxu0 0
        %1373 = vmatprep.subr.bf16.mxu0 0
        %1374 = vmatpush1.bf16.msra.mxu0 0
        %1375 = vmatprep.subr.bf16.mxu0 0
        %1376 = vmatpush1.bf16.msra.mxu0 0
        %1377 = vmatprep.subr.bf16.mxu0 0
        %1378 = vmatpush1.bf16.msra.mxu0 0
        %1379 = vmatprep.subr.bf16.mxu0 0
        %1380 = vmatpush1.bf16.msra.mxu0 0
        %1381 = vmatprep.subr.bf16.mxu0 0
        %1382 = vmatpush1.bf16.msra.mxu0 0
        %1383 = vmatprep.subr.bf16.mxu0 0
        %1384 = vmatpush1.bf16.msra.mxu0 0
        %1385 = vmatprep.subr.bf16.mxu0 0
        %1386 = vmatpush1.bf16.msra.mxu0 0
        %1387 = vmatprep.subr.bf16.mxu0 0
        %1388 = vmatpush1.bf16.msra.mxu0 0
        %1389 = vmatprep.subr.bf16.mxu0 0
        %1390 = vmatpush1.bf16.msra.mxu0 0
        %1391 = vmatprep.mubr.bf16.mxu0 0
        %1392 = vmatmul.mubr.bf16.gmra.mrb[0].mxu0 %v1348
        %v1393 = vpop.f32.mrb[0].mxu0
        %v1394 = vadd.f32 0.0, %v1393
        %v1395 = vpop.f32.mrb[0].mxu0
        %v1396 = vpop.f32.mrb[0].mxu0
        %v1397 = vadd.f32 0.0, %v1396
        %v1398 = vpop.f32.mrb[0].mxu0
        %1399 = vmatprep.mubr.bf16.mxu0 0
        %1400 = vmatmul.mubr.bf16.gmra.mrb[0].mxu0 %v1351
        %v1401 = vpop.f32.mrb[0].mxu0
        %v1402 = vadd.f32 0.0, %v1401
        %v1403 = vpop.f32.mrb[0].mxu0
        %v1404 = vpop.f32.mrb[0].mxu0
        %v1405 = vadd.f32 0.0, %v1404
        %v1406 = vpop.f32.mrb[0].mxu0
        %1407 = vmatprep.mubr.bf16.mxu0 0
        %1408 = vmatmul.mubr.bf16.gmra.mrb[0].mxu0 %v1354
        %v1409 = vpop.f32.mrb[0].mxu0
        %v1410 = vadd.f32 0.0, %v1409
        %v1411 = vpop.f32.mrb[0].mxu0
        %v1412 = vpop.f32.mrb[0].mxu0
        %v1413 = vadd.f32 0.0, %v1412
        %v1414 = vpop.f32.mrb[0].mxu0
        %1415 = vmatprep.mubr.bf16.mxu0 0
        %1416 = vmatmul.mubr.bf16.gmra.mrb[0].mxu0 %v1357
        %v1417 = vpop.f32.mrb[0].mxu0
        %v1418 = vpop.f32.mrb[0].mxu0
        %v1419 = vpop.f32.mrb[0].mxu0
        %v1420 = vpop.f32.mrb[0].mxu0
        %1421 = vdwg.mxu0
        %v1422 = vadd.f32 %v1320, %v1394
        %v1423 = vadd.f32 %v1321, %v1397
        %v1424 = vadd.f32 %v1322, %v1402
        %v1425 = vadd.f32 %v1323, %v1405
        %v1426 = vadd.f32 %v1324, %v1410
        %v1427 = vadd.f32 %v1325, %v1413
        %v1428 = vld [vmem:[%s3 + $0x60] sm:$0xf]
        %v1429 = vld [vmem:[%s3 + $0x64] sm:$0xf]
        %v1430 = vld [vmem:[%s3 + $0x68] sm:$0xf]
        %v1431 = vld [vmem:[%s3 + $0x6c] sm:$0xf]
        %v1436 = vunpack.c.l.b16 %v1428
        %v1437 = vunpack.c.l.b16 %v1429
        %v1438 = vunpack.c.l.b16 %v1430
        %v1439 = vunpack.c.l.b16 %v1431
        %v1440 = vpack.c.b16 %v1437, %v1436
        %v1441 = vpack.c.b16 %v1439, %v1438
        %1444 = vmatprep.subr.bf16.mxu0 0
        %1445 = vmatpush1.bf16.msra.mxu0 %v1440
        %1446 = vmatprep.subr.bf16.mxu0 0
        %1447 = vmatpush1.bf16.msra.mxu0 %v1441
        %1448 = vmatprep.subr.bf16.mxu0 0
        %1449 = vmatpush1.bf16.msra.mxu0 0
        %1450 = vmatprep.subr.bf16.mxu0 0
        %1451 = vmatpush1.bf16.msra.mxu0 0
        %1452 = vmatprep.subr.bf16.mxu0 0
        %1453 = vmatpush1.bf16.msra.mxu0 0
        %1454 = vmatprep.subr.bf16.mxu0 0
        %1455 = vmatpush1.bf16.msra.mxu0 0
        %1456 = vmatprep.subr.bf16.mxu0 0
        %1457 = vmatpush1.bf16.msra.mxu0 0
        %1458 = vmatprep.subr.bf16.mxu0 0
        %1459 = vmatpush1.bf16.msra.mxu0 0
        %1460 = vmatprep.subr.bf16.mxu0 0
        %1461 = vmatpush1.bf16.msra.mxu0 0
        %1462 = vmatprep.subr.bf16.mxu0 0
        %1463 = vmatpush1.bf16.msra.mxu0 0
        %1464 = vmatprep.subr.bf16.mxu0 0
        %1465 = vmatpush1.bf16.msra.mxu0 0
        %1466 = vmatprep.subr.bf16.mxu0 0
        %1467 = vmatpush1.bf16.msra.mxu0 0
        %1468 = vmatprep.subr.bf16.mxu0 0
        %1469 = vmatpush1.bf16.msra.mxu0 0
        %1470 = vmatprep.subr.bf16.mxu0 0
        %1471 = vmatpush1.bf16.msra.mxu0 0
        %1472 = vmatprep.subr.bf16.mxu0 0
        %1473 = vmatpush1.bf16.msra.mxu0 0
        %1474 = vmatprep.subr.bf16.mxu0 0
        %1475 = vmatpush1.bf16.msra.mxu0 0
        %1476 = vmatprep.mubr.bf16.mxu0 0
        %1477 = vmatmul.mubr.bf16.gmra.mrb[0].mxu0 %v1246
        %v1478 = vpop.f32.mrb[0].mxu0
        %v1479 = vadd.f32 0.0, %v1478
        %v1480 = vpop.f32.mrb[0].mxu0
        %v1481 = vpop.f32.mrb[0].mxu0
        %v1482 = vadd.f32 0.0, %v1481
        %v1483 = vpop.f32.mrb[0].mxu0
        %1484 = vmatprep.mubr.bf16.mxu0 0
        %1485 = vmatmul.mubr.bf16.gmra.mrb[0].mxu0 %v1249
        %v1486 = vpop.f32.mrb[0].mxu0
        %v1487 = vadd.f32 0.0, %v1486
        %v1488 = vpop.f32.mrb[0].mxu0
        %v1489 = vpop.f32.mrb[0].mxu0
        %v1490 = vadd.f32 0.0, %v1489
        %v1491 = vpop.f32.mrb[0].mxu0
        %1492 = vmatprep.mubr.bf16.mxu0 0
        %1493 = vmatmul.mubr.bf16.gmra.mrb[0].mxu0 %v1252
        %v1494 = vpop.f32.mrb[0].mxu0
        %v1495 = vadd.f32 0.0, %v1494
        %v1496 = vpop.f32.mrb[0].mxu0
        %v1497 = vpop.f32.mrb[0].mxu0
        %v1498 = vadd.f32 0.0, %v1497
        %v1499 = vpop.f32.mrb[0].mxu0
        %1500 = vmatprep.mubr.bf16.mxu0 0
        %1501 = vmatmul.mubr.bf16.gmra.mrb[0].mxu0 %v1255
        %v1502 = vpop.f32.mrb[0].mxu0
        %v1503 = vpop.f32.mrb[0].mxu0
        %v1504 = vpop.f32.mrb[0].mxu0
        %v1505 = vpop.f32.mrb[0].mxu0
        %1506 = vdwg.mxu0
        %v1513 = vrot.slane %v1479, 1
        %v1514 = vrot.slane %v1482, 1
        %v1515 = vrot.slane %v1487, 1
        %v1516 = vrot.slane %v1490, 1
        %v1517 = vrot.slane %v1495, 1
        %v1518 = vrot.slane %v1498, 1
        %v1525 = vadd.f32 %v1422, %v1513
        %v1526 = vadd.f32 %v1423, %v1514
        %v1527 = vadd.f32 %v1424, %v1515
        %v1528 = vadd.f32 %v1425, %v1516
        %v1529 = vadd.f32 %v1426, %v1517
        %v1530 = vadd.f32 %v1427, %v1518
        %v1531 = vld [vmem:[%s3 + $0x70] sm:$0xf]
        %v1532 = vld [vmem:[%s3 + $0x74] sm:$0xf]
        %v1533 = vld [vmem:[%s3 + $0x78] sm:$0xf]
        %v1534 = vld [vmem:[%s3 + $0x7c] sm:$0xf]
        %v1539 = vunpack.c.l.b16 %v1531
        %v1540 = vunpack.c.l.b16 %v1532
        %v1541 = vunpack.c.l.b16 %v1533
        %v1542 = vunpack.c.l.b16 %v1534
        %v1543 = vpack.c.b16 %v1540, %v1539
        %v1544 = vpack.c.b16 %v1542, %v1541
        %1547 = vmatprep.subr.bf16.mxu0 0
        %1548 = vmatpush1.bf16.msra.mxu0 %v1543
        %1549 = vmatprep.subr.bf16.mxu0 0
        %1550 = vmatpush1.bf16.msra.mxu0 %v1544
        %1551 = vmatprep.subr.bf16.mxu0 0
        %1552 = vmatpush1.bf16.msra.mxu0 0
        %1553 = vmatprep.subr.bf16.mxu0 0
        %1554 = vmatpush1.bf16.msra.mxu0 0
        %1555 = vmatprep.subr.bf16.mxu0 0
        %1556 = vmatpush1.bf16.msra.mxu0 0
        %1557 = vmatprep.subr.bf16.mxu0 0
        %1558 = vmatpush1.bf16.msra.mxu0 0
        %1559 = vmatprep.subr.bf16.mxu0 0
        %1560 = vmatpush1.bf16.msra.mxu0 0
        %1561 = vmatprep.subr.bf16.mxu0 0
        %1562 = vmatpush1.bf16.msra.mxu0 0
        %1563 = vmatprep.subr.bf16.mxu0 0
        %1564 = vmatpush1.bf16.msra.mxu0 0
        %1565 = vmatprep.subr.bf16.mxu0 0
        %1566 = vmatpush1.bf16.msra.mxu0 0
        %1567 = vmatprep.subr.bf16.mxu0 0
        %1568 = vmatpush1.bf16.msra.mxu0 0
        %1569 = vmatprep.subr.bf16.mxu0 0
        %1570 = vmatpush1.bf16.msra.mxu0 0
        %1571 = vmatprep.subr.bf16.mxu0 0
        %1572 = vmatpush1.bf16.msra.mxu0 0
        %1573 = vmatprep.subr.bf16.mxu0 0
        %1574 = vmatpush1.bf16.msra.mxu0 0
        %1575 = vmatprep.subr.bf16.mxu0 0
        %1576 = vmatpush1.bf16.msra.mxu0 0
        %1577 = vmatprep.subr.bf16.mxu0 0
        %1578 = vmatpush1.bf16.msra.mxu0 0
        %1579 = vmatprep.mubr.bf16.mxu0 0
        %1580 = vmatmul.mubr.bf16.gmra.mrb[0].mxu0 %v1348
        %v1581 = vpop.f32.mrb[0].mxu0
        %v1582 = vadd.f32 0.0, %v1581
        %v1583 = vpop.f32.mrb[0].mxu0
        %v1584 = vpop.f32.mrb[0].mxu0
        %v1585 = vadd.f32 0.0, %v1584
        %v1586 = vpop.f32.mrb[0].mxu0
        %1587 = vmatprep.mubr.bf16.mxu0 0
        %1588 = vmatmul.mubr.bf16.gmra.mrb[0].mxu0 %v1351
        %v1589 = vpop.f32.mrb[0].mxu0
        %v1590 = vadd.f32 0.0, %v1589
        %v1591 = vpop.f32.mrb[0].mxu0
        %v1592 = vpop.f32.mrb[0].mxu0
        %v1593 = vadd.f32 0.0, %v1592
        %v1594 = vpop.f32.mrb[0].mxu0
        %1595 = vmatprep.mubr.bf16.mxu0 0
        %1596 = vmatmul.mubr.bf16.gmra.mrb[0].mxu0 %v1354
        %v1597 = vpop.f32.mrb[0].mxu0
        %v1598 = vadd.f32 0.0, %v1597
        %v1599 = vpop.f32.mrb[0].mxu0
        %v1600 = vpop.f32.mrb[0].mxu0
        %v1601 = vadd.f32 0.0, %v1600
        %v1602 = vpop.f32.mrb[0].mxu0
        %1603 = vmatprep.mubr.bf16.mxu0 0
        %1604 = vmatmul.mubr.bf16.gmra.mrb[0].mxu0 %v1357
        %v1605 = vpop.f32.mrb[0].mxu0
        %v1606 = vpop.f32.mrb[0].mxu0
        %v1607 = vpop.f32.mrb[0].mxu0
        %v1608 = vpop.f32.mrb[0].mxu0
        %1609 = vdwg.mxu0
        %v1616 = vrot.slane %v1582, 1
        %v1617 = vrot.slane %v1585, 1
        %v1618 = vrot.slane %v1590, 1
        %v1619 = vrot.slane %v1593, 1
        %v1620 = vrot.slane %v1598, 1
        %v1621 = vrot.slane %v1601, 1
        %v1628 = vadd.f32 %v1525, %v1616
        %v1629 = vadd.f32 %v1526, %v1617
        %v1630 = vadd.f32 %v1527, %v1618
        %v1631 = vadd.f32 %v1528, %v1619
        %v1632 = vadd.f32 %v1529, %v1620
        %v1633 = vadd.f32 %v1530, %v1621
        %v1634 = vld [vmem:[%s3 + $0x80] sm:$0xf]
        %v1635 = vld [vmem:[%s3 + $0x84] sm:$0xf]
        %v1636 = vld [vmem:[%s3 + $0x88] sm:$0xf]
        %v1637 = vld [vmem:[%s3 + $0x8c] sm:$0xf]
        %v1642 = vunpack.c.l.b16 %v1634
        %v1643 = vunpack.c.l.b16 %v1635
        %v1644 = vunpack.c.l.b16 %v1636
        %v1645 = vunpack.c.l.b16 %v1637
        %v1646 = vpack.c.b16 %v1643, %v1642
        %v1647 = vpack.c.b16 %v1645, %v1644
        %1650 = vmatprep.subr.bf16.mxu0 0
        %1651 = vmatpush1.bf16.msra.mxu0 %v1646
        %1652 = vmatprep.subr.bf16.mxu0 0
        %1653 = vmatpush1.bf16.msra.mxu0 %v1647
        %1654 = vmatprep.subr.bf16.mxu0 0
        %1655 = vmatpush1.bf16.msra.mxu0 0
        %1656 = vmatprep.subr.bf16.mxu0 0
        %1657 = vmatpush1.bf16.msra.mxu0 0
        %1658 = vmatprep.subr.bf16.mxu0 0
        %1659 = vmatpush1.bf16.msra.mxu0 0
        %1660 = vmatprep.subr.bf16.mxu0 0
        %1661 = vmatpush1.bf16.msra.mxu0 0
        %1662 = vmatprep.subr.bf16.mxu0 0
        %1663 = vmatpush1.bf16.msra.mxu0 0
        %1664 = vmatprep.subr.bf16.mxu0 0
        %1665 = vmatpush1.bf16.msra.mxu0 0
        %1666 = vmatprep.subr.bf16.mxu0 0
        %1667 = vmatpush1.bf16.msra.mxu0 0
        %1668 = vmatprep.subr.bf16.mxu0 0
        %1669 = vmatpush1.bf16.msra.mxu0 0
        %1670 = vmatprep.subr.bf16.mxu0 0
        %1671 = vmatpush1.bf16.msra.mxu0 0
        %1672 = vmatprep.subr.bf16.mxu0 0
        %1673 = vmatpush1.bf16.msra.mxu0 0
        %1674 = vmatprep.subr.bf16.mxu0 0
        %1675 = vmatpush1.bf16.msra.mxu0 0
        %1676 = vmatprep.subr.bf16.mxu0 0
        %1677 = vmatpush1.bf16.msra.mxu0 0
        %1678 = vmatprep.subr.bf16.mxu0 0
        %1679 = vmatpush1.bf16.msra.mxu0 0
        %1680 = vmatprep.subr.bf16.mxu0 0
        %1681 = vmatpush1.bf16.msra.mxu0 0
        %1682 = vmatprep.mubr.bf16.mxu0 0
        %1683 = vmatmul.mubr.bf16.gmra.mrb[0].mxu0 %v836
        %v1684 = vpop.f32.mrb[0].mxu0
        %v1685 = vpop.f32.mrb[0].mxu0
        %v1686 = vpop.f32.mrb[0].mxu0
        %v1687 = vadd.f32 0.0, %v1686
        %v1688 = vpop.f32.mrb[0].mxu0
        %1689 = vmatprep.mubr.bf16.mxu0 0
        %1690 = vmatmul.mubr.bf16.gmra.mrb[0].mxu0 %v839
        %v1691 = vpop.f32.mrb[0].mxu0
        %v1692 = vadd.f32 0.0, %v1691
        %v1693 = vpop.f32.mrb[0].mxu0
        %v1694 = vpop.f32.mrb[0].mxu0
        %v1695 = vadd.f32 0.0, %v1694
        %v1696 = vpop.f32.mrb[0].mxu0
        %1697 = vmatprep.mubr.bf16.mxu0 0
        %1698 = vmatmul.mubr.bf16.gmra.mrb[0].mxu0 %v842
        %v1699 = vpop.f32.mrb[0].mxu0
        %v1700 = vadd.f32 0.0, %v1699
        %v1701 = vpop.f32.mrb[0].mxu0
        %v1702 = vpop.f32.mrb[0].mxu0
        %v1703 = vadd.f32 0.0, %v1702
        %v1704 = vpop.f32.mrb[0].mxu0
        %1705 = vmatprep.mubr.bf16.mxu0 0
        %1706 = vmatmul.mubr.bf16.gmra.mrb[0].mxu0 %v845
        %v1707 = vpop.f32.mrb[0].mxu0
        %v1708 = vadd.f32 0.0, %v1707
        %v1709 = vpop.f32.mrb[0].mxu0
        %v1710 = vpop.f32.mrb[0].mxu0
        %v1711 = vpop.f32.mrb[0].mxu0
        %1712 = vdwg.mxu0
        %v1713 = vadd.f32 %v1628, %v1687
        %v1714 = vadd.f32 %v1629, %v1692
        %v1715 = vadd.f32 %v1630, %v1695
        %v1716 = vadd.f32 %v1631, %v1700
        %v1717 = vadd.f32 %v1632, %v1703
        %v1718 = vadd.f32 %v1633, %v1708
        %v1719 = vld [vmem:[%s3 + $0x90] sm:$0xf]
        %v1720 = vld [vmem:[%s3 + $0x94] sm:$0xf]
        %v1721 = vld [vmem:[%s3 + $0x98] sm:$0xf]
        %v1722 = vld [vmem:[%s3 + $0x9c] sm:$0xf]
        %v1727 = vunpack.c.l.b16 %v1719
        %v1728 = vunpack.c.l.b16 %v1720
        %v1729 = vunpack.c.l.b16 %v1721
        %v1730 = vunpack.c.l.b16 %v1722
        %v1731 = vpack.c.b16 %v1728, %v1727
        %v1732 = vpack.c.b16 %v1730, %v1729
        %1735 = vmatprep.subr.bf16.mxu0 0
        %1736 = vmatpush1.bf16.msra.mxu0 %v1731
        %1737 = vmatprep.subr.bf16.mxu0 0
        %1738 = vmatpush1.bf16.msra.mxu0 %v1732
        %1739 = vmatprep.subr.bf16.mxu0 0
        %1740 = vmatpush1.bf16.msra.mxu0 0
        %1741 = vmatprep.subr.bf16.mxu0 0
        %1742 = vmatpush1.bf16.msra.mxu0 0
        %1743 = vmatprep.subr.bf16.mxu0 0
        %1744 = vmatpush1.bf16.msra.mxu0 0
        %1745 = vmatprep.subr.bf16.mxu0 0
        %1746 = vmatpush1.bf16.msra.mxu0 0
        %1747 = vmatprep.subr.bf16.mxu0 0
        %1748 = vmatpush1.bf16.msra.mxu0 0
        %1749 = vmatprep.subr.bf16.mxu0 0
        %1750 = vmatpush1.bf16.msra.mxu0 0
        %1751 = vmatprep.subr.bf16.mxu0 0
        %1752 = vmatpush1.bf16.msra.mxu0 0
        %1753 = vmatprep.subr.bf16.mxu0 0
        %1754 = vmatpush1.bf16.msra.mxu0 0
        %1755 = vmatprep.subr.bf16.mxu0 0
        %1756 = vmatpush1.bf16.msra.mxu0 0
        %1757 = vmatprep.subr.bf16.mxu0 0
        %1758 = vmatpush1.bf16.msra.mxu0 0
        %1759 = vmatprep.subr.bf16.mxu0 0
        %1760 = vmatpush1.bf16.msra.mxu0 0
        %1761 = vmatprep.subr.bf16.mxu0 0
        %1762 = vmatpush1.bf16.msra.mxu0 0
        %1763 = vmatprep.subr.bf16.mxu0 0
        %1764 = vmatpush1.bf16.msra.mxu0 0
        %1765 = vmatprep.subr.bf16.mxu0 0
        %1766 = vmatpush1.bf16.msra.mxu0 0
        %1767 = vmatprep.mubr.bf16.mxu0 0
        %1768 = vmatmul.mubr.bf16.gmra.mrb[0].mxu0 %v938
        %v1769 = vpop.f32.mrb[0].mxu0
        %v1770 = vpop.f32.mrb[0].mxu0
        %v1771 = vpop.f32.mrb[0].mxu0
        %v1772 = vadd.f32 0.0, %v1771
        %v1773 = vpop.f32.mrb[0].mxu0
        %1774 = vmatprep.mubr.bf16.mxu0 0
        %1775 = vmatmul.mubr.bf16.gmra.mrb[0].mxu0 %v941
        %v1776 = vpop.f32.mrb[0].mxu0
        %v1777 = vadd.f32 0.0, %v1776
        %v1778 = vpop.f32.mrb[0].mxu0
        %v1779 = vpop.f32.mrb[0].mxu0
        %v1780 = vadd.f32 0.0, %v1779
        %v1781 = vpop.f32.mrb[0].mxu0
        %1782 = vmatprep.mubr.bf16.mxu0 0
        %1783 = vmatmul.mubr.bf16.gmra.mrb[0].mxu0 %v944
        %v1784 = vpop.f32.mrb[0].mxu0
        %v1785 = vadd.f32 0.0, %v1784
        %v1786 = vpop.f32.mrb[0].mxu0
        %v1787 = vpop.f32.mrb[0].mxu0
        %v1788 = vadd.f32 0.0, %v1787
        %v1789 = vpop.f32.mrb[0].mxu0
        %1790 = vmatprep.mubr.bf16.mxu0 0
        %1791 = vmatmul.mubr.bf16.gmra.mrb[0].mxu0 %v947
        %v1792 = vpop.f32.mrb[0].mxu0
        %v1793 = vadd.f32 0.0, %v1792
        %v1794 = vpop.f32.mrb[0].mxu0
        %v1795 = vpop.f32.mrb[0].mxu0
        %v1796 = vpop.f32.mrb[0].mxu0
        %1797 = vdwg.mxu0
        %v1798 = vadd.f32 %v1713, %v1772
        %v1799 = vadd.f32 %v1714, %v1777
        %v1800 = vadd.f32 %v1715, %v1780
        %v1801 = vadd.f32 %v1716, %v1785
        %v1802 = vadd.f32 %v1717, %v1788
        %v1803 = vadd.f32 %v1718, %v1793
        %v1804 = vld [vmem:[%s3 + $0xa0] sm:$0xf]
        %v1805 = vld [vmem:[%s3 + $0xa4] sm:$0xf]
        %v1806 = vld [vmem:[%s3 + $0xa8] sm:$0xf]
        %v1807 = vld [vmem:[%s3 + $0xac] sm:$0xf]
        %v1812 = vunpack.c.l.b16 %v1804
        %v1813 = vunpack.c.l.b16 %v1805
        %v1814 = vunpack.c.l.b16 %v1806
        %v1815 = vunpack.c.l.b16 %v1807
        %v1816 = vpack.c.b16 %v1813, %v1812
        %v1817 = vpack.c.b16 %v1815, %v1814
        %1820 = vmatprep.subr.bf16.mxu0 0
        %1821 = vmatpush1.bf16.msra.mxu0 %v1816
        %1822 = vmatprep.subr.bf16.mxu0 0
        %1823 = vmatpush1.bf16.msra.mxu0 %v1817
        %1824 = vmatprep.subr.bf16.mxu0 0
        %1825 = vmatpush1.bf16.msra.mxu0 0
        %1826 = vmatprep.subr.bf16.mxu0 0
        %1827 = vmatpush1.bf16.msra.mxu0 0
        %1828 = vmatprep.subr.bf16.mxu0 0
        %1829 = vmatpush1.bf16.msra.mxu0 0
        %1830 = vmatprep.subr.bf16.mxu0 0
        %1831 = vmatpush1.bf16.msra.mxu0 0
        %1832 = vmatprep.subr.bf16.mxu0 0
        %1833 = vmatpush1.bf16.msra.mxu0 0
        %1834 = vmatprep.subr.bf16.mxu0 0
        %1835 = vmatpush1.bf16.msra.mxu0 0
        %1836 = vmatprep.subr.bf16.mxu0 0
        %1837 = vmatpush1.bf16.msra.mxu0 0
        %1838 = vmatprep.subr.bf16.mxu0 0
        %1839 = vmatpush1.bf16.msra.mxu0 0
        %1840 = vmatprep.subr.bf16.mxu0 0
        %1841 = vmatpush1.bf16.msra.mxu0 0
        %1842 = vmatprep.subr.bf16.mxu0 0
        %1843 = vmatpush1.bf16.msra.mxu0 0
        %1844 = vmatprep.subr.bf16.mxu0 0
        %1845 = vmatpush1.bf16.msra.mxu0 0
        %1846 = vmatprep.subr.bf16.mxu0 0
        %1847 = vmatpush1.bf16.msra.mxu0 0
        %1848 = vmatprep.subr.bf16.mxu0 0
        %1849 = vmatpush1.bf16.msra.mxu0 0
        %1850 = vmatprep.subr.bf16.mxu0 0
        %1851 = vmatpush1.bf16.msra.mxu0 0
        %1852 = vmatprep.mubr.bf16.mxu0 0
        %1853 = vmatmul.mubr.bf16.gmra.mrb[0].mxu0 %v836
        %v1854 = vpop.f32.mrb[0].mxu0
        %v1855 = vpop.f32.mrb[0].mxu0
        %v1856 = vpop.f32.mrb[0].mxu0
        %v1857 = vadd.f32 0.0, %v1856
        %v1858 = vpop.f32.mrb[0].mxu0
        %1859 = vmatprep.mubr.bf16.mxu0 0
        %1860 = vmatmul.mubr.bf16.gmra.mrb[0].mxu0 %v839
        %v1861 = vpop.f32.mrb[0].mxu0
        %v1862 = vadd.f32 0.0, %v1861
        %v1863 = vpop.f32.mrb[0].mxu0
        %v1864 = vpop.f32.mrb[0].mxu0
        %v1865 = vadd.f32 0.0, %v1864
        %v1866 = vpop.f32.mrb[0].mxu0
        %1867 = vmatprep.mubr.bf16.mxu0 0
        %1868 = vmatmul.mubr.bf16.gmra.mrb[0].mxu0 %v842
        %v1869 = vpop.f32.mrb[0].mxu0
        %v1870 = vadd.f32 0.0, %v1869
        %v1871 = vpop.f32.mrb[0].mxu0
        %v1872 = vpop.f32.mrb[0].mxu0
        %v1873 = vadd.f32 0.0, %v1872
        %v1874 = vpop.f32.mrb[0].mxu0
        %1875 = vmatprep.mubr.bf16.mxu0 0
        %1876 = vmatmul.mubr.bf16.gmra.mrb[0].mxu0 %v845
        %v1877 = vpop.f32.mrb[0].mxu0
        %v1878 = vadd.f32 0.0, %v1877
        %v1879 = vpop.f32.mrb[0].mxu0
        %v1880 = vpop.f32.mrb[0].mxu0
        %v1881 = vpop.f32.mrb[0].mxu0
        %1882 = vdwg.mxu0
        %v1889 = vrot.slane %v1857, 1
        %v1890 = vrot.slane %v1862, 1
        %v1891 = vrot.slane %v1865, 1
        %v1892 = vrot.slane %v1870, 1
        %v1893 = vrot.slane %v1873, 1
        %v1894 = vrot.slane %v1878, 1
        %v1901 = vadd.f32 %v1798, %v1889
        %v1902 = vadd.f32 %v1799, %v1890
        %v1903 = vadd.f32 %v1800, %v1891
        %v1904 = vadd.f32 %v1801, %v1892
        %v1905 = vadd.f32 %v1802, %v1893
        %v1906 = vadd.f32 %v1803, %v1894
        %v1907 = vld [vmem:[%s3 + $0xb0] sm:$0xf]
        %v1908 = vld [vmem:[%s3 + $0xb4] sm:$0xf]
        %v1909 = vld [vmem:[%s3 + $0xb8] sm:$0xf]
        %v1910 = vld [vmem:[%s3 + $0xbc] sm:$0xf]
        %v1915 = vunpack.c.l.b16 %v1907
        %v1916 = vunpack.c.l.b16 %v1908
        %v1917 = vunpack.c.l.b16 %v1909
        %v1918 = vunpack.c.l.b16 %v1910
        %v1919 = vpack.c.b16 %v1916, %v1915
        %v1920 = vpack.c.b16 %v1918, %v1917
        %1923 = vmatprep.subr.bf16.mxu0 0
        %1924 = vmatpush1.bf16.msra.mxu0 %v1919
        %1925 = vmatprep.subr.bf16.mxu0 0
        %1926 = vmatpush1.bf16.msra.mxu0 %v1920
        %1927 = vmatprep.subr.bf16.mxu0 0
        %1928 = vmatpush1.bf16.msra.mxu0 0
        %1929 = vmatprep.subr.bf16.mxu0 0
        %1930 = vmatpush1.bf16.msra.mxu0 0
        %1931 = vmatprep.subr.bf16.mxu0 0
        %1932 = vmatpush1.bf16.msra.mxu0 0
        %1933 = vmatprep.subr.bf16.mxu0 0
        %1934 = vmatpush1.bf16.msra.mxu0 0
        %1935 = vmatprep.subr.bf16.mxu0 0
        %1936 = vmatpush1.bf16.msra.mxu0 0
        %1937 = vmatprep.subr.bf16.mxu0 0
        %1938 = vmatpush1.bf16.msra.mxu0 0
        %1939 = vmatprep.subr.bf16.mxu0 0
        %1940 = vmatpush1.bf16.msra.mxu0 0
        %1941 = vmatprep.subr.bf16.mxu0 0
        %1942 = vmatpush1.bf16.msra.mxu0 0
        %1943 = vmatprep.subr.bf16.mxu0 0
        %1944 = vmatpush1.bf16.msra.mxu0 0
        %1945 = vmatprep.subr.bf16.mxu0 0
        %1946 = vmatpush1.bf16.msra.mxu0 0
        %1947 = vmatprep.subr.bf16.mxu0 0
        %1948 = vmatpush1.bf16.msra.mxu0 0
        %1949 = vmatprep.subr.bf16.mxu0 0
        %1950 = vmatpush1.bf16.msra.mxu0 0
        %1951 = vmatprep.subr.bf16.mxu0 0
        %1952 = vmatpush1.bf16.msra.mxu0 0
        %1953 = vmatprep.subr.bf16.mxu0 0
        %1954 = vmatpush1.bf16.msra.mxu0 0
        %1955 = vmatprep.mubr.bf16.mxu0 0
        %1956 = vmatmul.mubr.bf16.gmra.mrb[0].mxu0 %v938
        %v1957 = vpop.f32.mrb[0].mxu0
        %v1958 = vpop.f32.mrb[0].mxu0
        %v1959 = vpop.f32.mrb[0].mxu0
        %v1960 = vadd.f32 0.0, %v1959
        %v1961 = vpop.f32.mrb[0].mxu0
        %1962 = vmatprep.mubr.bf16.mxu0 0
        %1963 = vmatmul.mubr.bf16.gmra.mrb[0].mxu0 %v941
        %v1964 = vpop.f32.mrb[0].mxu0
        %v1965 = vadd.f32 0.0, %v1964
        %v1966 = vpop.f32.mrb[0].mxu0
        %v1967 = vpop.f32.mrb[0].mxu0
        %v1968 = vadd.f32 0.0, %v1967
        %v1969 = vpop.f32.mrb[0].mxu0
        %1970 = vmatprep.mubr.bf16.mxu0 0
        %1971 = vmatmul.mubr.bf16.gmra.mrb[0].mxu0 %v944
        %v1972 = vpop.f32.mrb[0].mxu0
        %v1973 = vadd.f32 0.0, %v1972
        %v1974 = vpop.f32.mrb[0].mxu0
        %v1975 = vpop.f32.mrb[0].mxu0
        %v1976 = vadd.f32 0.0, %v1975
        %v1977 = vpop.f32.mrb[0].mxu0
        %1978 = vmatprep.mubr.bf16.mxu0 0
        %1979 = vmatmul.mubr.bf16.gmra.mrb[0].mxu0 %v947
        %v1980 = vpop.f32.mrb[0].mxu0
        %v1981 = vadd.f32 0.0, %v1980
        %v1982 = vpop.f32.mrb[0].mxu0
        %v1983 = vpop.f32.mrb[0].mxu0
        %v1984 = vpop.f32.mrb[0].mxu0
        %1985 = vdwg.mxu0
        %v1992 = vrot.slane %v1960, 1
        %v1993 = vrot.slane %v1965, 1
        %v1994 = vrot.slane %v1968, 1
        %v1995 = vrot.slane %v1973, 1
        %v1996 = vrot.slane %v1976, 1
        %v1997 = vrot.slane %v1981, 1
        %v2004 = vadd.f32 %v1901, %v1992
        %v2005 = vadd.f32 %v1902, %v1993
        %v2006 = vadd.f32 %v1903, %v1994
        %v2007 = vadd.f32 %v1904, %v1995
        %v2008 = vadd.f32 %v1905, %v1996
        %v2009 = vadd.f32 %v1906, %v1997
        %v2010 = vld [vmem:[%s3 + $0xc0] sm:$0xf]
        %v2011 = vld [vmem:[%s3 + $0xc4] sm:$0xf]
        %v2012 = vld [vmem:[%s3 + $0xc8] sm:$0xf]
        %v2013 = vld [vmem:[%s3 + $0xcc] sm:$0xf]
        %v2018 = vunpack.c.l.b16 %v2010
        %v2019 = vunpack.c.l.b16 %v2011
        %v2020 = vunpack.c.l.b16 %v2012
        %v2021 = vunpack.c.l.b16 %v2013
        %v2022 = vpack.c.b16 %v2019, %v2018
        %v2023 = vpack.c.b16 %v2021, %v2020
        %2026 = vmatprep.subr.bf16.mxu0 0
        %2027 = vmatpush1.bf16.msra.mxu0 %v2022
        %2028 = vmatprep.subr.bf16.mxu0 0
        %2029 = vmatpush1.bf16.msra.mxu0 %v2023
        %2030 = vmatprep.subr.bf16.mxu0 0
        %2031 = vmatpush1.bf16.msra.mxu0 0
        %2032 = vmatprep.subr.bf16.mxu0 0
        %2033 = vmatpush1.bf16.msra.mxu0 0
        %2034 = vmatprep.subr.bf16.mxu0 0
        %2035 = vmatpush1.bf16.msra.mxu0 0
        %2036 = vmatprep.subr.bf16.mxu0 0
        %2037 = vmatpush1.bf16.msra.mxu0 0
        %2038 = vmatprep.subr.bf16.mxu0 0
        %2039 = vmatpush1.bf16.msra.mxu0 0
        %2040 = vmatprep.subr.bf16.mxu0 0
        %2041 = vmatpush1.bf16.msra.mxu0 0
        %2042 = vmatprep.subr.bf16.mxu0 0
        %2043 = vmatpush1.bf16.msra.mxu0 0
        %2044 = vmatprep.subr.bf16.mxu0 0
        %2045 = vmatpush1.bf16.msra.mxu0 0
        %2046 = vmatprep.subr.bf16.mxu0 0
        %2047 = vmatpush1.bf16.msra.mxu0 0
        %2048 = vmatprep.subr.bf16.mxu0 0
        %2049 = vmatpush1.bf16.msra.mxu0 0
        %2050 = vmatprep.subr.bf16.mxu0 0
        %2051 = vmatpush1.bf16.msra.mxu0 0
        %2052 = vmatprep.subr.bf16.mxu0 0
        %2053 = vmatpush1.bf16.msra.mxu0 0
        %2054 = vmatprep.subr.bf16.mxu0 0
        %2055 = vmatpush1.bf16.msra.mxu0 0
        %2056 = vmatprep.subr.bf16.mxu0 0
        %2057 = vmatpush1.bf16.msra.mxu0 0
        %2058 = vmatprep.mubr.bf16.mxu0 0
        %2059 = vmatmul.mubr.bf16.gmra.mrb[0].mxu0 %v1246
        %v2060 = vpop.f32.mrb[0].mxu0
        %v2061 = vpop.f32.mrb[0].mxu0
        %v2062 = vpop.f32.mrb[0].mxu0
        %v2063 = vadd.f32 0.0, %v2062
        %v2064 = vpop.f32.mrb[0].mxu0
        %2065 = vmatprep.mubr.bf16.mxu0 0
        %2066 = vmatmul.mubr.bf16.gmra.mrb[0].mxu0 %v1249
        %v2067 = vpop.f32.mrb[0].mxu0
        %v2068 = vadd.f32 0.0, %v2067
        %v2069 = vpop.f32.mrb[0].mxu0
        %v2070 = vpop.f32.mrb[0].mxu0
        %v2071 = vadd.f32 0.0, %v2070
        %v2072 = vpop.f32.mrb[0].mxu0
        %2073 = vmatprep.mubr.bf16.mxu0 0
        %2074 = vmatmul.mubr.bf16.gmra.mrb[0].mxu0 %v1252
        %v2075 = vpop.f32.mrb[0].mxu0
        %v2076 = vadd.f32 0.0, %v2075
        %v2077 = vpop.f32.mrb[0].mxu0
        %v2078 = vpop.f32.mrb[0].mxu0
        %v2079 = vadd.f32 0.0, %v2078
        %v2080 = vpop.f32.mrb[0].mxu0
        %2081 = vmatprep.mubr.bf16.mxu0 0
        %2082 = vmatmul.mubr.bf16.gmra.mrb[0].mxu0 %v1255
        %v2083 = vpop.f32.mrb[0].mxu0
        %v2084 = vadd.f32 0.0, %v2083
        %v2085 = vpop.f32.mrb[0].mxu0
        %v2086 = vpop.f32.mrb[0].mxu0
        %v2087 = vpop.f32.mrb[0].mxu0
        %2088 = vdwg.mxu0
        %v2089 = vadd.f32 %v2004, %v2063
        %v2090 = vadd.f32 %v2005, %v2068
        %v2091 = vadd.f32 %v2006, %v2071
        %v2092 = vadd.f32 %v2007, %v2076
        %v2093 = vadd.f32 %v2008, %v2079
        %v2094 = vadd.f32 %v2009, %v2084
        %v2095 = vld [vmem:[%s3 + $0xd0] sm:$0xf]
        %v2096 = vld [vmem:[%s3 + $0xd4] sm:$0xf]
        %v2097 = vld [vmem:[%s3 + $0xd8] sm:$0xf]
        %v2098 = vld [vmem:[%s3 + $0xdc] sm:$0xf]
        %v2103 = vunpack.c.l.b16 %v2095
        %v2104 = vunpack.c.l.b16 %v2096
        %v2105 = vunpack.c.l.b16 %v2097
        %v2106 = vunpack.c.l.b16 %v2098
        %v2107 = vpack.c.b16 %v2104, %v2103
        %v2108 = vpack.c.b16 %v2106, %v2105
        %2111 = vmatprep.subr.bf16.mxu0 0
        %2112 = vmatpush1.bf16.msra.mxu0 %v2107
        %2113 = vmatprep.subr.bf16.mxu0 0
        %2114 = vmatpush1.bf16.msra.mxu0 %v2108
        %2115 = vmatprep.subr.bf16.mxu0 0
        %2116 = vmatpush1.bf16.msra.mxu0 0
        %2117 = vmatprep.subr.bf16.mxu0 0
        %2118 = vmatpush1.bf16.msra.mxu0 0
        %2119 = vmatprep.subr.bf16.mxu0 0
        %2120 = vmatpush1.bf16.msra.mxu0 0
        %2121 = vmatprep.subr.bf16.mxu0 0
        %2122 = vmatpush1.bf16.msra.mxu0 0
        %2123 = vmatprep.subr.bf16.mxu0 0
        %2124 = vmatpush1.bf16.msra.mxu0 0
        %2125 = vmatprep.subr.bf16.mxu0 0
        %2126 = vmatpush1.bf16.msra.mxu0 0
        %2127 = vmatprep.subr.bf16.mxu0 0
        %2128 = vmatpush1.bf16.msra.mxu0 0
        %2129 = vmatprep.subr.bf16.mxu0 0
        %2130 = vmatpush1.bf16.msra.mxu0 0
        %2131 = vmatprep.subr.bf16.mxu0 0
        %2132 = vmatpush1.bf16.msra.mxu0 0
        %2133 = vmatprep.subr.bf16.mxu0 0
        %2134 = vmatpush1.bf16.msra.mxu0 0
        %2135 = vmatprep.subr.bf16.mxu0 0
        %2136 = vmatpush1.bf16.msra.mxu0 0
        %2137 = vmatprep.subr.bf16.mxu0 0
        %2138 = vmatpush1.bf16.msra.mxu0 0
        %2139 = vmatprep.subr.bf16.mxu0 0
        %2140 = vmatpush1.bf16.msra.mxu0 0
        %2141 = vmatprep.subr.bf16.mxu0 0
        %2142 = vmatpush1.bf16.msra.mxu0 0
        %2143 = vmatprep.mubr.bf16.mxu0 0
        %2144 = vmatmul.mubr.bf16.gmra.mrb[0].mxu0 %v1348
        %v2145 = vpop.f32.mrb[0].mxu0
        %v2146 = vpop.f32.mrb[0].mxu0
        %v2147 = vpop.f32.mrb[0].mxu0
        %v2148 = vadd.f32 0.0, %v2147
        %v2149 = vpop.f32.mrb[0].mxu0
        %2150 = vmatprep.mubr.bf16.mxu0 0
        %2151 = vmatmul.mubr.bf16.gmra.mrb[0].mxu0 %v1351
        %v2152 = vpop.f32.mrb[0].mxu0
        %v2153 = vadd.f32 0.0, %v2152
        %v2154 = vpop.f32.mrb[0].mxu0
        %v2155 = vpop.f32.mrb[0].mxu0
        %v2156 = vadd.f32 0.0, %v2155
        %v2157 = vpop.f32.mrb[0].mxu0
        %2158 = vmatprep.mubr.bf16.mxu0 0
        %2159 = vmatmul.mubr.bf16.gmra.mrb[0].mxu0 %v1354
        %v2160 = vpop.f32.mrb[0].mxu0
        %v2161 = vadd.f32 0.0, %v2160
        %v2162 = vpop.f32.mrb[0].mxu0
        %v2163 = vpop.f32.mrb[0].mxu0
        %v2164 = vadd.f32 0.0, %v2163
        %v2165 = vpop.f32.mrb[0].mxu0
        %2166 = vmatprep.mubr.bf16.mxu0 0
        %2167 = vmatmul.mubr.bf16.gmra.mrb[0].mxu0 %v1357
        %v2168 = vpop.f32.mrb[0].mxu0
        %v2169 = vadd.f32 0.0, %v2168
        %v2170 = vpop.f32.mrb[0].mxu0
        %v2171 = vpop.f32.mrb[0].mxu0
        %v2172 = vpop.f32.mrb[0].mxu0
        %2173 = vdwg.mxu0
        %v2174 = vadd.f32 %v2089, %v2148
        %v2175 = vadd.f32 %v2090, %v2153
        %v2176 = vadd.f32 %v2091, %v2156
        %v2177 = vadd.f32 %v2092, %v2161
        %v2178 = vadd.f32 %v2093, %v2164
        %v2179 = vadd.f32 %v2094, %v2169
        %v2180 = vld [vmem:[%s3 + $0xe0] sm:$0xf]
        %v2181 = vld [vmem:[%s3 + $0xe4] sm:$0xf]
        %v2182 = vld [vmem:[%s3 + $0xe8] sm:$0xf]
        %v2183 = vld [vmem:[%s3 + $0xec] sm:$0xf]
        %v2188 = vunpack.c.l.b16 %v2180
        %v2189 = vunpack.c.l.b16 %v2181
        %v2190 = vunpack.c.l.b16 %v2182
        %v2191 = vunpack.c.l.b16 %v2183
        %v2192 = vpack.c.b16 %v2189, %v2188
        %v2193 = vpack.c.b16 %v2191, %v2190
        %2196 = vmatprep.subr.bf16.mxu0 0
        %2197 = vmatpush1.bf16.msra.mxu0 %v2192
        %2198 = vmatprep.subr.bf16.mxu0 0
        %2199 = vmatpush1.bf16.msra.mxu0 %v2193
        %2200 = vmatprep.subr.bf16.mxu0 0
        %2201 = vmatpush1.bf16.msra.mxu0 0
        %2202 = vmatprep.subr.bf16.mxu0 0
        %2203 = vmatpush1.bf16.msra.mxu0 0
        %2204 = vmatprep.subr.bf16.mxu0 0
        %2205 = vmatpush1.bf16.msra.mxu0 0
        %2206 = vmatprep.subr.bf16.mxu0 0
        %2207 = vmatpush1.bf16.msra.mxu0 0
        %2208 = vmatprep.subr.bf16.mxu0 0
        %2209 = vmatpush1.bf16.msra.mxu0 0
        %2210 = vmatprep.subr.bf16.mxu0 0
        %2211 = vmatpush1.bf16.msra.mxu0 0
        %2212 = vmatprep.subr.bf16.mxu0 0
        %2213 = vmatpush1.bf16.msra.mxu0 0
        %2214 = vmatprep.subr.bf16.mxu0 0
        %2215 = vmatpush1.bf16.msra.mxu0 0
        %2216 = vmatprep.subr.bf16.mxu0 0
        %2217 = vmatpush1.bf16.msra.mxu0 0
        %2218 = vmatprep.subr.bf16.mxu0 0
        %2219 = vmatpush1.bf16.msra.mxu0 0
        %2220 = vmatprep.subr.bf16.mxu0 0
        %2221 = vmatpush1.bf16.msra.mxu0 0
        %2222 = vmatprep.subr.bf16.mxu0 0
        %2223 = vmatpush1.bf16.msra.mxu0 0
        %2224 = vmatprep.subr.bf16.mxu0 0
        %2225 = vmatpush1.bf16.msra.mxu0 0
        %2226 = vmatprep.subr.bf16.mxu0 0
        %2227 = vmatpush1.bf16.msra.mxu0 0
        %2228 = vmatprep.mubr.bf16.mxu0 0
        %2229 = vmatmul.mubr.bf16.gmra.mrb[0].mxu0 %v1246
        %v2230 = vpop.f32.mrb[0].mxu0
        %v2231 = vpop.f32.mrb[0].mxu0
        %v2232 = vpop.f32.mrb[0].mxu0
        %v2233 = vadd.f32 0.0, %v2232
        %v2234 = vpop.f32.mrb[0].mxu0
        %2235 = vmatprep.mubr.bf16.mxu0 0
        %2236 = vmatmul.mubr.bf16.gmra.mrb[0].mxu0 %v1249
        %v2237 = vpop.f32.mrb[0].mxu0
        %v2238 = vadd.f32 0.0, %v2237
        %v2239 = vpop.f32.mrb[0].mxu0
        %v2240 = vpop.f32.mrb[0].mxu0
        %v2241 = vadd.f32 0.0, %v2240
        %v2242 = vpop.f32.mrb[0].mxu0
        %2243 = vmatprep.mubr.bf16.mxu0 0
        %2244 = vmatmul.mubr.bf16.gmra.mrb[0].mxu0 %v1252
        %v2245 = vpop.f32.mrb[0].mxu0
        %v2246 = vadd.f32 0.0, %v2245
        %v2247 = vpop.f32.mrb[0].mxu0
        %v2248 = vpop.f32.mrb[0].mxu0
        %v2249 = vadd.f32 0.0, %v2248
        %v2250 = vpop.f32.mrb[0].mxu0
        %2251 = vmatprep.mubr.bf16.mxu0 0
        %2252 = vmatmul.mubr.bf16.gmra.mrb[0].mxu0 %v1255
        %v2253 = vpop.f32.mrb[0].mxu0
        %v2254 = vadd.f32 0.0, %v2253
        %v2255 = vpop.f32.mrb[0].mxu0
        %v2256 = vpop.f32.mrb[0].mxu0
        %v2257 = vpop.f32.mrb[0].mxu0
        %2258 = vdwg.mxu0
        %v2265 = vrot.slane %v2233, 1
        %v2266 = vrot.slane %v2238, 1
        %v2267 = vrot.slane %v2241, 1
        %v2268 = vrot.slane %v2246, 1
        %v2269 = vrot.slane %v2249, 1
        %v2270 = vrot.slane %v2254, 1
        %v2277 = vadd.f32 %v2174, %v2265
        %v2278 = vadd.f32 %v2175, %v2266
        %v2279 = vadd.f32 %v2176, %v2267
        %v2280 = vadd.f32 %v2177, %v2268
        %v2281 = vadd.f32 %v2178, %v2269
        %v2282 = vadd.f32 %v2179, %v2270
        %v2283 = vld [vmem:[%s3 + $0xf0] sm:$0xf]
        %v2284 = vld [vmem:[%s3 + $0xf4] sm:$0xf]
        %v2285 = vld [vmem:[%s3 + $0xf8] sm:$0xf]
        %v2286 = vld [vmem:[%s3 + $0xfc] sm:$0xf]
        %v2291 = vunpack.c.l.b16 %v2283
        %v2292 = vunpack.c.l.b16 %v2284
        %v2293 = vunpack.c.l.b16 %v2285
        %v2294 = vunpack.c.l.b16 %v2286
        %v2295 = vpack.c.b16 %v2292, %v2291
        %v2296 = vpack.c.b16 %v2294, %v2293
        %2299 = vmatprep.subr.bf16.mxu0 0
        %2300 = vmatpush1.bf16.msra.mxu0 %v2295
        %2301 = vmatprep.subr.bf16.mxu0 0
        %2302 = vmatpush1.bf16.msra.mxu0 %v2296
        %2303 = vmatprep.subr.bf16.mxu0 0
        %2304 = vmatpush1.bf16.msra.mxu0 0
        %2305 = vmatprep.subr.bf16.mxu0 0
        %2306 = vmatpush1.bf16.msra.mxu0 0
        %2307 = vmatprep.subr.bf16.mxu0 0
        %2308 = vmatpush1.bf16.msra.mxu0 0
        %2309 = vmatprep.subr.bf16.mxu0 0
        %2310 = vmatpush1.bf16.msra.mxu0 0
        %2311 = vmatprep.subr.bf16.mxu0 0
        %2312 = vmatpush1.bf16.msra.mxu0 0
        %2313 = vmatprep.subr.bf16.mxu0 0
        %2314 = vmatpush1.bf16.msra.mxu0 0
        %2315 = vmatprep.subr.bf16.mxu0 0
        %2316 = vmatpush1.bf16.msra.mxu0 0
        %2317 = vmatprep.subr.bf16.mxu0 0
        %2318 = vmatpush1.bf16.msra.mxu0 0
        %2319 = vmatprep.subr.bf16.mxu0 0
        %2320 = vmatpush1.bf16.msra.mxu0 0
        %2321 = vmatprep.subr.bf16.mxu0 0
        %2322 = vmatpush1.bf16.msra.mxu0 0
        %2323 = vmatprep.subr.bf16.mxu0 0
        %2324 = vmatpush1.bf16.msra.mxu0 0
        %2325 = vmatprep.subr.bf16.mxu0 0
        %2326 = vmatpush1.bf16.msra.mxu0 0
        %2327 = vmatprep.subr.bf16.mxu0 0
        %2328 = vmatpush1.bf16.msra.mxu0 0
        %2329 = vmatprep.subr.bf16.mxu0 0
        %2330 = vmatpush1.bf16.msra.mxu0 0
        %2331 = vmatprep.mubr.bf16.mxu0 0
        %2332 = vmatmul.mubr.bf16.gmra.mrb[0].mxu0 %v1348
        %v2333 = vpop.f32.mrb[0].mxu0
        %v2334 = vpop.f32.mrb[0].mxu0
        %v2335 = vpop.f32.mrb[0].mxu0
        %v2336 = vadd.f32 0.0, %v2335
        %v2337 = vpop.f32.mrb[0].mxu0
        %2338 = vmatprep.mubr.bf16.mxu0 0
        %2339 = vmatmul.mubr.bf16.gmra.mrb[0].mxu0 %v1351
        %v2340 = vpop.f32.mrb[0].mxu0
        %v2341 = vadd.f32 0.0, %v2340
        %v2342 = vpop.f32.mrb[0].mxu0
        %v2343 = vpop.f32.mrb[0].mxu0
        %v2344 = vadd.f32 0.0, %v2343
        %v2345 = vpop.f32.mrb[0].mxu0
        %2346 = vmatprep.mubr.bf16.mxu0 0
        %2347 = vmatmul.mubr.bf16.gmra.mrb[0].mxu0 %v1354
        %v2348 = vpop.f32.mrb[0].mxu0
        %v2349 = vadd.f32 0.0, %v2348
        %v2350 = vpop.f32.mrb[0].mxu0
        %v2351 = vpop.f32.mrb[0].mxu0
        %v2352 = vadd.f32 0.0, %v2351
        %v2353 = vpop.f32.mrb[0].mxu0
        %2354 = vmatprep.mubr.bf16.mxu0 0
        %2355 = vmatmul.mubr.bf16.gmra.mrb[0].mxu0 %v1357
        %v2356 = vpop.f32.mrb[0].mxu0
        %v2357 = vadd.f32 0.0, %v2356
        %v2358 = vpop.f32.mrb[0].mxu0
        %v2359 = vpop.f32.mrb[0].mxu0
        %v2360 = vpop.f32.mrb[0].mxu0
        %2361 = vdwg.mxu0
        %v2368 = vrot.slane %v2336, 1
        %v2369 = vrot.slane %v2341, 1
        %v2370 = vrot.slane %v2344, 1
        %v2371 = vrot.slane %v2349, 1
        %v2372 = vrot.slane %v2352, 1
        %v2373 = vrot.slane %v2357, 1
        %v2380 = vadd.f32 %v2277, %v2368
        %v2381 = vadd.f32 %v2278, %v2369
        %v2382 = vadd.f32 %v2279, %v2370
        %v2383 = vadd.f32 %v2280, %v2371
        %v2384 = vadd.f32 %v2281, %v2372
        %v2385 = vadd.f32 %v2282, %v2373
        %v2386 = vld [vmem:[%s5 + $0x1] sm:$0x1]
        %v2387 = vlaneseq
        %v2388 = vshrl.u32 %v2387, 7
        %v2389 = vsub.s32 0, %v2388
        %v2390 = vrot.slane %v2386, %v2389
        %v2391 = vadd.f32 %v2380, %v2390
        %v2392 = vadd.f32 %v2381, %v2390
        %v2393 = vadd.f32 %v2382, %v2390
        %v2394 = vadd.f32 %v2383, %v2390
        %v2395 = vadd.f32 %v2384, %v2390
        %v2396 = vadd.f32 %v2385, %v2390
        %v2397 = vmax.f32 %v2391, 0.0
        %v2398 = vmax.f32 %v2392, 0.0
        %v2399 = vmax.f32 %v2393, 0.0
        %v2400 = vmax.f32 %v2394, 0.0
        %v2401 = vmax.f32 %v2395, 0.0
        %v2402 = vmax.f32 %v2396, 0.0
        %vm2403 = vcmask 1045504
        %v2404 = vsel %vm2403, %v2397, 0.0
        %v2405 = vsel %vm2403, %v2398, 0.0
        %v2406 = vsel %vm2403, %v2399, 0.0
        %v2407 = vsel %vm2403, %v2400, 0.0
        %v2408 = vsel %vm2403, %v2401, 0.0
        %v2409 = vsel %vm2403, %v2402, 0.0
        %v2410 = vpack.c.bf16 %v2404, %v2404
        %v2411 = vpack.c.bf16 %v2405, %v2405
        %v2412 = vpack.c.bf16 %v2406, %v2406
        %v2413 = vpack.c.bf16 %v2407, %v2407
        %v2414 = vpack.c.bf16 %v2408, %v2408
        %v2415 = vpack.c.bf16 %v2409, %v2409
        %vm2416 = vcmask 519168
        %2417 = vst.msk [vmem:[#allocation3] sm:$0xf] %vm2416, %v2410
        %2418 = vst.msk [vmem:[#allocation3 + $0x4] sm:$0xf] %vm2416, %v2411
        %2419 = vst.msk [vmem:[#allocation3 + $0x8] sm:$0xf] %vm2416, %v2412
        %2420 = vst.msk [vmem:[#allocation3 + $0xc] sm:$0xf] %vm2416, %v2413
        %2421 = vst.msk [vmem:[#allocation3 + $0x10] sm:$0xf] %vm2416, %v2414
        %2422 = vst.msk [vmem:[#allocation3 + $0x14] sm:$0xf] %vm2416, %v2415
        %v2423 = vld [vmem:[%s3 + $0x100] sm:$0xf]
        %v2424 = vld [vmem:[%s3 + $0x104] sm:$0xf]
        %v2425 = vld [vmem:[%s3 + $0x108] sm:$0xf]
        %v2426 = vld [vmem:[%s3 + $0x10c] sm:$0xf]
        %v2427 = vld [vmem:[%s3 + $0x110] sm:$0xf]
        %v2428 = vld [vmem:[%s3 + $0x114] sm:$0xf]
        %v2429 = vld [vmem:[%s3 + $0x118] sm:$0xf]
        %v2430 = vld [vmem:[%s3 + $0x11c] sm:$0xf]
        %v2431 = vld [vmem:[#allocation3] sm:$0xf]
        %v2432 = vld [vmem:[#allocation3 + $0x4] sm:$0xf]
        %v2433 = vld [vmem:[#allocation3 + $0x8] sm:$0xf]
        %v2434 = vld [vmem:[#allocation3 + $0xc] sm:$0xf]
        %v2439 = vunpack.c.l.b16 %v2431
        %v2440 = vunpack.c.l.b16 %v2432
        %v2441 = vunpack.c.l.b16 %v2433
        %v2442 = vunpack.c.l.b16 %v2434
        %v2443 = vpack.c.b16 %v2440, %v2439
        %v2444 = vpack.c.b16 %v2442, %v2441
        %v2453 = vunpack.c.l.b16 %v2423
        %v2454 = vunpack.c.l.b16 %v2424
        %v2455 = vunpack.c.l.b16 %v2425
        %v2456 = vunpack.c.l.b16 %v2426
        %v2457 = vunpack.c.l.b16 %v2427
        %v2458 = vunpack.c.l.b16 %v2428
        %v2459 = vunpack.c.l.b16 %v2429
        %v2460 = vunpack.c.l.b16 %v2430
        %v2461 = vpack.c.b16 %v2454, %v2453
        %v2462 = vpack.c.b16 %v2456, %v2455
        %v2463 = vpack.c.b16 %v2458, %v2457
        %v2464 = vpack.c.b16 %v2460, %v2459
        %vm2469 = vcmask 523264
        %v2471 = vsel %vm2469, %v2443, 0
        %v2474 = vsel %vm2469, %v2444, 0
        %2476 = vmatprep.subr.bf16.mxu0 0
        %2477 = vmatpush1.bf16.msra.mxu0 %v2461
        %2478 = vmatprep.subr.bf16.mxu0 0
        %2479 = vmatpush1.bf16.msra.mxu0 %v2462
        %2480 = vmatprep.subr.bf16.mxu0 0
        %2481 = vmatpush1.bf16.msra.mxu0 %v2463
        %2482 = vmatprep.subr.bf16.mxu0 0
        %2483 = vmatpush1.bf16.msra.mxu0 %v2464
        %2484 = vmatprep.subr.bf16.mxu0 0
        %2485 = vmatpush1.bf16.msra.mxu0 0
        %2486 = vmatprep.subr.bf16.mxu0 0
        %2487 = vmatpush1.bf16.msra.mxu0 0
        %2488 = vmatprep.subr.bf16.mxu0 0
        %2489 = vmatpush1.bf16.msra.mxu0 0
        %2490 = vmatprep.subr.bf16.mxu0 0
        %2491 = vmatpush1.bf16.msra.mxu0 0
        %2492 = vmatprep.subr.bf16.mxu0 0
        %2493 = vmatpush1.bf16.msra.mxu0 0
        %2494 = vmatprep.subr.bf16.mxu0 0
        %2495 = vmatpush1.bf16.msra.mxu0 0
        %2496 = vmatprep.subr.bf16.mxu0 0
        %2497 = vmatpush1.bf16.msra.mxu0 0
        %2498 = vmatprep.subr.bf16.mxu0 0
        %2499 = vmatpush1.bf16.msra.mxu0 0
        %2500 = vmatprep.subr.bf16.mxu0 0
        %2501 = vmatpush1.bf16.msra.mxu0 0
        %2502 = vmatprep.subr.bf16.mxu0 0
        %2503 = vmatpush1.bf16.msra.mxu0 0
        %2504 = vmatprep.subr.bf16.mxu0 0
        %2505 = vmatpush1.bf16.msra.mxu0 0
        %2506 = vmatprep.subr.bf16.mxu0 0
        %2507 = vmatpush1.bf16.msra.mxu0 0
        %2508 = vmatprep.mubr.bf16.mxu0 0
        %2509 = vmatmul.mubr.bf16.gmra.mrb[0].mxu0 %v2471
        %v2510 = vpop.f32.mrb[0].mxu0
        %v2511 = vadd.f32 0.0, %v2510
        %v2512 = vpop.f32.mrb[0].mxu0
        %v2513 = vpop.f32.mrb[0].mxu0
        %v2514 = vadd.f32 0.0, %v2513
        %v2515 = vpop.f32.mrb[0].mxu0
        %2516 = vmatprep.mubr.bf16.mxu0 0
        %2517 = vmatmul.mubr.bf16.gmra.mrb[0].mxu0 %v2474
        %v2518 = vpop.f32.mrb[0].mxu0
        %v2519 = vadd.f32 0.0, %v2518
        %v2520 = vpop.f32.mrb[0].mxu0
        %v2521 = vpop.f32.mrb[0].mxu0
        %v2522 = vadd.f32 0.0, %v2521
        %v2523 = vpop.f32.mrb[0].mxu0
        %2524 = vdwg.mxu0
        %v2525 = vadd.f32 %v2511, 0.0
        %v2526 = vadd.f32 %v2514, 0.0
        %v2527 = vadd.f32 %v2519, 0.0
        %v2528 = vadd.f32 %v2522, 0.0
        %v2529 = vld [vmem:[%s3 + $0x120] sm:$0xf]
        %v2530 = vld [vmem:[%s3 + $0x124] sm:$0xf]
        %v2531 = vld [vmem:[%s3 + $0x128] sm:$0xf]
        %v2532 = vld [vmem:[%s3 + $0x12c] sm:$0xf]
        %v2533 = vld [vmem:[%s3 + $0x130] sm:$0xf]
        %v2534 = vld [vmem:[%s3 + $0x134] sm:$0xf]
        %v2535 = vld [vmem:[%s3 + $0x138] sm:$0xf]
        %v2536 = vld [vmem:[%s3 + $0x13c] sm:$0xf]
        %v2545 = vunpack.c.l.b16 %v2529
        %v2546 = vunpack.c.l.b16 %v2530
        %v2547 = vunpack.c.l.b16 %v2531
        %v2548 = vunpack.c.l.b16 %v2532
        %v2549 = vunpack.c.l.b16 %v2533
        %v2550 = vunpack.c.l.b16 %v2534
        %v2551 = vunpack.c.l.b16 %v2535
        %v2552 = vunpack.c.l.b16 %v2536
        %v2553 = vpack.c.b16 %v2546, %v2545
        %v2554 = vpack.c.b16 %v2548, %v2547
        %v2555 = vpack.c.b16 %v2550, %v2549
        %v2556 = vpack.c.b16 %v2552, %v2551
        %2561 = vmatprep.subr.bf16.mxu0 0
        %2562 = vmatpush1.bf16.msra.mxu0 %v2553
        %2563 = vmatprep.subr.bf16.mxu0 0
        %2564 = vmatpush1.bf16.msra.mxu0 %v2554
        %2565 = vmatprep.subr.bf16.mxu0 0
        %2566 = vmatpush1.bf16.msra.mxu0 %v2555
        %2567 = vmatprep.subr.bf16.mxu0 0
        %2568 = vmatpush1.bf16.msra.mxu0 %v2556
        %2569 = vmatprep.subr.bf16.mxu0 0
        %2570 = vmatpush1.bf16.msra.mxu0 0
        %2571 = vmatprep.subr.bf16.mxu0 0
        %2572 = vmatpush1.bf16.msra.mxu0 0
        %2573 = vmatprep.subr.bf16.mxu0 0
        %2574 = vmatpush1.bf16.msra.mxu0 0
        %2575 = vmatprep.subr.bf16.mxu0 0
        %2576 = vmatpush1.bf16.msra.mxu0 0
        %2577 = vmatprep.subr.bf16.mxu0 0
        %2578 = vmatpush1.bf16.msra.mxu0 0
        %2579 = vmatprep.subr.bf16.mxu0 0
        %2580 = vmatpush1.bf16.msra.mxu0 0
        %2581 = vmatprep.subr.bf16.mxu0 0
        %2582 = vmatpush1.bf16.msra.mxu0 0
        %2583 = vmatprep.subr.bf16.mxu0 0
        %2584 = vmatpush1.bf16.msra.mxu0 0
        %2585 = vmatprep.subr.bf16.mxu0 0
        %2586 = vmatpush1.bf16.msra.mxu0 0
        %2587 = vmatprep.subr.bf16.mxu0 0
        %2588 = vmatpush1.bf16.msra.mxu0 0
        %2589 = vmatprep.subr.bf16.mxu0 0
        %2590 = vmatpush1.bf16.msra.mxu0 0
        %2591 = vmatprep.subr.bf16.mxu0 0
        %2592 = vmatpush1.bf16.msra.mxu0 0
        %2593 = vmatprep.mubr.bf16.mxu0 0
        %2594 = vmatmul.mubr.bf16.gmra.mrb[0].mxu0 %v2471
        %v2595 = vpop.f32.mrb[0].mxu0
        %v2596 = vadd.f32 0.0, %v2595
        %v2597 = vpop.f32.mrb[0].mxu0
        %v2598 = vpop.f32.mrb[0].mxu0
        %v2599 = vadd.f32 0.0, %v2598
        %v2600 = vpop.f32.mrb[0].mxu0
        %2601 = vmatprep.mubr.bf16.mxu0 0
        %2602 = vmatmul.mubr.bf16.gmra.mrb[0].mxu0 %v2474
        %v2603 = vpop.f32.mrb[0].mxu0
        %v2604 = vadd.f32 0.0, %v2603
        %v2605 = vpop.f32.mrb[0].mxu0
        %v2606 = vpop.f32.mrb[0].mxu0
        %v2607 = vadd.f32 0.0, %v2606
        %v2608 = vpop.f32.mrb[0].mxu0
        %2609 = vdwg.mxu0
        %v2614 = vrot.slane %v2596, 1
        %v2615 = vrot.slane %v2599, 1
        %v2616 = vrot.slane %v2604, 1
        %v2617 = vrot.slane %v2607, 1
        %v2622 = vadd.f32 %v2525, %v2614
        %v2623 = vadd.f32 %v2526, %v2615
        %v2624 = vadd.f32 %v2527, %v2616
        %v2625 = vadd.f32 %v2528, %v2617
        %v2626 = vld [vmem:[%s3 + $0x140] sm:$0xf]
        %v2627 = vld [vmem:[%s3 + $0x144] sm:$0xf]
        %v2628 = vld [vmem:[%s3 + $0x148] sm:$0xf]
        %v2629 = vld [vmem:[%s3 + $0x14c] sm:$0xf]
        %v2630 = vld [vmem:[%s3 + $0x150] sm:$0xf]
        %v2631 = vld [vmem:[%s3 + $0x154] sm:$0xf]
        %v2632 = vld [vmem:[%s3 + $0x158] sm:$0xf]
        %v2633 = vld [vmem:[%s3 + $0x15c] sm:$0xf]
        %v2642 = vunpack.c.l.b16 %v2626
        %v2643 = vunpack.c.l.b16 %v2627
        %v2644 = vunpack.c.l.b16 %v2628
        %v2645 = vunpack.c.l.b16 %v2629
        %v2646 = vunpack.c.l.b16 %v2630
        %v2647 = vunpack.c.l.b16 %v2631
        %v2648 = vunpack.c.l.b16 %v2632
        %v2649 = vunpack.c.l.b16 %v2633
        %v2650 = vpack.c.b16 %v2643, %v2642
        %v2651 = vpack.c.b16 %v2645, %v2644
        %v2652 = vpack.c.b16 %v2647, %v2646
        %v2653 = vpack.c.b16 %v2649, %v2648
        %2658 = vmatprep.subr.bf16.mxu0 0
        %2659 = vmatpush1.bf16.msra.mxu0 %v2650
        %2660 = vmatprep.subr.bf16.mxu0 0
        %2661 = vmatpush1.bf16.msra.mxu0 %v2651
        %2662 = vmatprep.subr.bf16.mxu0 0
        %2663 = vmatpush1.bf16.msra.mxu0 %v2652
        %2664 = vmatprep.subr.bf16.mxu0 0
        %2665 = vmatpush1.bf16.msra.mxu0 %v2653
        %2666 = vmatprep.subr.bf16.mxu0 0
        %2667 = vmatpush1.bf16.msra.mxu0 0
        %2668 = vmatprep.subr.bf16.mxu0 0
        %2669 = vmatpush1.bf16.msra.mxu0 0
        %2670 = vmatprep.subr.bf16.mxu0 0
        %2671 = vmatpush1.bf16.msra.mxu0 0
        %2672 = vmatprep.subr.bf16.mxu0 0
        %2673 = vmatpush1.bf16.msra.mxu0 0
        %2674 = vmatprep.subr.bf16.mxu0 0
        %2675 = vmatpush1.bf16.msra.mxu0 0
        %2676 = vmatprep.subr.bf16.mxu0 0
        %2677 = vmatpush1.bf16.msra.mxu0 0
        %2678 = vmatprep.subr.bf16.mxu0 0
        %2679 = vmatpush1.bf16.msra.mxu0 0
        %2680 = vmatprep.subr.bf16.mxu0 0
        %2681 = vmatpush1.bf16.msra.mxu0 0
        %2682 = vmatprep.subr.bf16.mxu0 0
        %2683 = vmatpush1.bf16.msra.mxu0 0
        %2684 = vmatprep.subr.bf16.mxu0 0
        %2685 = vmatpush1.bf16.msra.mxu0 0
        %2686 = vmatprep.subr.bf16.mxu0 0
        %2687 = vmatpush1.bf16.msra.mxu0 0
        %2688 = vmatprep.subr.bf16.mxu0 0
        %2689 = vmatpush1.bf16.msra.mxu0 0
        %2690 = vmatprep.mubr.bf16.mxu0 0
        %2691 = vmatmul.mubr.bf16.gmra.mrb[0].mxu0 %v2471
        %v2692 = vpop.f32.mrb[0].mxu0
        %v2693 = vadd.f32 0.0, %v2692
        %v2694 = vpop.f32.mrb[0].mxu0
        %v2695 = vpop.f32.mrb[0].mxu0
        %v2696 = vadd.f32 0.0, %v2695
        %v2697 = vpop.f32.mrb[0].mxu0
        %2698 = vmatprep.mubr.bf16.mxu0 0
        %2699 = vmatmul.mubr.bf16.gmra.mrb[0].mxu0 %v2474
        %v2700 = vpop.f32.mrb[0].mxu0
        %v2701 = vadd.f32 0.0, %v2700
        %v2702 = vpop.f32.mrb[0].mxu0
        %v2703 = vpop.f32.mrb[0].mxu0
        %v2704 = vadd.f32 0.0, %v2703
        %v2705 = vpop.f32.mrb[0].mxu0
        %2706 = vdwg.mxu0
        %v2711 = vrot.slane %v2693, 2
        %v2712 = vrot.slane %v2696, 2
        %v2713 = vrot.slane %v2701, 2
        %v2714 = vrot.slane %v2704, 2
        %v2719 = vadd.f32 %v2622, %v2711
        %v2720 = vadd.f32 %v2623, %v2712
        %v2721 = vadd.f32 %v2624, %v2713
        %v2722 = vadd.f32 %v2625, %v2714
        %v2723 = vld [vmem:[%s3 + $0x160] sm:$0xf]
        %v2724 = vld [vmem:[%s3 + $0x164] sm:$0xf]
        %v2725 = vld [vmem:[%s3 + $0x168] sm:$0xf]
        %v2726 = vld [vmem:[%s3 + $0x16c] sm:$0xf]
        %v2727 = vld [vmem:[%s3 + $0x170] sm:$0xf]
        %v2728 = vld [vmem:[%s3 + $0x174] sm:$0xf]
        %v2729 = vld [vmem:[%s3 + $0x178] sm:$0xf]
        %v2730 = vld [vmem:[%s3 + $0x17c] sm:$0xf]
        %s2731 = scalar_lea.vmem [#allocation3], 4
        %v2732 = vld [vmem:[%s2731] sm:$0xf]
        %v2733 = vld [vmem:[%s2731 + $0x4] sm:$0xf]
        %v2734 = vld [vmem:[%s2731 + $0x8] sm:$0xf]
        %v2735 = vld [vmem:[%s2731 + $0xc] sm:$0xf]
        %v2740 = vunpack.c.l.b16 %v2732
        %v2741 = vunpack.c.l.b16 %v2733
        %v2742 = vunpack.c.l.b16 %v2734
        %v2743 = vunpack.c.l.b16 %v2735
        %v2744 = vpack.c.b16 %v2741, %v2740
        %v2745 = vpack.c.b16 %v2743, %v2742
        %v2754 = vunpack.c.l.b16 %v2723
        %v2755 = vunpack.c.l.b16 %v2724
        %v2756 = vunpack.c.l.b16 %v2725
        %v2757 = vunpack.c.l.b16 %v2726
        %v2758 = vunpack.c.l.b16 %v2727
        %v2759 = vunpack.c.l.b16 %v2728
        %v2760 = vunpack.c.l.b16 %v2729
        %v2761 = vunpack.c.l.b16 %v2730
        %v2762 = vpack.c.b16 %v2755, %v2754
        %v2763 = vpack.c.b16 %v2757, %v2756
        %v2764 = vpack.c.b16 %v2759, %v2758
        %v2765 = vpack.c.b16 %v2761, %v2760
        %v2771 = vsel %vm2469, %v2744, 0
        %v2774 = vsel %vm2469, %v2745, 0
        %2776 = vmatprep.subr.bf16.mxu0 0
        %2777 = vmatpush1.bf16.msra.mxu0 %v2762
        %2778 = vmatprep.subr.bf16.mxu0 0
        %2779 = vmatpush1.bf16.msra.mxu0 %v2763
        %2780 = vmatprep.subr.bf16.mxu0 0
        %2781 = vmatpush1.bf16.msra.mxu0 %v2764
        %2782 = vmatprep.subr.bf16.mxu0 0
        %2783 = vmatpush1.bf16.msra.mxu0 %v2765
        %2784 = vmatprep.subr.bf16.mxu0 0
        %2785 = vmatpush1.bf16.msra.mxu0 0
        %2786 = vmatprep.subr.bf16.mxu0 0
        %2787 = vmatpush1.bf16.msra.mxu0 0
        %2788 = vmatprep.subr.bf16.mxu0 0
        %2789 = vmatpush1.bf16.msra.mxu0 0
        %2790 = vmatprep.subr.bf16.mxu0 0
        %2791 = vmatpush1.bf16.msra.mxu0 0
        %2792 = vmatprep.subr.bf16.mxu0 0
        %2793 = vmatpush1.bf16.msra.mxu0 0
        %2794 = vmatprep.subr.bf16.mxu0 0
        %2795 = vmatpush1.bf16.msra.mxu0 0
        %2796 = vmatprep.subr.bf16.mxu0 0
        %2797 = vmatpush1.bf16.msra.mxu0 0
        %2798 = vmatprep.subr.bf16.mxu0 0
        %2799 = vmatpush1.bf16.msra.mxu0 0
        %2800 = vmatprep.subr.bf16.mxu0 0
        %2801 = vmatpush1.bf16.msra.mxu0 0
        %2802 = vmatprep.subr.bf16.mxu0 0
        %2803 = vmatpush1.bf16.msra.mxu0 0
        %2804 = vmatprep.subr.bf16.mxu0 0
        %2805 = vmatpush1.bf16.msra.mxu0 0
        %2806 = vmatprep.subr.bf16.mxu0 0
        %2807 = vmatpush1.bf16.msra.mxu0 0
        %2808 = vmatprep.mubr.bf16.mxu0 0
        %2809 = vmatmul.mubr.bf16.gmra.mrb[0].mxu0 %v2771
        %v2810 = vpop.f32.mrb[0].mxu0
        %v2811 = vadd.f32 0.0, %v2810
        %v2812 = vpop.f32.mrb[0].mxu0
        %v2813 = vpop.f32.mrb[0].mxu0
        %v2814 = vadd.f32 0.0, %v2813
        %v2815 = vpop.f32.mrb[0].mxu0
        %2816 = vmatprep.mubr.bf16.mxu0 0
        %2817 = vmatmul.mubr.bf16.gmra.mrb[0].mxu0 %v2774
        %v2818 = vpop.f32.mrb[0].mxu0
        %v2819 = vadd.f32 0.0, %v2818
        %v2820 = vpop.f32.mrb[0].mxu0
        %v2821 = vpop.f32.mrb[0].mxu0
        %v2822 = vadd.f32 0.0, %v2821
        %v2823 = vpop.f32.mrb[0].mxu0
        %2824 = vdwg.mxu0
        %v2825 = vadd.f32 %v2719, %v2811
        %v2826 = vadd.f32 %v2720, %v2814
        %v2827 = vadd.f32 %v2721, %v2819
        %v2828 = vadd.f32 %v2722, %v2822
        %v2829 = vld [vmem:[%s3 + $0x180] sm:$0xf]
        %v2830 = vld [vmem:[%s3 + $0x184] sm:$0xf]
        %v2831 = vld [vmem:[%s3 + $0x188] sm:$0xf]
        %v2832 = vld [vmem:[%s3 + $0x18c] sm:$0xf]
        %v2833 = vld [vmem:[%s3 + $0x190] sm:$0xf]
        %v2834 = vld [vmem:[%s3 + $0x194] sm:$0xf]
        %v2835 = vld [vmem:[%s3 + $0x198] sm:$0xf]
        %v2836 = vld [vmem:[%s3 + $0x19c] sm:$0xf]
        %v2845 = vunpack.c.l.b16 %v2829
        %v2846 = vunpack.c.l.b16 %v2830
        %v2847 = vunpack.c.l.b16 %v2831
        %v2848 = vunpack.c.l.b16 %v2832
        %v2849 = vunpack.c.l.b16 %v2833
        %v2850 = vunpack.c.l.b16 %v2834
        %v2851 = vunpack.c.l.b16 %v2835
        %v2852 = vunpack.c.l.b16 %v2836
        %v2853 = vpack.c.b16 %v2846, %v2845
        %v2854 = vpack.c.b16 %v2848, %v2847
        %v2855 = vpack.c.b16 %v2850, %v2849
        %v2856 = vpack.c.b16 %v2852, %v2851
        %2861 = vmatprep.subr.bf16.mxu0 0
        %2862 = vmatpush1.bf16.msra.mxu0 %v2853
        %2863 = vmatprep.subr.bf16.mxu0 0
        %2864 = vmatpush1.bf16.msra.mxu0 %v2854
        %2865 = vmatprep.subr.bf16.mxu0 0
        %2866 = vmatpush1.bf16.msra.mxu0 %v2855
        %2867 = vmatprep.subr.bf16.mxu0 0
        %2868 = vmatpush1.bf16.msra.mxu0 %v2856
        %2869 = vmatprep.subr.bf16.mxu0 0
        %2870 = vmatpush1.bf16.msra.mxu0 0
        %2871 = vmatprep.subr.bf16.mxu0 0
        %2872 = vmatpush1.bf16.msra.mxu0 0
        %2873 = vmatprep.subr.bf16.mxu0 0
        %2874 = vmatpush1.bf16.msra.mxu0 0
        %2875 = vmatprep.subr.bf16.mxu0 0
        %2876 = vmatpush1.bf16.msra.mxu0 0
        %2877 = vmatprep.subr.bf16.mxu0 0
        %2878 = vmatpush1.bf16.msra.mxu0 0
        %2879 = vmatprep.subr.bf16.mxu0 0
        %2880 = vmatpush1.bf16.msra.mxu0 0
        %2881 = vmatprep.subr.bf16.mxu0 0
        %2882 = vmatpush1.bf16.msra.mxu0 0
        %2883 = vmatprep.subr.bf16.mxu0 0
        %2884 = vmatpush1.bf16.msra.mxu0 0
        %2885 = vmatprep.subr.bf16.mxu0 0
        %2886 = vmatpush1.bf16.msra.mxu0 0
        %2887 = vmatprep.subr.bf16.mxu0 0
        %2888 = vmatpush1.bf16.msra.mxu0 0
        %2889 = vmatprep.subr.bf16.mxu0 0
        %2890 = vmatpush1.bf16.msra.mxu0 0
        %2891 = vmatprep.subr.bf16.mxu0 0
        %2892 = vmatpush1.bf16.msra.mxu0 0
        %2893 = vmatprep.mubr.bf16.mxu0 0
        %2894 = vmatmul.mubr.bf16.gmra.mrb[0].mxu0 %v2771
        %v2895 = vpop.f32.mrb[0].mxu0
        %v2896 = vadd.f32 0.0, %v2895
        %v2897 = vpop.f32.mrb[0].mxu0
        %v2898 = vpop.f32.mrb[0].mxu0
        %v2899 = vadd.f32 0.0, %v2898
        %v2900 = vpop.f32.mrb[0].mxu0
        %2901 = vmatprep.mubr.bf16.mxu0 0
        %2902 = vmatmul.mubr.bf16.gmra.mrb[0].mxu0 %v2774
        %v2903 = vpop.f32.mrb[0].mxu0
        %v2904 = vadd.f32 0.0, %v2903
        %v2905 = vpop.f32.mrb[0].mxu0
        %v2906 = vpop.f32.mrb[0].mxu0
        %v2907 = vadd.f32 0.0, %v2906
        %v2908 = vpop.f32.mrb[0].mxu0
        %2909 = vdwg.mxu0
        %v2914 = vrot.slane %v2896, 1
        %v2915 = vrot.slane %v2899, 1
        %v2916 = vrot.slane %v2904, 1
        %v2917 = vrot.slane %v2907, 1
        %v2922 = vadd.f32 %v2825, %v2914
        %v2923 = vadd.f32 %v2826, %v2915
        %v2924 = vadd.f32 %v2827, %v2916
        %v2925 = vadd.f32 %v2828, %v2917
        %v2926 = vld [vmem:[%s3 + $0x1a0] sm:$0xf]
        %v2927 = vld [vmem:[%s3 + $0x1a4] sm:$0xf]
        %v2928 = vld [vmem:[%s3 + $0x1a8] sm:$0xf]
        %v2929 = vld [vmem:[%s3 + $0x1ac] sm:$0xf]
        %v2930 = vld [vmem:[%s3 + $0x1b0] sm:$0xf]
        %v2931 = vld [vmem:[%s3 + $0x1b4] sm:$0xf]
        %v2932 = vld [vmem:[%s3 + $0x1b8] sm:$0xf]
        %v2933 = vld [vmem:[%s3 + $0x1bc] sm:$0xf]
        %v2942 = vunpack.c.l.b16 %v2926
        %v2943 = vunpack.c.l.b16 %v2927
        %v2944 = vunpack.c.l.b16 %v2928
        %v2945 = vunpack.c.l.b16 %v2929
        %v2946 = vunpack.c.l.b16 %v2930
        %v2947 = vunpack.c.l.b16 %v2931
        %v2948 = vunpack.c.l.b16 %v2932
        %v2949 = vunpack.c.l.b16 %v2933
        %v2950 = vpack.c.b16 %v2943, %v2942
        %v2951 = vpack.c.b16 %v2945, %v2944
        %v2952 = vpack.c.b16 %v2947, %v2946
        %v2953 = vpack.c.b16 %v2949, %v2948
        %2958 = vmatprep.subr.bf16.mxu0 0
        %2959 = vmatpush1.bf16.msra.mxu0 %v2950
        %2960 = vmatprep.subr.bf16.mxu0 0
        %2961 = vmatpush1.bf16.msra.mxu0 %v2951
        %2962 = vmatprep.subr.bf16.mxu0 0
        %2963 = vmatpush1.bf16.msra.mxu0 %v2952
        %2964 = vmatprep.subr.bf16.mxu0 0
        %2965 = vmatpush1.bf16.msra.mxu0 %v2953
        %2966 = vmatprep.subr.bf16.mxu0 0
        %2967 = vmatpush1.bf16.msra.mxu0 0
        %2968 = vmatprep.subr.bf16.mxu0 0
        %2969 = vmatpush1.bf16.msra.mxu0 0
        %2970 = vmatprep.subr.bf16.mxu0 0
        %2971 = vmatpush1.bf16.msra.mxu0 0
        %2972 = vmatprep.subr.bf16.mxu0 0
        %2973 = vmatpush1.bf16.msra.mxu0 0
        %2974 = vmatprep.subr.bf16.mxu0 0
        %2975 = vmatpush1.bf16.msra.mxu0 0
        %2976 = vmatprep.subr.bf16.mxu0 0
        %2977 = vmatpush1.bf16.msra.mxu0 0
        %2978 = vmatprep.subr.bf16.mxu0 0
        %2979 = vmatpush1.bf16.msra.mxu0 0
        %2980 = vmatprep.subr.bf16.mxu0 0
        %2981 = vmatpush1.bf16.msra.mxu0 0
        %2982 = vmatprep.subr.bf16.mxu0 0
        %2983 = vmatpush1.bf16.msra.mxu0 0
        %2984 = vmatprep.subr.bf16.mxu0 0
        %2985 = vmatpush1.bf16.msra.mxu0 0
        %2986 = vmatprep.subr.bf16.mxu0 0
        %2987 = vmatpush1.bf16.msra.mxu0 0
        %2988 = vmatprep.subr.bf16.mxu0 0
        %2989 = vmatpush1.bf16.msra.mxu0 0
        %2990 = vmatprep.mubr.bf16.mxu0 0
        %2991 = vmatmul.mubr.bf16.gmra.mrb[0].mxu0 %v2771
        %v2992 = vpop.f32.mrb[0].mxu0
        %v2993 = vadd.f32 0.0, %v2992
        %v2994 = vpop.f32.mrb[0].mxu0
        %v2995 = vpop.f32.mrb[0].mxu0
        %v2996 = vadd.f32 0.0, %v2995
        %v2997 = vpop.f32.mrb[0].mxu0
        %2998 = vmatprep.mubr.bf16.mxu0 0
        %2999 = vmatmul.mubr.bf16.gmra.mrb[0].mxu0 %v2774
        %v3000 = vpop.f32.mrb[0].mxu0
        %v3001 = vadd.f32 0.0, %v3000
        %v3002 = vpop.f32.mrb[0].mxu0
        %v3003 = vpop.f32.mrb[0].mxu0
        %v3004 = vadd.f32 0.0, %v3003
        %v3005 = vpop.f32.mrb[0].mxu0
        %3006 = vdwg.mxu0
        %v3011 = vrot.slane %v2993, 2
        %v3012 = vrot.slane %v2996, 2
        %v3013 = vrot.slane %v3001, 2
        %v3014 = vrot.slane %v3004, 2
        %v3019 = vadd.f32 %v2922, %v3011
        %v3020 = vadd.f32 %v2923, %v3012
        %v3021 = vadd.f32 %v2924, %v3013
        %v3022 = vadd.f32 %v2925, %v3014
        %v3023 = vld [vmem:[%s3 + $0x1c0] sm:$0xf]
        %v3024 = vld [vmem:[%s3 + $0x1c4] sm:$0xf]
        %v3025 = vld [vmem:[%s3 + $0x1c8] sm:$0xf]
        %v3026 = vld [vmem:[%s3 + $0x1cc] sm:$0xf]
        %v3027 = vld [vmem:[%s3 + $0x1d0] sm:$0xf]
        %v3028 = vld [vmem:[%s3 + $0x1d4] sm:$0xf]
        %v3029 = vld [vmem:[%s3 + $0x1d8] sm:$0xf]
        %v3030 = vld [vmem:[%s3 + $0x1dc] sm:$0xf]
        %s3031 = scalar_lea.vmem [#allocation3], 8
        %v3032 = vld [vmem:[%s3031] sm:$0xf]
        %v3033 = vld [vmem:[%s3031 + $0x4] sm:$0xf]
        %v3034 = vld [vmem:[%s3031 + $0x8] sm:$0xf]
        %v3035 = vld [vmem:[%s3031 + $0xc] sm:$0xf]
        %v3040 = vunpack.c.l.b16 %v3032
        %v3041 = vunpack.c.l.b16 %v3033
        %v3042 = vunpack.c.l.b16 %v3034
        %v3043 = vunpack.c.l.b16 %v3035
        %v3044 = vpack.c.b16 %v3041, %v3040
        %v3045 = vpack.c.b16 %v3043, %v3042
        %v3054 = vunpack.c.l.b16 %v3023
        %v3055 = vunpack.c.l.b16 %v3024
        %v3056 = vunpack.c.l.b16 %v3025
        %v3057 = vunpack.c.l.b16 %v3026
        %v3058 = vunpack.c.l.b16 %v3027
        %v3059 = vunpack.c.l.b16 %v3028
        %v3060 = vunpack.c.l.b16 %v3029
        %v3061 = vunpack.c.l.b16 %v3030
        %v3062 = vpack.c.b16 %v3055, %v3054
        %v3063 = vpack.c.b16 %v3057, %v3056
        %v3064 = vpack.c.b16 %v3059, %v3058
        %v3065 = vpack.c.b16 %v3061, %v3060
        %v3071 = vsel %vm2469, %v3044, 0
        %v3074 = vsel %vm2469, %v3045, 0
        %3076 = vmatprep.subr.bf16.mxu0 0
        %3077 = vmatpush1.bf16.msra.mxu0 %v3062
        %3078 = vmatprep.subr.bf16.mxu0 0
        %3079 = vmatpush1.bf16.msra.mxu0 %v3063
        %3080 = vmatprep.subr.bf16.mxu0 0
        %3081 = vmatpush1.bf16.msra.mxu0 %v3064
        %3082 = vmatprep.subr.bf16.mxu0 0
        %3083 = vmatpush1.bf16.msra.mxu0 %v3065
        %3084 = vmatprep.subr.bf16.mxu0 0
        %3085 = vmatpush1.bf16.msra.mxu0 0
        %3086 = vmatprep.subr.bf16.mxu0 0
        %3087 = vmatpush1.bf16.msra.mxu0 0
        %3088 = vmatprep.subr.bf16.mxu0 0
        %3089 = vmatpush1.bf16.msra.mxu0 0
        %3090 = vmatprep.subr.bf16.mxu0 0
        %3091 = vmatpush1.bf16.msra.mxu0 0
        %3092 = vmatprep.subr.bf16.mxu0 0
        %3093 = vmatpush1.bf16.msra.mxu0 0
        %3094 = vmatprep.subr.bf16.mxu0 0
        %3095 = vmatpush1.bf16.msra.mxu0 0
        %3096 = vmatprep.subr.bf16.mxu0 0
        %3097 = vmatpush1.bf16.msra.mxu0 0
        %3098 = vmatprep.subr.bf16.mxu0 0
        %3099 = vmatpush1.bf16.msra.mxu0 0
        %3100 = vmatprep.subr.bf16.mxu0 0
        %3101 = vmatpush1.bf16.msra.mxu0 0
        %3102 = vmatprep.subr.bf16.mxu0 0
        %3103 = vmatpush1.bf16.msra.mxu0 0
        %3104 = vmatprep.subr.bf16.mxu0 0
        %3105 = vmatpush1.bf16.msra.mxu0 0
        %3106 = vmatprep.subr.bf16.mxu0 0
        %3107 = vmatpush1.bf16.msra.mxu0 0
        %3108 = vmatprep.mubr.bf16.mxu0 0
        %3109 = vmatmul.mubr.bf16.gmra.mrb[0].mxu0 %v3071
        %v3110 = vpop.f32.mrb[0].mxu0
        %v3111 = vadd.f32 0.0, %v3110
        %v3112 = vpop.f32.mrb[0].mxu0
        %v3113 = vpop.f32.mrb[0].mxu0
        %v3114 = vadd.f32 0.0, %v3113
        %v3115 = vpop.f32.mrb[0].mxu0
        %3116 = vmatprep.mubr.bf16.mxu0 0
        %3117 = vmatmul.mubr.bf16.gmra.mrb[0].mxu0 %v3074
        %v3118 = vpop.f32.mrb[0].mxu0
        %v3119 = vadd.f32 0.0, %v3118
        %v3120 = vpop.f32.mrb[0].mxu0
        %v3121 = vpop.f32.mrb[0].mxu0
        %v3122 = vadd.f32 0.0, %v3121
        %v3123 = vpop.f32.mrb[0].mxu0
        %3124 = vdwg.mxu0
        %v3125 = vadd.f32 %v3019, %v3111
        %v3126 = vadd.f32 %v3020, %v3114
        %v3127 = vadd.f32 %v3021, %v3119
        %v3128 = vadd.f32 %v3022, %v3122
        %v3129 = vld [vmem:[%s3 + $0x1e0] sm:$0xf]
        %v3130 = vld [vmem:[%s3 + $0x1e4] sm:$0xf]
        %v3131 = vld [vmem:[%s3 + $0x1e8] sm:$0xf]
        %v3132 = vld [vmem:[%s3 + $0x1ec] sm:$0xf]
        %v3133 = vld [vmem:[%s3 + $0x1f0] sm:$0xf]
        %v3134 = vld [vmem:[%s3 + $0x1f4] sm:$0xf]
        %v3135 = vld [vmem:[%s3 + $0x1f8] sm:$0xf]
        %v3136 = vld [vmem:[%s3 + $0x1fc] sm:$0xf]
        %v3145 = vunpack.c.l.b16 %v3129
        %v3146 = vunpack.c.l.b16 %v3130
        %v3147 = vunpack.c.l.b16 %v3131
        %v3148 = vunpack.c.l.b16 %v3132
        %v3149 = vunpack.c.l.b16 %v3133
        %v3150 = vunpack.c.l.b16 %v3134
        %v3151 = vunpack.c.l.b16 %v3135
        %v3152 = vunpack.c.l.b16 %v3136
        %v3153 = vpack.c.b16 %v3146, %v3145
        %v3154 = vpack.c.b16 %v3148, %v3147
        %v3155 = vpack.c.b16 %v3150, %v3149
        %v3156 = vpack.c.b16 %v3152, %v3151
        %3161 = vmatprep.subr.bf16.mxu0 0
        %3162 = vmatpush1.bf16.msra.mxu0 %v3153
        %3163 = vmatprep.subr.bf16.mxu0 0
        %3164 = vmatpush1.bf16.msra.mxu0 %v3154
        %3165 = vmatprep.subr.bf16.mxu0 0
        %3166 = vmatpush1.bf16.msra.mxu0 %v3155
        %3167 = vmatprep.subr.bf16.mxu0 0
        %3168 = vmatpush1.bf16.msra.mxu0 %v3156
        %3169 = vmatprep.subr.bf16.mxu0 0
        %3170 = vmatpush1.bf16.msra.mxu0 0
        %3171 = vmatprep.subr.bf16.mxu0 0
        %3172 = vmatpush1.bf16.msra.mxu0 0
        %3173 = vmatprep.subr.bf16.mxu0 0
        %3174 = vmatpush1.bf16.msra.mxu0 0
        %3175 = vmatprep.subr.bf16.mxu0 0
        %3176 = vmatpush1.bf16.msra.mxu0 0
        %3177 = vmatprep.subr.bf16.mxu0 0
        %3178 = vmatpush1.bf16.msra.mxu0 0
        %3179 = vmatprep.subr.bf16.mxu0 0
        %3180 = vmatpush1.bf16.msra.mxu0 0
        %3181 = vmatprep.subr.bf16.mxu0 0
        %3182 = vmatpush1.bf16.msra.mxu0 0
        %3183 = vmatprep.subr.bf16.mxu0 0
        %3184 = vmatpush1.bf16.msra.mxu0 0
        %3185 = vmatprep.subr.bf16.mxu0 0
        %3186 = vmatpush1.bf16.msra.mxu0 0
        %3187 = vmatprep.subr.bf16.mxu0 0
        %3188 = vmatpush1.bf16.msra.mxu0 0
        %3189 = vmatprep.subr.bf16.mxu0 0
        %3190 = vmatpush1.bf16.msra.mxu0 0
        %3191 = vmatprep.subr.bf16.mxu0 0
        %3192 = vmatpush1.bf16.msra.mxu0 0
        %3193 = vmatprep.mubr.bf16.mxu0 0
        %3194 = vmatmul.mubr.bf16.gmra.mrb[0].mxu0 %v3071
        %v3195 = vpop.f32.mrb[0].mxu0
        %v3196 = vadd.f32 0.0, %v3195
        %v3197 = vpop.f32.mrb[0].mxu0
        %v3198 = vpop.f32.mrb[0].mxu0
        %v3199 = vadd.f32 0.0, %v3198
        %v3200 = vpop.f32.mrb[0].mxu0
        %3201 = vmatprep.mubr.bf16.mxu0 0
        %3202 = vmatmul.mubr.bf16.gmra.mrb[0].mxu0 %v3074
        %v3203 = vpop.f32.mrb[0].mxu0
        %v3204 = vadd.f32 0.0, %v3203
        %v3205 = vpop.f32.mrb[0].mxu0
        %v3206 = vpop.f32.mrb[0].mxu0
        %v3207 = vadd.f32 0.0, %v3206
        %v3208 = vpop.f32.mrb[0].mxu0
        %3209 = vdwg.mxu0
        %v3214 = vrot.slane %v3196, 1
        %v3215 = vrot.slane %v3199, 1
        %v3216 = vrot.slane %v3204, 1
        %v3217 = vrot.slane %v3207, 1
        %v3222 = vadd.f32 %v3125, %v3214
        %v3223 = vadd.f32 %v3126, %v3215
        %v3224 = vadd.f32 %v3127, %v3216
        %v3225 = vadd.f32 %v3128, %v3217
        %v3226 = vld [vmem:[%s3 + $0x200] sm:$0xf]
        %v3227 = vld [vmem:[%s3 + $0x204] sm:$0xf]
        %v3228 = vld [vmem:[%s3 + $0x208] sm:$0xf]
        %v3229 = vld [vmem:[%s3 + $0x20c] sm:$0xf]
        %v3230 = vld [vmem:[%s3 + $0x210] sm:$0xf]
        %v3231 = vld [vmem:[%s3 + $0x214] sm:$0xf]
        %v3232 = vld [vmem:[%s3 + $0x218] sm:$0xf]
        %v3233 = vld [vmem:[%s3 + $0x21c] sm:$0xf]
        %v3242 = vunpack.c.l.b16 %v3226
        %v3243 = vunpack.c.l.b16 %v3227
        %v3244 = vunpack.c.l.b16 %v3228
        %v3245 = vunpack.c.l.b16 %v3229
        %v3246 = vunpack.c.l.b16 %v3230
        %v3247 = vunpack.c.l.b16 %v3231
        %v3248 = vunpack.c.l.b16 %v3232
        %v3249 = vunpack.c.l.b16 %v3233
        %v3250 = vpack.c.b16 %v3243, %v3242
        %v3251 = vpack.c.b16 %v3245, %v3244
        %v3252 = vpack.c.b16 %v3247, %v3246
        %v3253 = vpack.c.b16 %v3249, %v3248
        %3258 = vmatprep.subr.bf16.mxu0 0
        %3259 = vmatpush1.bf16.msra.mxu0 %v3250
        %3260 = vmatprep.subr.bf16.mxu0 0
        %3261 = vmatpush1.bf16.msra.mxu0 %v3251
        %3262 = vmatprep.subr.bf16.mxu0 0
        %3263 = vmatpush1.bf16.msra.mxu0 %v3252
        %3264 = vmatprep.subr.bf16.mxu0 0
        %3265 = vmatpush1.bf16.msra.mxu0 %v3253
        %3266 = vmatprep.subr.bf16.mxu0 0
        %3267 = vmatpush1.bf16.msra.mxu0 0
        %3268 = vmatprep.subr.bf16.mxu0 0
        %3269 = vmatpush1.bf16.msra.mxu0 0
        %3270 = vmatprep.subr.bf16.mxu0 0
        %3271 = vmatpush1.bf16.msra.mxu0 0
        %3272 = vmatprep.subr.bf16.mxu0 0
        %3273 = vmatpush1.bf16.msra.mxu0 0
        %3274 = vmatprep.subr.bf16.mxu0 0
        %3275 = vmatpush1.bf16.msra.mxu0 0
        %3276 = vmatprep.subr.bf16.mxu0 0
        %3277 = vmatpush1.bf16.msra.mxu0 0
        %3278 = vmatprep.subr.bf16.mxu0 0
        %3279 = vmatpush1.bf16.msra.mxu0 0
        %3280 = vmatprep.subr.bf16.mxu0 0
        %3281 = vmatpush1.bf16.msra.mxu0 0
        %3282 = vmatprep.subr.bf16.mxu0 0
        %3283 = vmatpush1.bf16.msra.mxu0 0
        %3284 = vmatprep.subr.bf16.mxu0 0
        %3285 = vmatpush1.bf16.msra.mxu0 0
        %3286 = vmatprep.subr.bf16.mxu0 0
        %3287 = vmatpush1.bf16.msra.mxu0 0
        %3288 = vmatprep.subr.bf16.mxu0 0
        %3289 = vmatpush1.bf16.msra.mxu0 0
        %3290 = vmatprep.mubr.bf16.mxu0 0
        %3291 = vmatmul.mubr.bf16.gmra.mrb[0].mxu0 %v3071
        %v3292 = vpop.f32.mrb[0].mxu0
        %v3293 = vadd.f32 0.0, %v3292
        %v3294 = vpop.f32.mrb[0].mxu0
        %v3295 = vpop.f32.mrb[0].mxu0
        %v3296 = vadd.f32 0.0, %v3295
        %v3297 = vpop.f32.mrb[0].mxu0
        %3298 = vmatprep.mubr.bf16.mxu0 0
        %3299 = vmatmul.mubr.bf16.gmra.mrb[0].mxu0 %v3074
        %v3300 = vpop.f32.mrb[0].mxu0
        %v3301 = vadd.f32 0.0, %v3300
        %v3302 = vpop.f32.mrb[0].mxu0
        %v3303 = vpop.f32.mrb[0].mxu0
        %v3304 = vadd.f32 0.0, %v3303
        %v3305 = vpop.f32.mrb[0].mxu0
        %3306 = vdwg.mxu0
        %v3311 = vrot.slane %v3293, 2
        %v3312 = vrot.slane %v3296, 2
        %v3313 = vrot.slane %v3301, 2
        %v3314 = vrot.slane %v3304, 2
        %v3319 = vadd.f32 %v3222, %v3311
        %v3320 = vadd.f32 %v3223, %v3312
        %v3321 = vadd.f32 %v3224, %v3313
        %v3322 = vadd.f32 %v3225, %v3314
        %v3323 = vld [vmem:[%s5 + $0x2] sm:$0x1]
        %v3324 = vlaneseq
        %v3325 = vshrl.u32 %v3324, 7
        %v3326 = vsub.s32 0, %v3325
        %v3327 = vrot.slane %v3323, %v3326
        %v3328 = vadd.f32 %v3319, %v3327
        %v3329 = vadd.f32 %v3320, %v3327
        %v3330 = vadd.f32 %v3321, %v3327
        %v3331 = vadd.f32 %v3322, %v3327
        %v3332 = vmax.f32 %v3328, 0.0
        %v3333 = vmax.f32 %v3329, 0.0
        %v3334 = vmax.f32 %v3330, 0.0
        %v3335 = vmax.f32 %v3331, 0.0
        %v3337 = vrot.slane %v3333, 4
        %v3340 = vrot.slane %v3335, 4
        %vm3342 = vcmask 1043456
        %v3343 = vsel %vm3342, %v3332, %v3337
        %v3344 = vsel %vm3342, %v3334, %v3340
        %v3345 = vld [vmem:[%s2 + $0x80] sm:$0xf]
        %v3346 = vld [vmem:[%s2 + $0x84] sm:$0xf]
        %v3347 = vld [vmem:[%s2 + $0x88] sm:$0xf]
        %v3348 = vld [vmem:[%s2 + $0x8c] sm:$0xf]
        %v3349 = vld [vmem:[%s2 + $0x90] sm:$0xf]
        %v3350 = vld [vmem:[%s2 + $0x94] sm:$0xf]
        %v3351 = vld [vmem:[%s2 + $0x98] sm:$0xf]
        %v3352 = vld [vmem:[%s2 + $0x9c] sm:$0xf]
        %v3353 = vpack.c.bf16 %v3344, %v3343
        %v3354 = vld [vmem:[%s5 + $0x3] sm:$0x1]
        %v3355 = vlaneseq
        %v3356 = vshrl.u32 %v3355, 7
        %v3357 = vsub.s32 0, %v3356
        %v3358 = vrot.slane %v3354, %v3357
        %v3367 = vunpack.c.l.b16 %v3345
        %v3368 = vunpack.c.l.b16 %v3346
        %v3369 = vunpack.c.l.b16 %v3347
        %v3370 = vunpack.c.l.b16 %v3348
        %v3371 = vunpack.c.l.b16 %v3349
        %v3372 = vunpack.c.l.b16 %v3350
        %v3373 = vunpack.c.l.b16 %v3351
        %v3374 = vunpack.c.l.b16 %v3352
        %v3375 = vpack.c.b16 %v3368, %v3367
        %v3376 = vpack.c.b16 %v3370, %v3369
        %v3377 = vpack.c.b16 %v3372, %v3371
        %v3378 = vpack.c.b16 %v3374, %v3373
        %v3384 = vsel %vm2469, %v3353, 0
        %3386 = vmatprep.subr.bf16.mxu0 0
        %3387 = vmatpush1.bf16.msra.mxu0 %v3375
        %3388 = vmatprep.subr.bf16.mxu0 0
        %3389 = vmatpush1.bf16.msra.mxu0 %v3376
        %3390 = vmatprep.subr.bf16.mxu0 0
        %3391 = vmatpush1.bf16.msra.mxu0 %v3377
        %3392 = vmatprep.subr.bf16.mxu0 0
        %3393 = vmatpush1.bf16.msra.mxu0 %v3378
        %3394 = vmatprep.subr.bf16.mxu0 0
        %3395 = vmatpush1.bf16.msra.mxu0 0
        %3396 = vmatprep.subr.bf16.mxu0 0
        %3397 = vmatpush1.bf16.msra.mxu0 0
        %3398 = vmatprep.subr.bf16.mxu0 0
        %3399 = vmatpush1.bf16.msra.mxu0 0
        %3400 = vmatprep.subr.bf16.mxu0 0
        %3401 = vmatpush1.bf16.msra.mxu0 0
        %3402 = vmatprep.subr.bf16.mxu0 0
        %3403 = vmatpush1.bf16.msra.mxu0 0
        %3404 = vmatprep.subr.bf16.mxu0 0
        %3405 = vmatpush1.bf16.msra.mxu0 0
        %3406 = vmatprep.subr.bf16.mxu0 0
        %3407 = vmatpush1.bf16.msra.mxu0 0
        %3408 = vmatprep.subr.bf16.mxu0 0
        %3409 = vmatpush1.bf16.msra.mxu0 0
        %3410 = vmatprep.subr.bf16.mxu0 0
        %3411 = vmatpush1.bf16.msra.mxu0 0
        %3412 = vmatprep.subr.bf16.mxu0 0
        %3413 = vmatpush1.bf16.msra.mxu0 0
        %3414 = vmatprep.subr.bf16.mxu0 0
        %3415 = vmatpush1.bf16.msra.mxu0 0
        %3416 = vmatprep.subr.bf16.mxu0 0
        %3417 = vmatpush1.bf16.msra.mxu0 0
        %3418 = vmatprep.mubr.bf16.mxu0 0
        %3419 = vmatmul.mubr.bf16.gmra.mrb[0].mxu0 %v3384
        %v3420 = vpop.f32.mrb[0].mxu0
        %v3421 = vadd.f32 %v3358, %v3420
        %v3422 = vpop.f32.mrb[0].mxu0
        %v3423 = vpop.f32.mrb[0].mxu0
        %v3424 = vadd.f32 %v3358, %v3423
        %v3425 = vpop.f32.mrb[0].mxu0
        %3426 = vdwg.mxu0
        %v3427 = vld [vmem:[%s262] sm:$0x1]
        %v3428 = vld [vmem:[%s3 + $0x220] sm:$0xf]
        %v3429 = vld [vmem:[%s3 + $0x224] sm:$0xf]
        %v3430 = vld [vmem:[%s3 + $0x228] sm:$0xf]
        %v3431 = vld [vmem:[%s3 + $0x22c] sm:$0xf]
        %v3432 = vpack.c.bf16 %v3427, %v3427
        %v3433 = vld [vmem:[%s5 + $0x4] sm:$0x1]
        %v3438 = vunpack.c.l.b16 %v3428
        %v3439 = vunpack.c.l.b16 %v3429
        %v3440 = vunpack.c.l.b16 %v3430
        %v3441 = vunpack.c.l.b16 %v3431
        %v3442 = vpack.c.b16 %v3439, %v3438
        %v3443 = vpack.c.b16 %v3441, %v3440
        %v3447 = vsel %vm798, %v3432, 0
        %3449 = vmatprep.subr.bf16.mxu0 0
        %3450 = vmatpush1.bf16.msra.mxu0 %v3442
        %3451 = vmatprep.subr.bf16.mxu0 0
        %3452 = vmatpush1.bf16.msra.mxu0 %v3443
        %3453 = vmatprep.subr.bf16.mxu0 0
        %3454 = vmatpush1.bf16.msra.mxu0 0
        %3455 = vmatprep.subr.bf16.mxu0 0
        %3456 = vmatpush1.bf16.msra.mxu0 0
        %3457 = vmatprep.subr.bf16.mxu0 0
        %3458 = vmatpush1.bf16.msra.mxu0 0
        %3459 = vmatprep.subr.bf16.mxu0 0
        %3460 = vmatpush1.bf16.msra.mxu0 0
        %3461 = vmatprep.subr.bf16.mxu0 0
        %3462 = vmatpush1.bf16.msra.mxu0 0
        %3463 = vmatprep.subr.bf16.mxu0 0
        %3464 = vmatpush1.bf16.msra.mxu0 0
        %3465 = vmatprep.subr.bf16.mxu0 0
        %3466 = vmatpush1.bf16.msra.mxu0 0
        %3467 = vmatprep.subr.bf16.mxu0 0
        %3468 = vmatpush1.bf16.msra.mxu0 0
        %3469 = vmatprep.subr.bf16.mxu0 0
        %3470 = vmatpush1.bf16.msra.mxu0 0
        %3471 = vmatprep.subr.bf16.mxu0 0
        %3472 = vmatpush1.bf16.msra.mxu0 0
        %3473 = vmatprep.subr.bf16.mxu0 0
        %3474 = vmatpush1.bf16.msra.mxu0 0
        %3475 = vmatprep.subr.bf16.mxu0 0
        %3476 = vmatpush1.bf16.msra.mxu0 0
        %3477 = vmatprep.subr.bf16.mxu0 0
        %3478 = vmatpush1.bf16.msra.mxu0 0
        %3479 = vmatprep.subr.bf16.mxu0 0
        %3480 = vmatpush1.bf16.msra.mxu0 0
        %3481 = vmatprep.mubr.bf16.mxu0 0
        %3482 = vmatmul.mubr.bf16.gmra.mrb[0].mxu0 %v3447
        %v3483 = vpop.f32.mrb[0].mxu0
        %v3484 = vadd.f32 %v3433, %v3483
        %v3485 = vpop.f32.mrb[0].mxu0
        %v3486 = vpop.f32.mrb[0].mxu0
        %v3487 = vpop.f32.mrb[0].mxu0
        %3488 = vdwg.mxu0
        %v3489 = vmax.f32 %v3484, 0.0
        %v3490 = vld [vmem:[%s3 + $0x230] sm:$0xf]
        %v3491 = vld [vmem:[%s3 + $0x234] sm:$0xf]
        %v3492 = vld [vmem:[%s3 + $0x238] sm:$0xf]
        %v3493 = vld [vmem:[%s3 + $0x23c] sm:$0xf]
        %v3494 = vld [vmem:[%s3 + $0x240] sm:$0xf]
        %v3495 = vld [vmem:[%s3 + $0x244] sm:$0xf]
        %v3496 = vld [vmem:[%s3 + $0x248] sm:$0xf]
        %v3497 = vld [vmem:[%s3 + $0x24c] sm:$0xf]
        %v3498 = vpack.c.bf16 %v3489, %v3489
        %v3499 = vld [vmem:[%s5 + $0x5] sm:$0x1]
        %v3508 = vunpack.c.l.b16 %v3490
        %v3509 = vunpack.c.l.b16 %v3491
        %v3510 = vunpack.c.l.b16 %v3492
        %v3511 = vunpack.c.l.b16 %v3493
        %v3512 = vunpack.c.l.b16 %v3494
        %v3513 = vunpack.c.l.b16 %v3495
        %v3514 = vunpack.c.l.b16 %v3496
        %v3515 = vunpack.c.l.b16 %v3497
        %v3516 = vpack.c.b16 %v3509, %v3508
        %v3517 = vpack.c.b16 %v3511, %v3510
        %v3518 = vpack.c.b16 %v3513, %v3512
        %v3519 = vpack.c.b16 %v3515, %v3514
        %v3525 = vsel %vm2469, %v3498, 0
        %3527 = vmatprep.subr.bf16.mxu0 0
        %3528 = vmatpush1.bf16.msra.mxu0 %v3516
        %3529 = vmatprep.subr.bf16.mxu0 0
        %3530 = vmatpush1.bf16.msra.mxu0 %v3517
        %3531 = vmatprep.subr.bf16.mxu0 0
        %3532 = vmatpush1.bf16.msra.mxu0 %v3518
        %3533 = vmatprep.subr.bf16.mxu0 0
        %3534 = vmatpush1.bf16.msra.mxu0 %v3519
        %3535 = vmatprep.subr.bf16.mxu0 0
        %3536 = vmatpush1.bf16.msra.mxu0 0
        %3537 = vmatprep.subr.bf16.mxu0 0
        %3538 = vmatpush1.bf16.msra.mxu0 0
        %3539 = vmatprep.subr.bf16.mxu0 0
        %3540 = vmatpush1.bf16.msra.mxu0 0
        %3541 = vmatprep.subr.bf16.mxu0 0
        %3542 = vmatpush1.bf16.msra.mxu0 0
        %3543 = vmatprep.subr.bf16.mxu0 0
        %3544 = vmatpush1.bf16.msra.mxu0 0
        %3545 = vmatprep.subr.bf16.mxu0 0
        %3546 = vmatpush1.bf16.msra.mxu0 0
        %3547 = vmatprep.subr.bf16.mxu0 0
        %3548 = vmatpush1.bf16.msra.mxu0 0
        %3549 = vmatprep.subr.bf16.mxu0 0
        %3550 = vmatpush1.bf16.msra.mxu0 0
        %3551 = vmatprep.subr.bf16.mxu0 0
        %3552 = vmatpush1.bf16.msra.mxu0 0
        %3553 = vmatprep.subr.bf16.mxu0 0
        %3554 = vmatpush1.bf16.msra.mxu0 0
        %3555 = vmatprep.subr.bf16.mxu0 0
        %3556 = vmatpush1.bf16.msra.mxu0 0
        %3557 = vmatprep.subr.bf16.mxu0 0
        %3558 = vmatpush1.bf16.msra.mxu0 0
        %3559 = vmatprep.mubr.bf16.mxu0 0
        %3560 = vmatmul.mubr.bf16.gmra.mrb[0].mxu0 %v3525
        %v3561 = vpop.f32.mrb[0].mxu0
        %v3562 = vadd.f32 %v3499, %v3561
        %v3563 = vpop.f32.mrb[0].mxu0
        %v3564 = vpop.f32.mrb[0].mxu0
        %v3565 = vpop.f32.mrb[0].mxu0
        %3566 = vdwg.mxu0
        %v3567 = vmax.f32 %v3562, 0.0
        %v3568 = vld [vmem:[%s2 + $0xa0] sm:$0xf]
        %v3569 = vld [vmem:[%s2 + $0xa4] sm:$0xf]
        %v3570 = vld [vmem:[%s2 + $0xa8] sm:$0xf]
        %v3571 = vld [vmem:[%s2 + $0xac] sm:$0xf]
        %v3572 = vld [vmem:[%s2 + $0xb0] sm:$0xf]
        %v3573 = vld [vmem:[%s2 + $0xb4] sm:$0xf]
        %v3574 = vld [vmem:[%s2 + $0xb8] sm:$0xf]
        %v3575 = vld [vmem:[%s2 + $0xbc] sm:$0xf]
        %v3576 = vpack.c.bf16 %v3567, %v3567
        %v3577 = vld [vmem:[%s5 + $0x6] sm:$0x1]
        %v3586 = vunpack.c.l.b16 %v3568
        %v3587 = vunpack.c.l.b16 %v3569
        %v3588 = vunpack.c.l.b16 %v3570
        %v3589 = vunpack.c.l.b16 %v3571
        %v3590 = vunpack.c.l.b16 %v3572
        %v3591 = vunpack.c.l.b16 %v3573
        %v3592 = vunpack.c.l.b16 %v3574
        %v3593 = vunpack.c.l.b16 %v3575
        %v3594 = vpack.c.b16 %v3587, %v3586
        %v3595 = vpack.c.b16 %v3589, %v3588
        %v3596 = vpack.c.b16 %v3591, %v3590
        %v3597 = vpack.c.b16 %v3593, %v3592
        %v3603 = vsel %vm2469, %v3576, 0
        %3605 = vmatprep.subr.bf16.mxu0 0
        %3606 = vmatpush1.bf16.msra.mxu0 %v3594
        %3607 = vmatprep.subr.bf16.mxu0 0
        %3608 = vmatpush1.bf16.msra.mxu0 %v3595
        %3609 = vmatprep.subr.bf16.mxu0 0
        %3610 = vmatpush1.bf16.msra.mxu0 %v3596
        %3611 = vmatprep.subr.bf16.mxu0 0
        %3612 = vmatpush1.bf16.msra.mxu0 %v3597
        %3613 = vmatprep.subr.bf16.mxu0 0
        %3614 = vmatpush1.bf16.msra.mxu0 0
        %3615 = vmatprep.subr.bf16.mxu0 0
        %3616 = vmatpush1.bf16.msra.mxu0 0
        %3617 = vmatprep.subr.bf16.mxu0 0
        %3618 = vmatpush1.bf16.msra.mxu0 0
        %3619 = vmatprep.subr.bf16.mxu0 0
        %3620 = vmatpush1.bf16.msra.mxu0 0
        %3621 = vmatprep.subr.bf16.mxu0 0
        %3622 = vmatpush1.bf16.msra.mxu0 0
        %3623 = vmatprep.subr.bf16.mxu0 0
        %3624 = vmatpush1.bf16.msra.mxu0 0
        %3625 = vmatprep.subr.bf16.mxu0 0
        %3626 = vmatpush1.bf16.msra.mxu0 0
        %3627 = vmatprep.subr.bf16.mxu0 0
        %3628 = vmatpush1.bf16.msra.mxu0 0
        %3629 = vmatprep.subr.bf16.mxu0 0
        %3630 = vmatpush1.bf16.msra.mxu0 0
        %3631 = vmatprep.subr.bf16.mxu0 0
        %3632 = vmatpush1.bf16.msra.mxu0 0
        %3633 = vmatprep.subr.bf16.mxu0 0
        %3634 = vmatpush1.bf16.msra.mxu0 0
        %3635 = vmatprep.subr.bf16.mxu0 0
        %3636 = vmatpush1.bf16.msra.mxu0 0
        %3637 = vmatprep.mubr.bf16.mxu0 0
        %3638 = vmatmul.mubr.bf16.gmra.mrb[0].mxu0 %v3603
        %v3639 = vpop.f32.mrb[0].mxu0
        %v3640 = vadd.f32 %v3577, %v3639
        %v3641 = vpop.f32.mrb[0].mxu0
        %v3642 = vpop.f32.mrb[0].mxu0
        %v3643 = vpop.f32.mrb[0].mxu0
        %3644 = vdwg.mxu0
        %v3645 = vmax.f32 %v3640, 0.0
        %v3646 = vld [vmem:[%s4] sm:$0xf]
        %v3647 = vld [vmem:[%s4 + $0x4] sm:$0xf]
        %v3648 = vld [vmem:[%s4 + $0x8] sm:$0xf]
        %v3649 = vld [vmem:[%s4 + $0xc] sm:$0xf]
        %v3650 = vpack.c.bf16 %v3424, %v3421
        %v3651 = vpack.c.bf16 %v3645, %v3645
        %v3652 = vld [vmem:[%s5 + $0x7] sm:$0x1]
        %v3653 = vlaneseq
        %v3654 = vshrl.u32 %v3653, 7
        %v3655 = vsub.s32 0, %v3654
        %v3656 = vrot.slane %v3652, %v3655
        %v3661 = vunpack.c.l.b16 %v3646
        %v3662 = vunpack.c.l.b16 %v3647
        %v3663 = vunpack.c.l.b16 %v3648
        %v3664 = vunpack.c.l.b16 %v3649
        %v3665 = vpack.c.b16 %v3662, %v3661
        %v3666 = vpack.c.b16 %v3664, %v3663
        %v3670 = vsel %vm798, %v3650, 0
        %v3673 = vsel %vm798, %v3651, 0
        %3675 = vmatprep.subr.bf16.mxu0 0
        %3676 = vmatpush1.bf16.msra.mxu0 %v3665
        %3677 = vmatprep.subr.bf16.mxu0 0
        %3678 = vmatpush1.bf16.msra.mxu0 %v3666
        %3679 = vmatprep.subr.bf16.mxu0 0
        %3680 = vmatpush1.bf16.msra.mxu0 0
        %3681 = vmatprep.subr.bf16.mxu0 0
        %3682 = vmatpush1.bf16.msra.mxu0 0
        %3683 = vmatprep.subr.bf16.mxu0 0
        %3684 = vmatpush1.bf16.msra.mxu0 0
        %3685 = vmatprep.subr.bf16.mxu0 0
        %3686 = vmatpush1.bf16.msra.mxu0 0
        %3687 = vmatprep.subr.bf16.mxu0 0
        %3688 = vmatpush1.bf16.msra.mxu0 0
        %3689 = vmatprep.subr.bf16.mxu0 0
        %3690 = vmatpush1.bf16.msra.mxu0 0
        %3691 = vmatprep.subr.bf16.mxu0 0
        %3692 = vmatpush1.bf16.msra.mxu0 0
        %3693 = vmatprep.subr.bf16.mxu0 0
        %3694 = vmatpush1.bf16.msra.mxu0 0
        %3695 = vmatprep.subr.bf16.mxu0 0
        %3696 = vmatpush1.bf16.msra.mxu0 0
        %3697 = vmatprep.subr.bf16.mxu0 0
        %3698 = vmatpush1.bf16.msra.mxu0 0
        %3699 = vmatprep.subr.bf16.mxu0 0
        %3700 = vmatpush1.bf16.msra.mxu0 0
        %3701 = vmatprep.subr.bf16.mxu0 0
        %3702 = vmatpush1.bf16.msra.mxu0 0
        %3703 = vmatprep.subr.bf16.mxu0 0
        %3704 = vmatpush1.bf16.msra.mxu0 0
        %3705 = vmatprep.subr.bf16.mxu0 0
        %3706 = vmatpush1.bf16.msra.mxu0 0
        %3707 = vmatprep.mubr.bf16.mxu0 0
        %3708 = vmatmul.mubr.bf16.gmra.mrb[0].mxu0 %v3670
        %v3709 = vpop.f32.mrb[0].mxu0
        %v3710 = vadd.f32 %v3656, %v3709
        %v3711 = vpop.f32.mrb[0].mxu0
        %v3712 = vpop.f32.mrb[0].mxu0
        %v3713 = vadd.f32 %v3656, %v3712
        %v3714 = vpop.f32.mrb[0].mxu0
        %3715 = vmatprep.mubr.bf16.mxu0 0
        %3716 = vmatmul.mubr.bf16.gmra.mrb[0].mxu0 %v3673
        %v3717 = vpop.f32.mrb[0].mxu0
        %v3718 = vadd.f32 %v3656, %v3717
        %v3719 = vpop.f32.mrb[0].mxu0
        %v3720 = vpop.f32.mrb[0].mxu0
        %v3721 = vpop.f32.mrb[0].mxu0
        %3722 = vdwg.mxu0
        %v3723 = vpack.c.bf16 %v3713, %v3710
        %v3724 = vpack.c.bf16 %v3718, %v3718
        %3727 = vrot.lane.b32.xlu0 %v3723, 96
        %v3728 = vpop.permute.xlu0 %3727
        %3729 = vrot.lane.b32.xlu0 %v3724, 96
        %v3730 = vpop.permute.xlu0 %3729
        %vm3731 = vcmask 130048
        %v3733 = vsel %vm3731, %v3723, 0
        %v3736 = vsel %vm3731, %v3724, 0
        %v3739 = vsel %vm3731, %v3728, 0
        %v3742 = vsel %vm3731, %v3730, 0
        %3744 = vmatprep.subr.bf16.mxu0 0
        %3745 = vmatpush1.bf16.xpose.msra.mxu0 %v3739
        %3746 = vmatprep.subr.bf16.mxu0 0
        %3747 = vmatpush1.bf16.xpose.msra.mxu0 %v3742
        %3748 = vmatprep.subr.bf16.mxu0 0
        %3749 = vmatpush1.bf16.xpose.msra.mxu0 0
        %3750 = vmatprep.subr.bf16.mxu0 0
        %3751 = vmatpush1.bf16.xpose.msra.mxu0 0
        %3752 = vmatprep.subr.bf16.mxu0 0
        %3753 = vmatpush1.bf16.xpose.msra.mxu0 0
        %3754 = vmatprep.subr.bf16.mxu0 0
        %3755 = vmatpush1.bf16.xpose.msra.mxu0 0
        %3756 = vmatprep.subr.bf16.mxu0 0
        %3757 = vmatpush1.bf16.xpose.msra.mxu0 0
        %3758 = vmatprep.subr.bf16.mxu0 0
        %3759 = vmatpush1.bf16.xpose.msra.mxu0 0
        %3760 = vmatprep.subr.bf16.mxu0 0
        %3761 = vmatpush1.bf16.xpose.msra.mxu0 0
        %3762 = vmatprep.subr.bf16.mxu0 0
        %3763 = vmatpush1.bf16.xpose.msra.mxu0 0
        %3764 = vmatprep.subr.bf16.mxu0 0
        %3765 = vmatpush1.bf16.xpose.msra.mxu0 0
        %3766 = vmatprep.subr.bf16.mxu0 0
        %3767 = vmatpush1.bf16.xpose.msra.mxu0 0
        %3768 = vmatprep.subr.bf16.mxu0 0
        %3769 = vmatpush1.bf16.xpose.msra.mxu0 0
        %3770 = vmatprep.subr.bf16.mxu0 0
        %3771 = vmatpush1.bf16.xpose.msra.mxu0 0
        %3772 = vmatprep.subr.bf16.mxu0 0
        %3773 = vmatpush1.bf16.xpose.msra.mxu0 0
        %3774 = vmatprep.subr.bf16.mxu0 0
        %3775 = vmatpush1.bf16.xpose.msra.mxu0 0
        %3776 = vmatprep.mubr.bf16.mxu0 0
        %3777 = vmatmul.mubr.bf16.gmra.mrb[0].mxu0 %v3733
        %v3778 = vpop.f32.mrb[0].mxu0
        %v3779 = vadd.f32 0.0, %v3778
        %v3780 = vpop.f32.mrb[0].mxu0
        %v3781 = vpop.f32.mrb[0].mxu0
        %v3782 = vadd.f32 0.0, %v3781
        %v3783 = vpop.f32.mrb[0].mxu0
        %3784 = vmatprep.mubr.bf16.mxu0 0
        %3785 = vmatmul.mubr.bf16.gmra.mrb[0].mxu0 %v3736
        %v3786 = vpop.f32.mrb[0].mxu0
        %v3787 = vadd.f32 0.0, %v3786
        %v3788 = vpop.f32.mrb[0].mxu0
        %v3789 = vpop.f32.mrb[0].mxu0
        %v3790 = vpop.f32.mrb[0].mxu0
        %3791 = vdwg.mxu0
        %v3792 = vmul.f32 %v3779, 0.25
        %v3793 = vmul.f32 %v3782, 0.25
        %v3794 = vmul.f32 %v3787, 0.25
        %vm3795 = vcmask 138240
        %v3796 = vsel %vm3795, %v3792, -inf
        %3797 = vmax.xlane.f32.xlu0 %v3796
        %v3798 = vpop.xlane.xlu0 %3797
        %v3799 = vsel %vm3795, %v3793, -inf
        %3800 = vmax.xlane.f32.xlu0 %v3799
        %v3801 = vpop.xlane.xlu0 %3800
        %vm3802 = vcmask 131072
        %v3803 = vsel %vm3802, %v3794, -inf
        %3804 = vmax.xlane.f32.xlu0 %v3803
        %v3805 = vpop.xlane.xlu0 %3804
        %v3806 = vsub.f32 %v3792, %v3798
        %v3807 = vsub.f32 %v3793, %v3801
        %v3808 = vsub.f32 %v3794, %v3805
        %v3809 = vmul.f32 %v3806, 1.442695
        %v3810 = vpow.pop %v3809
        %v3811 = vmul.f32 %v3807, 1.442695
        %v3812 = vpow.pop %v3811
        %v3813 = vmul.f32 %v3808, 1.442695
        %v3814 = vpow.pop %v3813
        %v3815 = vsel %vm3795, %v3810, 0.0
        %3816 = vadd.xlane.f32.xlu0 %v3815
        %v3817 = vpop.xlane.xlu0 %3816
        %v3818 = vsel %vm3795, %v3812, 0.0
        %3819 = vadd.xlane.f32.xlu0 %v3818
        %v3820 = vpop.xlane.xlu0 %3819
        %v3821 = vsel %vm3802, %v3814, 0.0
        %3822 = vadd.xlane.f32.xlu0 %v3821
        %v3823 = vpop.xlane.xlu0 %3822
        %v3824 = vrcp.pop %v3817
        %v3825 = vrcp.pop %v3820
        %v3826 = vrcp.pop %v3823
        %v3827 = vmul.f32 %v3810, %v3824
        %v3828 = vmul.f32 %v3812, %v3825
        %v3829 = vmul.f32 %v3814, %v3826
        %v3830 = vpack.c.bf16 %v3828, %v3827
        %v3831 = vpack.c.bf16 %v3829, %v3829
        %3832 = vrot.lane.b32.xlu0 %v3723, 64
        %v3833 = vpop.permute.xlu0 %3832
        %3834 = vrot.lane.b32.xlu0 %v3724, 64
        %v3835 = vpop.permute.xlu0 %3834
        %v3838 = vsel %vm3795, %v3830, 0
        %v3841 = vsel %vm3795, %v3831, 0
        %vm3843 = vcmask 1040384
        %v3844 = vsel 0, 4294967295, 65535
        %v3845 = vsel %vm3843, %v3844, 0
        %v3847 = vand.u32 %v3835, %v3845
        %3849 = vmatprep.subr.bf16.mxu0 0
        %3850 = vmatpush1.bf16.msra.mxu0 %v3833
        %3851 = vmatprep.subr.bf16.mxu0 0
        %3852 = vmatpush1.bf16.msra.mxu0 %v3847
        %3853 = vmatprep.subr.bf16.mxu0 0
        %3854 = vmatpush1.bf16.msra.mxu0 0
        %3855 = vmatprep.subr.bf16.mxu0 0
        %3856 = vmatpush1.bf16.msra.mxu0 0
        %3857 = vmatprep.subr.bf16.mxu0 0
        %3858 = vmatpush1.bf16.msra.mxu0 0
        %3859 = vmatprep.subr.bf16.mxu0 0
        %3860 = vmatpush1.bf16.msra.mxu0 0
        %3861 = vmatprep.subr.bf16.mxu0 0
        %3862 = vmatpush1.bf16.msra.mxu0 0
        %3863 = vmatprep.subr.bf16.mxu0 0
        %3864 = vmatpush1.bf16.msra.mxu0 0
        %3865 = vmatprep.subr.bf16.mxu0 0
        %3866 = vmatpush1.bf16.msra.mxu0 0
        %3867 = vmatprep.subr.bf16.mxu0 0
        %3868 = vmatpush1.bf16.msra.mxu0 0
        %3869 = vmatprep.subr.bf16.mxu0 0
        %3870 = vmatpush1.bf16.msra.mxu0 0
        %3871 = vmatprep.subr.bf16.mxu0 0
        %3872 = vmatpush1.bf16.msra.mxu0 0
        %3873 = vmatprep.subr.bf16.mxu0 0
        %3874 = vmatpush1.bf16.msra.mxu0 0
        %3875 = vmatprep.subr.bf16.mxu0 0
        %3876 = vmatpush1.bf16.msra.mxu0 0
        %3877 = vmatprep.subr.bf16.mxu0 0
        %3878 = vmatpush1.bf16.msra.mxu0 0
        %3879 = vmatprep.subr.bf16.mxu0 0
        %3880 = vmatpush1.bf16.msra.mxu0 0
        %3881 = vmatprep.mubr.bf16.mxu0 0
        %3882 = vmatmul.mubr.bf16.gmra.mrb[0].mxu0 %v3838
        %v3883 = vpop.f32.mrb[0].mxu0
        %v3884 = vadd.f32 0.0, %v3883
        %v3885 = vpop.f32.mrb[0].mxu0
        %v3886 = vpop.f32.mrb[0].mxu0
        %v3887 = vadd.f32 0.0, %v3886
        %v3888 = vpop.f32.mrb[0].mxu0
        %3889 = vmatprep.mubr.bf16.mxu0 0
        %3890 = vmatmul.mubr.bf16.gmra.mrb[0].mxu0 %v3841
        %v3891 = vpop.f32.mrb[0].mxu0
        %v3892 = vadd.f32 0.0, %v3891
        %v3893 = vpop.f32.mrb[0].mxu0
        %v3894 = vpop.f32.mrb[0].mxu0
        %v3895 = vpop.f32.mrb[0].mxu0
        %3896 = vdwg.mxu0
        %3897 = vrot.lane.b32.xlu0 %v3723, 112
        %v3898 = vpop.permute.xlu0 %3897
        %3899 = vrot.lane.b32.xlu0 %v3724, 112
        %v3900 = vpop.permute.xlu0 %3899
        %3901 = vrot.lane.b32.xlu0 %v3723, 80
        %v3902 = vpop.permute.xlu0 %3901
        %3903 = vrot.lane.b32.xlu0 %v3724, 80
        %v3904 = vpop.permute.xlu0 %3903
        %v3906 = vsel %vm3731, %v3898, 0
        %v3909 = vsel %vm3731, %v3900, 0
        %v3912 = vsel %vm3731, %v3902, 0
        %v3915 = vsel %vm3731, %v3904, 0
        %3917 = vmatprep.subr.bf16.mxu0 0
        %3918 = vmatpush1.bf16.xpose.msra.mxu0 %v3912
        %3919 = vmatprep.subr.bf16.mxu0 0
        %3920 = vmatpush1.bf16.xpose.msra.mxu0 %v3915
        %3921 = vmatprep.subr.bf16.mxu0 0
        %3922 = vmatpush1.bf16.xpose.msra.mxu0 0
        %3923 = vmatprep.subr.bf16.mxu0 0
        %3924 = vmatpush1.bf16.xpose.msra.mxu0 0
        %3925 = vmatprep.subr.bf16.mxu0 0
        %3926 = vmatpush1.bf16.xpose.msra.mxu0 0
        %3927 = vmatprep.subr.bf16.mxu0 0
        %3928 = vmatpush1.bf16.xpose.msra.mxu0 0
        %3929 = vmatprep.subr.bf16.mxu0 0
        %3930 = vmatpush1.bf16.xpose.msra.mxu0 0
        %3931 = vmatprep.subr.bf16.mxu0 0
        %3932 = vmatpush1.bf16.xpose.msra.mxu0 0
        %3933 = vmatprep.subr.bf16.mxu0 0
        %3934 = vmatpush1.bf16.xpose.msra.mxu0 0
        %3935 = vmatprep.subr.bf16.mxu0 0
        %3936 = vmatpush1.bf16.xpose.msra.mxu0 0
        %3937 = vmatprep.subr.bf16.mxu0 0
        %3938 = vmatpush1.bf16.xpose.msra.mxu0 0
        %3939 = vmatprep.subr.bf16.mxu0 0
        %3940 = vmatpush1.bf16.xpose.msra.mxu0 0
        %3941 = vmatprep.subr.bf16.mxu0 0
        %3942 = vmatpush1.bf16.xpose.msra.mxu0 0
        %3943 = vmatprep.subr.bf16.mxu0 0
        %3944 = vmatpush1.bf16.xpose.msra.mxu0 0
        %3945 = vmatprep.subr.bf16.mxu0 0
        %3946 = vmatpush1.bf16.xpose.msra.mxu0 0
        %3947 = vmatprep.subr.bf16.mxu0 0
        %3948 = vmatpush1.bf16.xpose.msra.mxu0 0
        %3949 = vmatprep.mubr.bf16.mxu0 0
        %3950 = vmatmul.mubr.bf16.gmra.mrb[0].mxu0 %v3906
        %v3951 = vpop.f32.mrb[0].mxu0
        %v3952 = vadd.f32 0.0, %v3951
        %v3953 = vpop.f32.mrb[0].mxu0
        %v3954 = vpop.f32.mrb[0].mxu0
        %v3955 = vadd.f32 0.0, %v3954
        %v3956 = vpop.f32.mrb[0].mxu0
        %3957 = vmatprep.mubr.bf16.mxu0 0
        %3958 = vmatmul.mubr.bf16.gmra.mrb[0].mxu0 %v3909
        %v3959 = vpop.f32.mrb[0].mxu0
        %v3960 = vadd.f32 0.0, %v3959
        %v3961 = vpop.f32.mrb[0].mxu0
        %v3962 = vpop.f32.mrb[0].mxu0
        %v3963 = vpop.f32.mrb[0].mxu0
        %3964 = vdwg.mxu0
        %v3965 = vmul.f32 %v3952, 0.25
        %v3966 = vmul.f32 %v3955, 0.25
        %v3967 = vmul.f32 %v3960, 0.25
        %v3968 = vsel %vm3795, %v3965, -inf
        %3969 = vmax.xlane.f32.xlu0 %v3968
        %v3970 = vpop.xlane.xlu0 %3969
        %v3971 = vsel %vm3795, %v3966, -inf
        %3972 = vmax.xlane.f32.xlu0 %v3971
        %v3973 = vpop.xlane.xlu0 %3972
        %v3974 = vsel %vm3802, %v3967, -inf
        %3975 = vmax.xlane.f32.xlu0 %v3974
        %v3976 = vpop.xlane.xlu0 %3975
        %v3977 = vsub.f32 %v3965, %v3970
        %v3978 = vsub.f32 %v3966, %v3973
        %v3979 = vsub.f32 %v3967, %v3976
        %v3980 = vmul.f32 %v3977, 1.442695
        %v3981 = vpow.pop %v3980
        %v3982 = vmul.f32 %v3978, 1.442695
        %v3983 = vpow.pop %v3982
        %v3984 = vmul.f32 %v3979, 1.442695
        %v3985 = vpow.pop %v3984
        %v3986 = vsel %vm3795, %v3981, 0.0
        %3987 = vadd.xlane.f32.xlu0 %v3986
        %v3988 = vpop.xlane.xlu0 %3987
        %v3989 = vsel %vm3795, %v3983, 0.0
        %3990 = vadd.xlane.f32.xlu0 %v3989
        %v3991 = vpop.xlane.xlu0 %3990
        %v3992 = vsel %vm3802, %v3985, 0.0
        %3993 = vadd.xlane.f32.xlu0 %v3992
        %v3994 = vpop.xlane.xlu0 %3993
        %v3995 = vrcp.pop %v3988
        %v3996 = vrcp.pop %v3991
        %v3997 = vrcp.pop %v3994
        %v3998 = vmul.f32 %v3981, %v3995
        %v3999 = vmul.f32 %v3983, %v3996
        %v4000 = vmul.f32 %v3985, %v3997
        %v4001 = vpack.c.bf16 %v3999, %v3998
        %v4002 = vpack.c.bf16 %v4000, %v4000
        %4003 = vrot.lane.b32.xlu0 %v3723, 48
        %v4004 = vpop.permute.xlu0 %4003
        %4005 = vrot.lane.b32.xlu0 %v3724, 48
        %v4006 = vpop.permute.xlu0 %4005
        %v4009 = vsel %vm3795, %v4001, 0
        %v4012 = vsel %vm3795, %v4002, 0
        %v4015 = vand.u32 %v4006, %v3845
        %4017 = vmatprep.subr.bf16.mxu0 0
        %4018 = vmatpush1.bf16.msra.mxu0 %v4004
        %4019 = vmatprep.subr.bf16.mxu0 0
        %4020 = vmatpush1.bf16.msra.mxu0 %v4015
        %4021 = vmatprep.subr.bf16.mxu0 0
        %4022 = vmatpush1.bf16.msra.mxu0 0
        %4023 = vmatprep.subr.bf16.mxu0 0
        %4024 = vmatpush1.bf16.msra.mxu0 0
        %4025 = vmatprep.subr.bf16.mxu0 0
        %4026 = vmatpush1.bf16.msra.mxu0 0
        %4027 = vmatprep.subr.bf16.mxu0 0
        %4028 = vmatpush1.bf16.msra.mxu0 0
        %4029 = vmatprep.subr.bf16.mxu0 0
        %4030 = vmatpush1.bf16.msra.mxu0 0
        %4031 = vmatprep.subr.bf16.mxu0 0
        %4032 = vmatpush1.bf16.msra.mxu0 0
        %4033 = vmatprep.subr.bf16.mxu0 0
        %4034 = vmatpush1.bf16.msra.mxu0 0
        %4035 = vmatprep.subr.bf16.mxu0 0
        %4036 = vmatpush1.bf16.msra.mxu0 0
        %4037 = vmatprep.subr.bf16.mxu0 0
        %4038 = vmatpush1.bf16.msra.mxu0 0
        %4039 = vmatprep.subr.bf16.mxu0 0
        %4040 = vmatpush1.bf16.msra.mxu0 0
        %4041 = vmatprep.subr.bf16.mxu0 0
        %4042 = vmatpush1.bf16.msra.mxu0 0
        %4043 = vmatprep.subr.bf16.mxu0 0
        %4044 = vmatpush1.bf16.msra.mxu0 0
        %4045 = vmatprep.subr.bf16.mxu0 0
        %4046 = vmatpush1.bf16.msra.mxu0 0
        %4047 = vmatprep.subr.bf16.mxu0 0
        %4048 = vmatpush1.bf16.msra.mxu0 0
        %4049 = vmatprep.mubr.bf16.mxu0 0
        %4050 = vmatmul.mubr.bf16.gmra.mrb[0].mxu0 %v4009
        %v4051 = vpop.f32.mrb[0].mxu0
        %v4052 = vadd.f32 0.0, %v4051
        %v4053 = vpop.f32.mrb[0].mxu0
        %v4054 = vpop.f32.mrb[0].mxu0
        %v4055 = vadd.f32 0.0, %v4054
        %v4056 = vpop.f32.mrb[0].mxu0
        %4057 = vmatprep.mubr.bf16.mxu0 0
        %4058 = vmatmul.mubr.bf16.gmra.mrb[0].mxu0 %v4012
        %v4059 = vpop.f32.mrb[0].mxu0
        %v4060 = vadd.f32 0.0, %v4059
        %v4061 = vpop.f32.mrb[0].mxu0
        %v4062 = vpop.f32.mrb[0].mxu0
        %v4063 = vpop.f32.mrb[0].mxu0
        %4064 = vdwg.mxu0
        %4068 = vrot.lane.b32.xlu0 %v4052, 16
        %v4069 = vpop.permute.xlu0 %4068
        %4070 = vrot.lane.b32.xlu0 %v4055, 16
        %v4071 = vpop.permute.xlu0 %4070
        %4072 = vrot.lane.b32.xlu0 %v4060, 16
        %v4073 = vpop.permute.xlu0 %4072
        %v4077 = vsel %vm3731, %v3884, %v4069
        %v4078 = vsel %vm3731, %v3887, %v4071
        %v4079 = vsel %vm3731, %v3892, %v4073
        %v4080 = vld [vmem:[%s2 + $0xc0] sm:$0xf]
        %v4081 = vld [vmem:[%s2 + $0xc4] sm:$0xf]
        %v4082 = vld [vmem:[%s2 + $0xc8] sm:$0xf]
        %v4083 = vld [vmem:[%s2 + $0xcc] sm:$0xf]
        %v4084 = vpack.c.bf16 %v4078, %v4077
        %v4085 = vpack.c.bf16 %v4079, %v4079
        %v4086 = vld [vmem:[%s5 + $0x9] sm:$0x1]
        %v4087 = vlaneseq
        %v4088 = vshrl.u32 %v4087, 7
        %v4089 = vsub.s32 0, %v4088
        %v4090 = vrot.slane %v4086, %v4089
        %v4095 = vunpack.c.l.b16 %v4080
        %v4096 = vunpack.c.l.b16 %v4081
        %v4097 = vunpack.c.l.b16 %v4082
        %v4098 = vunpack.c.l.b16 %v4083
        %v4099 = vpack.c.b16 %v4096, %v4095
        %v4100 = vpack.c.b16 %v4098, %v4097
        %v4104 = vsel %vm798, %v4084, 0
        %v4107 = vsel %vm798, %v4085, 0
        %4109 = vmatprep.subr.bf16.mxu0 0
        %4110 = vmatpush1.bf16.msra.mxu0 %v4099
        %4111 = vmatprep.subr.bf16.mxu0 0
        %4112 = vmatpush1.bf16.msra.mxu0 %v4100
        %4113 = vmatprep.subr.bf16.mxu0 0
        %4114 = vmatpush1.bf16.msra.mxu0 0
        %4115 = vmatprep.subr.bf16.mxu0 0
        %4116 = vmatpush1.bf16.msra.mxu0 0
        %4117 = vmatprep.subr.bf16.mxu0 0
        %4118 = vmatpush1.bf16.msra.mxu0 0
        %4119 = vmatprep.subr.bf16.mxu0 0
        %4120 = vmatpush1.bf16.msra.mxu0 0
        %4121 = vmatprep.subr.bf16.mxu0 0
        %4122 = vmatpush1.bf16.msra.mxu0 0
        %4123 = vmatprep.subr.bf16.mxu0 0
        %4124 = vmatpush1.bf16.msra.mxu0 0
        %4125 = vmatprep.subr.bf16.mxu0 0
        %4126 = vmatpush1.bf16.msra.mxu0 0
        %4127 = vmatprep.subr.bf16.mxu0 0
        %4128 = vmatpush1.bf16.msra.mxu0 0
        %4129 = vmatprep.subr.bf16.mxu0 0
        %4130 = vmatpush1.bf16.msra.mxu0 0
        %4131 = vmatprep.subr.bf16.mxu0 0
        %4132 = vmatpush1.bf16.msra.mxu0 0
        %4133 = vmatprep.subr.bf16.mxu0 0
        %4134 = vmatpush1.bf16.msra.mxu0 0
        %4135 = vmatprep.subr.bf16.mxu0 0
        %4136 = vmatpush1.bf16.msra.mxu0 0
        %4137 = vmatprep.subr.bf16.mxu0 0
        %4138 = vmatpush1.bf16.msra.mxu0 0
        %4139 = vmatprep.subr.bf16.mxu0 0
        %4140 = vmatpush1.bf16.msra.mxu0 0
        %4141 = vmatprep.mubr.bf16.mxu0 0
        %4142 = vmatmul.mubr.bf16.gmra.mrb[0].mxu0 %v4104
        %v4143 = vpop.f32.mrb[0].mxu0
        %v4144 = vadd.f32 %v4090, %v4143
        %v4145 = vpop.f32.mrb[0].mxu0
        %v4146 = vpop.f32.mrb[0].mxu0
        %v4147 = vadd.f32 %v4090, %v4146
        %v4148 = vpop.f32.mrb[0].mxu0
        %4149 = vmatprep.mubr.bf16.mxu0 0
        %4150 = vmatmul.mubr.bf16.gmra.mrb[0].mxu0 %v4107
        %v4151 = vpop.f32.mrb[0].mxu0
        %v4152 = vadd.f32 %v4090, %v4151
        %v4153 = vpop.f32.mrb[0].mxu0
        %v4154 = vpop.f32.mrb[0].mxu0
        %v4155 = vpop.f32.mrb[0].mxu0
        %4156 = vdwg.mxu0
        %v4157 = vadd.f32 %v3421, %v4144
        %v4158 = vadd.f32 %v3424, %v4147
        %v4159 = vadd.f32 %v3645, %v4152
        %v4160 = vld [vmem:[%s5 + $0xb] sm:$0x1]
        %v4161 = vld [vmem:[%s5 + $0xd] sm:$0x1]
        %v4162 = vsel %vm798, %v4157, 0.0
        %4163 = vadd.xlane.f32.xlu0 %v4162
        %v4164 = vpop.xlane.xlu0 %4163
        %v4165 = vsel %vm798, %v4158, 0.0
        %4166 = vadd.xlane.f32.xlu0 %v4165
        %v4167 = vpop.xlane.xlu0 %4166
        %vm4168 = vcmask 253952
        %v4169 = vsel %vm4168, %v4159, 0.0
        %4170 = vadd.xlane.f32.xlu0 %v4169
        %v4171 = vpop.xlane.xlu0 %4170
        %v4172 = vrcp.pop 32.0
        %v4173 = vmul.f32 %v4164, %v4172
        %v4174 = vmul.f32 %v4167, %v4172
        %v4175 = vmul.f32 %v4171, %v4172
        %v4176 = vsub.f32 %v4157, %v4173
        %v4177 = vsub.f32 %v4158, %v4174
        %v4178 = vsub.f32 %v4159, %v4175
        %v4179 = vmul.f32 %v4176, %v4176
        %v4180 = vmul.f32 %v4177, %v4177
        %v4181 = vmul.f32 %v4178, %v4178
        %v4182 = vsel %vm798, %v4179, 0.0
        %4183 = vadd.xlane.f32.xlu0 %v4182
        %v4184 = vpop.xlane.xlu0 %4183
        %v4185 = vsel %vm798, %v4180, 0.0
        %4186 = vadd.xlane.f32.xlu0 %v4185
        %v4187 = vpop.xlane.xlu0 %4186
        %v4188 = vsel %vm4168, %v4181, 0.0
        %4189 = vadd.xlane.f32.xlu0 %v4188
        %v4190 = vpop.xlane.xlu0 %4189
        %v4191 = vmul.f32 %v4184, %v4172
        %v4192 = vmul.f32 %v4187, %v4172
        %v4193 = vmul.f32 %v4190, %v4172
        %v4194 = vadd.f32 %v4191, 1e-05
        %v4195 = vadd.f32 %v4192, 1e-05
        %v4196 = vadd.f32 %v4193, 1e-05
        %v4197 = vrsqrt.pop %v4194
        %v4198 = vrsqrt.pop %v4195
        %v4199 = vrsqrt.pop %v4196
        %v4200 = vmul.f32 %v4176, %v4197
        %v4201 = vmul.f32 %v4177, %v4198
        %v4202 = vmul.f32 %v4178, %v4199
        %v4203 = vlaneseq
        %v4204 = vshrl.u32 %v4203, 7
        %v4205 = vsub.s32 0, %v4204
        %v4206 = vrot.slane %v4160, %v4205
        %v4207 = vmul.f32 %v4200, %v4206
        %v4208 = vmul.f32 %v4201, %v4206
        %v4209 = vmul.f32 %v4202, %v4206
        %v4210 = vlaneseq
        %v4211 = vshrl.u32 %v4210, 7
        %v4212 = vsub.s32 0, %v4211
        %v4213 = vrot.slane %v4161, %v4212
        %v4214 = vadd.f32 %v4207, %v4213
        %v4215 = vadd.f32 %v4208, %v4213
        %v4216 = vadd.f32 %v4209, %v4213
        %v4217 = vld [vmem:[%s3 + $0x250] sm:$0xf]
        %v4218 = vld [vmem:[%s3 + $0x254] sm:$0xf]
        %v4219 = vld [vmem:[%s3 + $0x258] sm:$0xf]
        %v4220 = vld [vmem:[%s3 + $0x25c] sm:$0xf]
        %v4221 = vpack.c.bf16 %v4215, %v4214
        %v4222 = vpack.c.bf16 %v4216, %v4216
        %v4223 = vld [vmem:[%s5 + $0xf] sm:$0x1]
        %v4224 = vlaneseq
        %v4225 = vshrl.u32 %v4224, 7
        %v4226 = vsub.s32 0, %v4225
        %v4227 = vrot.slane %v4223, %v4226
        %v4232 = vunpack.c.l.b16 %v4217
        %v4233 = vunpack.c.l.b16 %v4218
        %v4234 = vunpack.c.l.b16 %v4219
        %v4235 = vunpack.c.l.b16 %v4220
        %v4236 = vpack.c.b16 %v4233, %v4232
        %v4237 = vpack.c.b16 %v4235, %v4234
        %v4241 = vsel %vm798, %v4221, 0
        %v4244 = vsel %vm798, %v4222, 0
        %4246 = vmatprep.subr.bf16.mxu0 0
        %4247 = vmatpush1.bf16.msra.mxu0 %v4236
        %4248 = vmatprep.subr.bf16.mxu0 0
        %4249 = vmatpush1.bf16.msra.mxu0 %v4237
        %4250 = vmatprep.subr.bf16.mxu0 0
        %4251 = vmatpush1.bf16.msra.mxu0 0
        %4252 = vmatprep.subr.bf16.mxu0 0
        %4253 = vmatpush1.bf16.msra.mxu0 0
        %4254 = vmatprep.subr.bf16.mxu0 0
        %4255 = vmatpush1.bf16.msra.mxu0 0
        %4256 = vmatprep.subr.bf16.mxu0 0
        %4257 = vmatpush1.bf16.msra.mxu0 0
        %4258 = vmatprep.subr.bf16.mxu0 0
        %4259 = vmatpush1.bf16.msra.mxu0 0
        %4260 = vmatprep.subr.bf16.mxu0 0
        %4261 = vmatpush1.bf16.msra.mxu0 0
        %4262 = vmatprep.subr.bf16.mxu0 0
        %4263 = vmatpush1.bf16.msra.mxu0 0
        %4264 = vmatprep.subr.bf16.mxu0 0
        %4265 = vmatpush1.bf16.msra.mxu0 0
        %4266 = vmatprep.subr.bf16.mxu0 0
        %4267 = vmatpush1.bf16.msra.mxu0 0
        %4268 = vmatprep.subr.bf16.mxu0 0
        %4269 = vmatpush1.bf16.msra.mxu0 0
        %4270 = vmatprep.subr.bf16.mxu0 0
        %4271 = vmatpush1.bf16.msra.mxu0 0
        %4272 = vmatprep.subr.bf16.mxu0 0
        %4273 = vmatpush1.bf16.msra.mxu0 0
        %4274 = vmatprep.subr.bf16.mxu0 0
        %4275 = vmatpush1.bf16.msra.mxu0 0
        %4276 = vmatprep.subr.bf16.mxu0 0
        %4277 = vmatpush1.bf16.msra.mxu0 0
        %4278 = vmatprep.mubr.bf16.mxu0 0
        %4279 = vmatmul.mubr.bf16.gmra.mrb[0].mxu0 %v4241
        %v4280 = vpop.f32.mrb[0].mxu0
        %v4281 = vadd.f32 %v4227, %v4280
        %v4282 = vpop.f32.mrb[0].mxu0
        %v4283 = vpop.f32.mrb[0].mxu0
        %v4284 = vadd.f32 %v4227, %v4283
        %v4285 = vpop.f32.mrb[0].mxu0
        %4286 = vmatprep.mubr.bf16.mxu0 0
        %4287 = vmatmul.mubr.bf16.gmra.mrb[0].mxu0 %v4244
        %v4288 = vpop.f32.mrb[0].mxu0
        %v4289 = vadd.f32 %v4227, %v4288
        %v4290 = vpop.f32.mrb[0].mxu0
        %v4291 = vpop.f32.mrb[0].mxu0
        %v4292 = vpop.f32.mrb[0].mxu0
        %4293 = vdwg.mxu0
        %v4294 = vmax.f32 %v4281, 0.0
        %v4295 = vmax.f32 %v4284, 0.0
        %v4296 = vmax.f32 %v4289, 0.0
        %v4297 = vld [vmem:[%s2 + $0xe0] sm:$0xf]
        %v4298 = vld [vmem:[%s2 + $0xe4] sm:$0xf]
        %v4299 = vld [vmem:[%s2 + $0xe8] sm:$0xf]
        %v4300 = vld [vmem:[%s2 + $0xec] sm:$0xf]
        %v4301 = vld [vmem:[%s2 + $0xf0] sm:$0xf]
        %v4302 = vld [vmem:[%s2 + $0xf4] sm:$0xf]
        %v4303 = vld [vmem:[%s2 + $0xf8] sm:$0xf]
        %v4304 = vld [vmem:[%s2 + $0xfc] sm:$0xf]
        %v4305 = vpack.c.bf16 %v4295, %v4294
        %v4306 = vpack.c.bf16 %v4296, %v4296
        %v4307 = vld [vmem:[%s5 + $0x11] sm:$0x1]
        %v4308 = vlaneseq
        %v4309 = vshrl.u32 %v4308, 7
        %v4310 = vsub.s32 0, %v4309
        %v4311 = vrot.slane %v4307, %v4310
        %v4320 = vunpack.c.l.b16 %v4297
        %v4321 = vunpack.c.l.b16 %v4298
        %v4322 = vunpack.c.l.b16 %v4299
        %v4323 = vunpack.c.l.b16 %v4300
        %v4324 = vunpack.c.l.b16 %v4301
        %v4325 = vunpack.c.l.b16 %v4302
        %v4326 = vunpack.c.l.b16 %v4303
        %v4327 = vunpack.c.l.b16 %v4304
        %v4328 = vpack.c.b16 %v4321, %v4320
        %v4329 = vpack.c.b16 %v4323, %v4322
        %v4330 = vpack.c.b16 %v4325, %v4324
        %v4331 = vpack.c.b16 %v4327, %v4326
        %v4337 = vsel %vm2469, %v4305, 0
        %v4340 = vsel %vm2469, %v4306, 0
        %4342 = vmatprep.subr.bf16.mxu0 0
        %4343 = vmatpush1.bf16.msra.mxu0 %v4328
        %4344 = vmatprep.subr.bf16.mxu0 0
        %4345 = vmatpush1.bf16.msra.mxu0 %v4329
        %4346 = vmatprep.subr.bf16.mxu0 0
        %4347 = vmatpush1.bf16.msra.mxu0 %v4330
        %4348 = vmatprep.subr.bf16.mxu0 0
        %4349 = vmatpush1.bf16.msra.mxu0 %v4331
        %4350 = vmatprep.subr.bf16.mxu0 0
        %4351 = vmatpush1.bf16.msra.mxu0 0
        %4352 = vmatprep.subr.bf16.mxu0 0
        %4353 = vmatpush1.bf16.msra.mxu0 0
        %4354 = vmatprep.subr.bf16.mxu0 0
        %4355 = vmatpush1.bf16.msra.mxu0 0
        %4356 = vmatprep.subr.bf16.mxu0 0
        %4357 = vmatpush1.bf16.msra.mxu0 0
        %4358 = vmatprep.subr.bf16.mxu0 0
        %4359 = vmatpush1.bf16.msra.mxu0 0
        %4360 = vmatprep.subr.bf16.mxu0 0
        %4361 = vmatpush1.bf16.msra.mxu0 0
        %4362 = vmatprep.subr.bf16.mxu0 0
        %4363 = vmatpush1.bf16.msra.mxu0 0
        %4364 = vmatprep.subr.bf16.mxu0 0
        %4365 = vmatpush1.bf16.msra.mxu0 0
        %4366 = vmatprep.subr.bf16.mxu0 0
        %4367 = vmatpush1.bf16.msra.mxu0 0
        %4368 = vmatprep.subr.bf16.mxu0 0
        %4369 = vmatpush1.bf16.msra.mxu0 0
        %4370 = vmatprep.subr.bf16.mxu0 0
        %4371 = vmatpush1.bf16.msra.mxu0 0
        %4372 = vmatprep.subr.bf16.mxu0 0
        %4373 = vmatpush1.bf16.msra.mxu0 0
        %4374 = vmatprep.mubr.bf16.mxu0 0
        %4375 = vmatmul.mubr.bf16.gmra.mrb[0].mxu0 %v4337
        %v4376 = vpop.f32.mrb[0].mxu0
        %v4377 = vadd.f32 %v4311, %v4376
        %v4378 = vpop.f32.mrb[0].mxu0
        %v4379 = vpop.f32.mrb[0].mxu0
        %v4380 = vadd.f32 %v4311, %v4379
        %v4381 = vpop.f32.mrb[0].mxu0
        %4382 = vmatprep.mubr.bf16.mxu0 0
        %4383 = vmatmul.mubr.bf16.gmra.mrb[0].mxu0 %v4340
        %v4384 = vpop.f32.mrb[0].mxu0
        %v4385 = vadd.f32 %v4311, %v4384
        %v4386 = vpop.f32.mrb[0].mxu0
        %v4387 = vpop.f32.mrb[0].mxu0
        %v4388 = vpop.f32.mrb[0].mxu0
        %4389 = vdwg.mxu0
        %v4390 = vadd.f32 %v4214, %v4377
        %v4391 = vadd.f32 %v4215, %v4380
        %v4392 = vadd.f32 %v4216, %v4385
        %v4393 = vld [vmem:[%s5 + $0x13] sm:$0x1]
        %v4394 = vld [vmem:[%s5 + $0x15] sm:$0x1]
        %v4395 = vsel %vm798, %v4390, 0.0
        %4396 = vadd.xlane.f32.xlu0 %v4395
        %v4397 = vpop.xlane.xlu0 %4396
        %v4398 = vsel %vm798, %v4391, 0.0
        %4399 = vadd.xlane.f32.xlu0 %v4398
        %v4400 = vpop.xlane.xlu0 %4399
        %v4401 = vsel %vm4168, %v4392, 0.0
        %4402 = vadd.xlane.f32.xlu0 %v4401
        %v4403 = vpop.xlane.xlu0 %4402
        %v4404 = vmul.f32 %v4397, %v4172
        %v4405 = vmul.f32 %v4400, %v4172
        %v4406 = vmul.f32 %v4403, %v4172
        %v4407 = vsub.f32 %v4390, %v4404
        %v4408 = vsub.f32 %v4391, %v4405
        %v4409 = vsub.f32 %v4392, %v4406
        %v4410 = vmul.f32 %v4407, %v4407
        %v4411 = vmul.f32 %v4408, %v4408
        %v4412 = vmul.f32 %v4409, %v4409
        %v4413 = vsel %vm798, %v4410, 0.0
        %4414 = vadd.xlane.f32.xlu0 %v4413
        %v4415 = vpop.xlane.xlu0 %4414
        %v4416 = vsel %vm798, %v4411, 0.0
        %4417 = vadd.xlane.f32.xlu0 %v4416
        %v4418 = vpop.xlane.xlu0 %4417
        %v4419 = vsel %vm4168, %v4412, 0.0
        %4420 = vadd.xlane.f32.xlu0 %v4419
        %v4421 = vpop.xlane.xlu0 %4420
        %v4422 = vmul.f32 %v4415, %v4172
        %v4423 = vmul.f32 %v4418, %v4172
        %v4424 = vmul.f32 %v4421, %v4172
        %v4425 = vadd.f32 %v4422, 1e-05
        %v4426 = vadd.f32 %v4423, 1e-05
        %v4427 = vadd.f32 %v4424, 1e-05
        %v4428 = vrsqrt.pop %v4425
        %v4429 = vrsqrt.pop %v4426
        %v4430 = vrsqrt.pop %v4427
        %v4431 = vmul.f32 %v4407, %v4428
        %v4432 = vmul.f32 %v4408, %v4429
        %v4433 = vmul.f32 %v4409, %v4430
        %v4434 = vlaneseq
        %v4435 = vshrl.u32 %v4434, 7
        %v4436 = vsub.s32 0, %v4435
        %v4437 = vrot.slane %v4393, %v4436
        %v4438 = vmul.f32 %v4431, %v4437
        %v4439 = vmul.f32 %v4432, %v4437
        %v4440 = vmul.f32 %v4433, %v4437
        %v4441 = vlaneseq
        %v4442 = vshrl.u32 %v4441, 7
        %v4443 = vsub.s32 0, %v4442
        %v4444 = vrot.slane %v4394, %v4443
        %v4445 = vadd.f32 %v4438, %v4444
        %v4446 = vadd.f32 %v4439, %v4444
        %v4447 = vadd.f32 %v4440, %v4444
        %v4448 = vld [vmem:[%s4 + $0x10] sm:$0xf]
        %v4449 = vld [vmem:[%s4 + $0x14] sm:$0xf]
        %v4450 = vld [vmem:[%s4 + $0x18] sm:$0xf]
        %v4451 = vld [vmem:[%s4 + $0x1c] sm:$0xf]
        %v4452 = vpack.c.bf16 %v4446, %v4445
        %v4453 = vpack.c.bf16 %v4447, %v4447
        %v4454 = vld [vmem:[%s5 + $0x8] sm:$0x1]
        %v4455 = vlaneseq
        %v4456 = vshrl.u32 %v4455, 7
        %v4457 = vsub.s32 0, %v4456
        %v4458 = vrot.slane %v4454, %v4457
        %v4463 = vunpack.c.l.b16 %v4448
        %v4464 = vunpack.c.l.b16 %v4449
        %v4465 = vunpack.c.l.b16 %v4450
        %v4466 = vunpack.c.l.b16 %v4451
        %v4467 = vpack.c.b16 %v4464, %v4463
        %v4468 = vpack.c.b16 %v4466, %v4465
        %v4472 = vsel %vm798, %v4452, 0
        %v4475 = vsel %vm798, %v4453, 0
        %4477 = vmatprep.subr.bf16.mxu0 0
        %4478 = vmatpush1.bf16.msra.mxu0 %v4467
        %4479 = vmatprep.subr.bf16.mxu0 0
        %4480 = vmatpush1.bf16.msra.mxu0 %v4468
        %4481 = vmatprep.subr.bf16.mxu0 0
        %4482 = vmatpush1.bf16.msra.mxu0 0
        %4483 = vmatprep.subr.bf16.mxu0 0
        %4484 = vmatpush1.bf16.msra.mxu0 0
        %4485 = vmatprep.subr.bf16.mxu0 0
        %4486 = vmatpush1.bf16.msra.mxu0 0
        %4487 = vmatprep.subr.bf16.mxu0 0
        %4488 = vmatpush1.bf16.msra.mxu0 0
        %4489 = vmatprep.subr.bf16.mxu0 0
        %4490 = vmatpush1.bf16.msra.mxu0 0
        %4491 = vmatprep.subr.bf16.mxu0 0
        %4492 = vmatpush1.bf16.msra.mxu0 0
        %4493 = vmatprep.subr.bf16.mxu0 0
        %4494 = vmatpush1.bf16.msra.mxu0 0
        %4495 = vmatprep.subr.bf16.mxu0 0
        %4496 = vmatpush1.bf16.msra.mxu0 0
        %4497 = vmatprep.subr.bf16.mxu0 0
        %4498 = vmatpush1.bf16.msra.mxu0 0
        %4499 = vmatprep.subr.bf16.mxu0 0
        %4500 = vmatpush1.bf16.msra.mxu0 0
        %4501 = vmatprep.subr.bf16.mxu0 0
        %4502 = vmatpush1.bf16.msra.mxu0 0
        %4503 = vmatprep.subr.bf16.mxu0 0
        %4504 = vmatpush1.bf16.msra.mxu0 0
        %4505 = vmatprep.subr.bf16.mxu0 0
        %4506 = vmatpush1.bf16.msra.mxu0 0
        %4507 = vmatprep.subr.bf16.mxu0 0
        %4508 = vmatpush1.bf16.msra.mxu0 0
        %4509 = vmatprep.mubr.bf16.mxu0 0
        %4510 = vmatmul.mubr.bf16.gmra.mrb[0].mxu0 %v4472
        %v4511 = vpop.f32.mrb[0].mxu0
        %v4512 = vadd.f32 %v4458, %v4511
        %v4513 = vpop.f32.mrb[0].mxu0
        %v4514 = vpop.f32.mrb[0].mxu0
        %v4515 = vadd.f32 %v4458, %v4514
        %v4516 = vpop.f32.mrb[0].mxu0
        %4517 = vmatprep.mubr.bf16.mxu0 0
        %4518 = vmatmul.mubr.bf16.gmra.mrb[0].mxu0 %v4475
        %v4519 = vpop.f32.mrb[0].mxu0
        %v4520 = vadd.f32 %v4458, %v4519
        %v4521 = vpop.f32.mrb[0].mxu0
        %v4522 = vpop.f32.mrb[0].mxu0
        %v4523 = vpop.f32.mrb[0].mxu0
        %4524 = vdwg.mxu0
        %v4525 = vpack.c.bf16 %v4515, %v4512
        %v4526 = vpack.c.bf16 %v4520, %v4520
        %4529 = vrot.lane.b32.xlu0 %v4525, 96
        %v4530 = vpop.permute.xlu0 %4529
        %4531 = vrot.lane.b32.xlu0 %v4526, 96
        %v4532 = vpop.permute.xlu0 %4531
        %v4534 = vsel %vm3731, %v4525, 0
        %v4537 = vsel %vm3731, %v4526, 0
        %v4540 = vsel %vm3731, %v4530, 0
        %v4543 = vsel %vm3731, %v4532, 0
        %4545 = vmatprep.subr.bf16.mxu0 0
        %4546 = vmatpush1.bf16.xpose.msra.mxu0 %v4540
        %4547 = vmatprep.subr.bf16.mxu0 0
        %4548 = vmatpush1.bf16.xpose.msra.mxu0 %v4543
        %4549 = vmatprep.subr.bf16.mxu0 0
        %4550 = vmatpush1.bf16.xpose.msra.mxu0 0
        %4551 = vmatprep.subr.bf16.mxu0 0
        %4552 = vmatpush1.bf16.xpose.msra.mxu0 0
        %4553 = vmatprep.subr.bf16.mxu0 0
        %4554 = vmatpush1.bf16.xpose.msra.mxu0 0
        %4555 = vmatprep.subr.bf16.mxu0 0
        %4556 = vmatpush1.bf16.xpose.msra.mxu0 0
        %4557 = vmatprep.subr.bf16.mxu0 0
        %4558 = vmatpush1.bf16.xpose.msra.mxu0 0
        %4559 = vmatprep.subr.bf16.mxu0 0
        %4560 = vmatpush1.bf16.xpose.msra.mxu0 0
        %4561 = vmatprep.subr.bf16.mxu0 0
        %4562 = vmatpush1.bf16.xpose.msra.mxu0 0
        %4563 = vmatprep.subr.bf16.mxu0 0
        %4564 = vmatpush1.bf16.xpose.msra.mxu0 0
        %4565 = vmatprep.subr.bf16.mxu0 0
        %4566 = vmatpush1.bf16.xpose.msra.mxu0 0
        %4567 = vmatprep.subr.bf16.mxu0 0
        %4568 = vmatpush1.bf16.xpose.msra.mxu0 0
        %4569 = vmatprep.subr.bf16.mxu0 0
        %4570 = vmatpush1.bf16.xpose.msra.mxu0 0
        %4571 = vmatprep.subr.bf16.mxu0 0
        %4572 = vmatpush1.bf16.xpose.msra.mxu0 0
        %4573 = vmatprep.subr.bf16.mxu0 0
        %4574 = vmatpush1.bf16.xpose.msra.mxu0 0
        %4575 = vmatprep.subr.bf16.mxu0 0
        %4576 = vmatpush1.bf16.xpose.msra.mxu0 0
        %4577 = vmatprep.mubr.bf16.mxu0 0
        %4578 = vmatmul.mubr.bf16.gmra.mrb[0].mxu0 %v4534
        %v4579 = vpop.f32.mrb[0].mxu0
        %v4580 = vadd.f32 0.0, %v4579
        %v4581 = vpop.f32.mrb[0].mxu0
        %v4582 = vpop.f32.mrb[0].mxu0
        %v4583 = vadd.f32 0.0, %v4582
        %v4584 = vpop.f32.mrb[0].mxu0
        %4585 = vmatprep.mubr.bf16.mxu0 0
        %4586 = vmatmul.mubr.bf16.gmra.mrb[0].mxu0 %v4537
        %v4587 = vpop.f32.mrb[0].mxu0
        %v4588 = vadd.f32 0.0, %v4587
        %v4589 = vpop.f32.mrb[0].mxu0
        %v4590 = vpop.f32.mrb[0].mxu0
        %v4591 = vpop.f32.mrb[0].mxu0
        %4592 = vdwg.mxu0
        %v4593 = vmul.f32 %v4580, 0.25
        %v4594 = vmul.f32 %v4583, 0.25
        %v4595 = vmul.f32 %v4588, 0.25
        %v4596 = vsel %vm3795, %v4593, -inf
        %4597 = vmax.xlane.f32.xlu0 %v4596
        %v4598 = vpop.xlane.xlu0 %4597
        %v4599 = vsel %vm3795, %v4594, -inf
        %4600 = vmax.xlane.f32.xlu0 %v4599
        %v4601 = vpop.xlane.xlu0 %4600
        %v4602 = vsel %vm3802, %v4595, -inf
        %4603 = vmax.xlane.f32.xlu0 %v4602
        %v4604 = vpop.xlane.xlu0 %4603
        %v4605 = vsub.f32 %v4593, %v4598
        %v4606 = vsub.f32 %v4594, %v4601
        %v4607 = vsub.f32 %v4595, %v4604
        %v4608 = vmul.f32 %v4605, 1.442695
        %v4609 = vpow.pop %v4608
        %v4610 = vmul.f32 %v4606, 1.442695
        %v4611 = vpow.pop %v4610
        %v4612 = vmul.f32 %v4607, 1.442695
        %v4613 = vpow.pop %v4612
        %v4614 = vsel %vm3795, %v4609, 0.0
        %4615 = vadd.xlane.f32.xlu0 %v4614
        %v4616 = vpop.xlane.xlu0 %4615
        %v4617 = vsel %vm3795, %v4611, 0.0
        %4618 = vadd.xlane.f32.xlu0 %v4617
        %v4619 = vpop.xlane.xlu0 %4618
        %v4620 = vsel %vm3802, %v4613, 0.0
        %4621 = vadd.xlane.f32.xlu0 %v4620
        %v4622 = vpop.xlane.xlu0 %4621
        %v4623 = vrcp.pop %v4616
        %v4624 = vrcp.pop %v4619
        %v4625 = vrcp.pop %v4622
        %v4626 = vmul.f32 %v4609, %v4623
        %v4627 = vmul.f32 %v4611, %v4624
        %v4628 = vmul.f32 %v4613, %v4625
        %v4629 = vpack.c.bf16 %v4627, %v4626
        %v4630 = vpack.c.bf16 %v4628, %v4628
        %4631 = vrot.lane.b32.xlu0 %v4525, 64
        %v4632 = vpop.permute.xlu0 %4631
        %4633 = vrot.lane.b32.xlu0 %v4526, 64
        %v4634 = vpop.permute.xlu0 %4633
        %v4637 = vsel %vm3795, %v4629, 0
        %v4640 = vsel %vm3795, %v4630, 0
        %v4643 = vand.u32 %v4634, %v3845
        %4645 = vmatprep.subr.bf16.mxu0 0
        %4646 = vmatpush1.bf16.msra.mxu0 %v4632
        %4647 = vmatprep.subr.bf16.mxu0 0
        %4648 = vmatpush1.bf16.msra.mxu0 %v4643
        %4649 = vmatprep.subr.bf16.mxu0 0
        %4650 = vmatpush1.bf16.msra.mxu0 0
        %4651 = vmatprep.subr.bf16.mxu0 0
        %4652 = vmatpush1.bf16.msra.mxu0 0
        %4653 = vmatprep.subr.bf16.mxu0 0
        %4654 = vmatpush1.bf16.msra.mxu0 0
        %4655 = vmatprep.subr.bf16.mxu0 0
        %4656 = vmatpush1.bf16.msra.mxu0 0
        %4657 = vmatprep.subr.bf16.mxu0 0
        %4658 = vmatpush1.bf16.msra.mxu0 0
        %4659 = vmatprep.subr.bf16.mxu0 0
        %4660 = vmatpush1.bf16.msra.mxu0 0
        %4661 = vmatprep.subr.bf16.mxu0 0
        %4662 = vmatpush1.bf16.msra.mxu0 0
        %4663 = vmatprep.subr.bf16.mxu0 0
        %4664 = vmatpush1.bf16.msra.mxu0 0
        %4665 = vmatprep.subr.bf16.mxu0 0
        %4666 = vmatpush1.bf16.msra.mxu0 0
        %4667 = vmatprep.subr.bf16.mxu0 0
        %4668 = vmatpush1.bf16.msra.mxu0 0
        %4669 = vmatprep.subr.bf16.mxu0 0
        %4670 = vmatpush1.bf16.msra.mxu0 0
        %4671 = vmatprep.subr.bf16.mxu0 0
        %4672 = vmatpush1.bf16.msra.mxu0 0
        %4673 = vmatprep.subr.bf16.mxu0 0
        %4674 = vmatpush1.bf16.msra.mxu0 0
        %4675 = vmatprep.subr.bf16.mxu0 0
        %4676 = vmatpush1.bf16.msra.mxu0 0
        %4677 = vmatprep.mubr.bf16.mxu0 0
        %4678 = vmatmul.mubr.bf16.gmra.mrb[0].mxu0 %v4637
        %v4679 = vpop.f32.mrb[0].mxu0
        %v4680 = vadd.f32 0.0, %v4679
        %v4681 = vpop.f32.mrb[0].mxu0
        %v4682 = vpop.f32.mrb[0].mxu0
        %v4683 = vadd.f32 0.0, %v4682
        %v4684 = vpop.f32.mrb[0].mxu0
        %4685 = vmatprep.mubr.bf16.mxu0 0
        %4686 = vmatmul.mubr.bf16.gmra.mrb[0].mxu0 %v4640
        %v4687 = vpop.f32.mrb[0].mxu0
        %v4688 = vadd.f32 0.0, %v4687
        %v4689 = vpop.f32.mrb[0].mxu0
        %v4690 = vpop.f32.mrb[0].mxu0
        %v4691 = vpop.f32.mrb[0].mxu0
        %4692 = vdwg.mxu0
        %4693 = vrot.lane.b32.xlu0 %v4525, 112
        %v4694 = vpop.permute.xlu0 %4693
        %4695 = vrot.lane.b32.xlu0 %v4526, 112
        %v4696 = vpop.permute.xlu0 %4695
        %4697 = vrot.lane.b32.xlu0 %v4525, 80
        %v4698 = vpop.permute.xlu0 %4697
        %4699 = vrot.lane.b32.xlu0 %v4526, 80
        %v4700 = vpop.permute.xlu0 %4699
        %v4702 = vsel %vm3731, %v4694, 0
        %v4705 = vsel %vm3731, %v4696, 0
        %v4708 = vsel %vm3731, %v4698, 0
        %v4711 = vsel %vm3731, %v4700, 0
        %4713 = vmatprep.subr.bf16.mxu0 0
        %4714 = vmatpush1.bf16.xpose.msra.mxu0 %v4708
        %4715 = vmatprep.subr.bf16.mxu0 0
        %4716 = vmatpush1.bf16.xpose.msra.mxu0 %v4711
        %4717 = vmatprep.subr.bf16.mxu0 0
        %4718 = vmatpush1.bf16.xpose.msra.mxu0 0
        %4719 = vmatprep.subr.bf16.mxu0 0
        %4720 = vmatpush1.bf16.xpose.msra.mxu0 0
        %4721 = vmatprep.subr.bf16.mxu0 0
        %4722 = vmatpush1.bf16.xpose.msra.mxu0 0
        %4723 = vmatprep.subr.bf16.mxu0 0
        %4724 = vmatpush1.bf16.xpose.msra.mxu0 0
        %4725 = vmatprep.subr.bf16.mxu0 0
        %4726 = vmatpush1.bf16.xpose.msra.mxu0 0
        %4727 = vmatprep.subr.bf16.mxu0 0
        %4728 = vmatpush1.bf16.xpose.msra.mxu0 0
        %4729 = vmatprep.subr.bf16.mxu0 0
        %4730 = vmatpush1.bf16.xpose.msra.mxu0 0
        %4731 = vmatprep.subr.bf16.mxu0 0
        %4732 = vmatpush1.bf16.xpose.msra.mxu0 0
        %4733 = vmatprep.subr.bf16.mxu0 0
        %4734 = vmatpush1.bf16.xpose.msra.mxu0 0
        %4735 = vmatprep.subr.bf16.mxu0 0
        %4736 = vmatpush1.bf16.xpose.msra.mxu0 0
        %4737 = vmatprep.subr.bf16.mxu0 0
        %4738 = vmatpush1.bf16.xpose.msra.mxu0 0
        %4739 = vmatprep.subr.bf16.mxu0 0
        %4740 = vmatpush1.bf16.xpose.msra.mxu0 0
        %4741 = vmatprep.subr.bf16.mxu0 0
        %4742 = vmatpush1.bf16.xpose.msra.mxu0 0
        %4743 = vmatprep.subr.bf16.mxu0 0
        %4744 = vmatpush1.bf16.xpose.msra.mxu0 0
        %4745 = vmatprep.mubr.bf16.mxu0 0
        %4746 = vmatmul.mubr.bf16.gmra.mrb[0].mxu0 %v4702
        %v4747 = vpop.f32.mrb[0].mxu0
        %v4748 = vadd.f32 0.0, %v4747
        %v4749 = vpop.f32.mrb[0].mxu0
        %v4750 = vpop.f32.mrb[0].mxu0
        %v4751 = vadd.f32 0.0, %v4750
        %v4752 = vpop.f32.mrb[0].mxu0
        %4753 = vmatprep.mubr.bf16.mxu0 0
        %4754 = vmatmul.mubr.bf16.gmra.mrb[0].mxu0 %v4705
        %v4755 = vpop.f32.mrb[0].mxu0
        %v4756 = vadd.f32 0.0, %v4755
        %v4757 = vpop.f32.mrb[0].mxu0
        %v4758 = vpop.f32.mrb[0].mxu0
        %v4759 = vpop.f32.mrb[0].mxu0
        %4760 = vdwg.mxu0
        %v4761 = vmul.f32 %v4748, 0.25
        %v4762 = vmul.f32 %v4751, 0.25
        %v4763 = vmul.f32 %v4756, 0.25
        %v4764 = vsel %vm3795, %v4761, -inf
        %4765 = vmax.xlane.f32.xlu0 %v4764
        %v4766 = vpop.xlane.xlu0 %4765
        %v4767 = vsel %vm3795, %v4762, -inf
        %4768 = vmax.xlane.f32.xlu0 %v4767
        %v4769 = vpop.xlane.xlu0 %4768
        %v4770 = vsel %vm3802, %v4763, -inf
        %4771 = vmax.xlane.f32.xlu0 %v4770
        %v4772 = vpop.xlane.xlu0 %4771
        %v4773 = vsub.f32 %v4761, %v4766
        %v4774 = vsub.f32 %v4762, %v4769
        %v4775 = vsub.f32 %v4763, %v4772
        %v4776 = vmul.f32 %v4773, 1.442695
        %v4777 = vpow.pop %v4776
        %v4778 = vmul.f32 %v4774, 1.442695
        %v4779 = vpow.pop %v4778
        %v4780 = vmul.f32 %v4775, 1.442695
        %v4781 = vpow.pop %v4780
        %v4782 = vsel %vm3795, %v4777, 0.0
        %4783 = vadd.xlane.f32.xlu0 %v4782
        %v4784 = vpop.xlane.xlu0 %4783
        %v4785 = vsel %vm3795, %v4779, 0.0
        %4786 = vadd.xlane.f32.xlu0 %v4785
        %v4787 = vpop.xlane.xlu0 %4786
        %v4788 = vsel %vm3802, %v4781, 0.0
        %4789 = vadd.xlane.f32.xlu0 %v4788
        %v4790 = vpop.xlane.xlu0 %4789
        %v4791 = vrcp.pop %v4784
        %v4792 = vrcp.pop %v4787
        %v4793 = vrcp.pop %v4790
        %v4794 = vmul.f32 %v4777, %v4791
        %v4795 = vmul.f32 %v4779, %v4792
        %v4796 = vmul.f32 %v4781, %v4793
        %v4797 = vpack.c.bf16 %v4795, %v4794
        %v4798 = vpack.c.bf16 %v4796, %v4796
        %4799 = vrot.lane.b32.xlu0 %v4525, 48
        %v4800 = vpop.permute.xlu0 %4799
        %4801 = vrot.lane.b32.xlu0 %v4526, 48
        %v4802 = vpop.permute.xlu0 %4801
        %v4805 = vsel %vm3795, %v4797, 0
        %v4808 = vsel %vm3795, %v4798, 0
        %v4811 = vand.u32 %v4802, %v3845
        %4813 = vmatprep.subr.bf16.mxu0 0
        %4814 = vmatpush1.bf16.msra.mxu0 %v4800
        %4815 = vmatprep.subr.bf16.mxu0 0
        %4816 = vmatpush1.bf16.msra.mxu0 %v4811
        %4817 = vmatprep.subr.bf16.mxu0 0
        %4818 = vmatpush1.bf16.msra.mxu0 0
        %4819 = vmatprep.subr.bf16.mxu0 0
        %4820 = vmatpush1.bf16.msra.mxu0 0
        %4821 = vmatprep.subr.bf16.mxu0 0
        %4822 = vmatpush1.bf16.msra.mxu0 0
        %4823 = vmatprep.subr.bf16.mxu0 0
        %4824 = vmatpush1.bf16.msra.mxu0 0
        %4825 = vmatprep.subr.bf16.mxu0 0
        %4826 = vmatpush1.bf16.msra.mxu0 0
        %4827 = vmatprep.subr.bf16.mxu0 0
        %4828 = vmatpush1.bf16.msra.mxu0 0
        %4829 = vmatprep.subr.bf16.mxu0 0
        %4830 = vmatpush1.bf16.msra.mxu0 0
        %4831 = vmatprep.subr.bf16.mxu0 0
        %4832 = vmatpush1.bf16.msra.mxu0 0
        %4833 = vmatprep.subr.bf16.mxu0 0
        %4834 = vmatpush1.bf16.msra.mxu0 0
        %4835 = vmatprep.subr.bf16.mxu0 0
        %4836 = vmatpush1.bf16.msra.mxu0 0
        %4837 = vmatprep.subr.bf16.mxu0 0
        %4838 = vmatpush1.bf16.msra.mxu0 0
        %4839 = vmatprep.subr.bf16.mxu0 0
        %4840 = vmatpush1.bf16.msra.mxu0 0
        %4841 = vmatprep.subr.bf16.mxu0 0
        %4842 = vmatpush1.bf16.msra.mxu0 0
        %4843 = vmatprep.subr.bf16.mxu0 0
        %4844 = vmatpush1.bf16.msra.mxu0 0
        %4845 = vmatprep.mubr.bf16.mxu0 0
        %4846 = vmatmul.mubr.bf16.gmra.mrb[0].mxu0 %v4805
        %v4847 = vpop.f32.mrb[0].mxu0
        %v4848 = vadd.f32 0.0, %v4847
        %v4849 = vpop.f32.mrb[0].mxu0
        %v4850 = vpop.f32.mrb[0].mxu0
        %v4851 = vadd.f32 0.0, %v4850
        %v4852 = vpop.f32.mrb[0].mxu0
        %4853 = vmatprep.mubr.bf16.mxu0 0
        %4854 = vmatmul.mubr.bf16.gmra.mrb[0].mxu0 %v4808
        %v4855 = vpop.f32.mrb[0].mxu0
        %v4856 = vadd.f32 0.0, %v4855
        %v4857 = vpop.f32.mrb[0].mxu0
        %v4858 = vpop.f32.mrb[0].mxu0
        %v4859 = vpop.f32.mrb[0].mxu0
        %4860 = vdwg.mxu0
        %4864 = vrot.lane.b32.xlu0 %v4848, 16
        %v4865 = vpop.permute.xlu0 %4864
        %4866 = vrot.lane.b32.xlu0 %v4851, 16
        %v4867 = vpop.permute.xlu0 %4866
        %4868 = vrot.lane.b32.xlu0 %v4856, 16
        %v4869 = vpop.permute.xlu0 %4868
        %v4873 = vsel %vm3731, %v4680, %v4865
        %v4874 = vsel %vm3731, %v4683, %v4867
        %v4875 = vsel %vm3731, %v4688, %v4869
        %v4876 = vld [vmem:[%s2 + $0xd0] sm:$0xf]
        %v4877 = vld [vmem:[%s2 + $0xd4] sm:$0xf]
        %v4878 = vld [vmem:[%s2 + $0xd8] sm:$0xf]
        %v4879 = vld [vmem:[%s2 + $0xdc] sm:$0xf]
        %v4880 = vpack.c.bf16 %v4874, %v4873
        %v4881 = vpack.c.bf16 %v4875, %v4875
        %v4882 = vld [vmem:[%s5 + $0xa] sm:$0x1]
        %v4883 = vlaneseq
        %v4884 = vshrl.u32 %v4883, 7
        %v4885 = vsub.s32 0, %v4884
        %v4886 = vrot.slane %v4882, %v4885
        %v4891 = vunpack.c.l.b16 %v4876
        %v4892 = vunpack.c.l.b16 %v4877
        %v4893 = vunpack.c.l.b16 %v4878
        %v4894 = vunpack.c.l.b16 %v4879
        %v4895 = vpack.c.b16 %v4892, %v4891
        %v4896 = vpack.c.b16 %v4894, %v4893
        %v4900 = vsel %vm798, %v4880, 0
        %v4903 = vsel %vm798, %v4881, 0
        %4905 = vmatprep.subr.bf16.mxu0 0
        %4906 = vmatpush1.bf16.msra.mxu0 %v4895
        %4907 = vmatprep.subr.bf16.mxu0 0
        %4908 = vmatpush1.bf16.msra.mxu0 %v4896
        %4909 = vmatprep.subr.bf16.mxu0 0
        %4910 = vmatpush1.bf16.msra.mxu0 0
        %4911 = vmatprep.subr.bf16.mxu0 0
        %4912 = vmatpush1.bf16.msra.mxu0 0
        %4913 = vmatprep.subr.bf16.mxu0 0
        %4914 = vmatpush1.bf16.msra.mxu0 0
        %4915 = vmatprep.subr.bf16.mxu0 0
        %4916 = vmatpush1.bf16.msra.mxu0 0
        %4917 = vmatprep.subr.bf16.mxu0 0
        %4918 = vmatpush1.bf16.msra.mxu0 0
        %4919 = vmatprep.subr.bf16.mxu0 0
        %4920 = vmatpush1.bf16.msra.mxu0 0
        %4921 = vmatprep.subr.bf16.mxu0 0
        %4922 = vmatpush1.bf16.msra.mxu0 0
        %4923 = vmatprep.subr.bf16.mxu0 0
        %4924 = vmatpush1.bf16.msra.mxu0 0
        %4925 = vmatprep.subr.bf16.mxu0 0
        %4926 = vmatpush1.bf16.msra.mxu0 0
        %4927 = vmatprep.subr.bf16.mxu0 0
        %4928 = vmatpush1.bf16.msra.mxu0 0
        %4929 = vmatprep.subr.bf16.mxu0 0
        %4930 = vmatpush1.bf16.msra.mxu0 0
        %4931 = vmatprep.subr.bf16.mxu0 0
        %4932 = vmatpush1.bf16.msra.mxu0 0
        %4933 = vmatprep.subr.bf16.mxu0 0
        %4934 = vmatpush1.bf16.msra.mxu0 0
        %4935 = vmatprep.subr.bf16.mxu0 0
        %4936 = vmatpush1.bf16.msra.mxu0 0
        %4937 = vmatprep.mubr.bf16.mxu0 0
        %4938 = vmatmul.mubr.bf16.gmra.mrb[0].mxu0 %v4900
        %v4939 = vpop.f32.mrb[0].mxu0
        %v4940 = vadd.f32 %v4886, %v4939
        %v4941 = vpop.f32.mrb[0].mxu0
        %v4942 = vpop.f32.mrb[0].mxu0
        %v4943 = vadd.f32 %v4886, %v4942
        %v4944 = vpop.f32.mrb[0].mxu0
        %4945 = vmatprep.mubr.bf16.mxu0 0
        %4946 = vmatmul.mubr.bf16.gmra.mrb[0].mxu0 %v4903
        %v4947 = vpop.f32.mrb[0].mxu0
        %v4948 = vadd.f32 %v4886, %v4947
        %v4949 = vpop.f32.mrb[0].mxu0
        %v4950 = vpop.f32.mrb[0].mxu0
        %v4951 = vpop.f32.mrb[0].mxu0
        %4952 = vdwg.mxu0
        %v4953 = vadd.f32 %v4445, %v4940
        %v4954 = vadd.f32 %v4446, %v4943
        %v4955 = vadd.f32 %v4447, %v4948
        %v4956 = vld [vmem:[%s5 + $0xc] sm:$0x1]
        %v4957 = vld [vmem:[%s5 + $0xe] sm:$0x1]
        %v4958 = vsel %vm798, %v4953, 0.0
        %4959 = vadd.xlane.f32.xlu0 %v4958
        %v4960 = vpop.xlane.xlu0 %4959
        %v4961 = vsel %vm798, %v4954, 0.0
        %4962 = vadd.xlane.f32.xlu0 %v4961
        %v4963 = vpop.xlane.xlu0 %4962
        %v4964 = vsel %vm4168, %v4955, 0.0
        %4965 = vadd.xlane.f32.xlu0 %v4964
        %v4966 = vpop.xlane.xlu0 %4965
        %v4967 = vmul.f32 %v4960, %v4172
        %v4968 = vmul.f32 %v4963, %v4172
        %v4969 = vmul.f32 %v4966, %v4172
        %v4970 = vsub.f32 %v4953, %v4967
        %v4971 = vsub.f32 %v4954, %v4968
        %v4972 = vsub.f32 %v4955, %v4969
        %v4973 = vmul.f32 %v4970, %v4970
        %v4974 = vmul.f32 %v4971, %v4971
        %v4975 = vmul.f32 %v4972, %v4972
        %v4976 = vsel %vm798, %v4973, 0.0
        %4977 = vadd.xlane.f32.xlu0 %v4976
        %v4978 = vpop.xlane.xlu0 %4977
        %v4979 = vsel %vm798, %v4974, 0.0
        %4980 = vadd.xlane.f32.xlu0 %v4979
        %v4981 = vpop.xlane.xlu0 %4980
        %v4982 = vsel %vm4168, %v4975, 0.0
        %4983 = vadd.xlane.f32.xlu0 %v4982
        %v4984 = vpop.xlane.xlu0 %4983
        %v4985 = vmul.f32 %v4978, %v4172
        %v4986 = vmul.f32 %v4981, %v4172
        %v4987 = vmul.f32 %v4984, %v4172
        %v4988 = vadd.f32 %v4985, 1e-05
        %v4989 = vadd.f32 %v4986, 1e-05
        %v4990 = vadd.f32 %v4987, 1e-05
        %v4991 = vrsqrt.pop %v4988
        %v4992 = vrsqrt.pop %v4989
        %v4993 = vrsqrt.pop %v4990
        %v4994 = vmul.f32 %v4970, %v4991
        %v4995 = vmul.f32 %v4971, %v4992
        %v4996 = vmul.f32 %v4972, %v4993
        %v4997 = vlaneseq
        %v4998 = vshrl.u32 %v4997, 7
        %v4999 = vsub.s32 0, %v4998
        %v5000 = vrot.slane %v4956, %v4999
        %v5001 = vmul.f32 %v4994, %v5000
        %v5002 = vmul.f32 %v4995, %v5000
        %v5003 = vmul.f32 %v4996, %v5000
        %v5004 = vlaneseq
        %v5005 = vshrl.u32 %v5004, 7
        %v5006 = vsub.s32 0, %v5005
        %v5007 = vrot.slane %v4957, %v5006
        %v5008 = vadd.f32 %v5001, %v5007
        %v5009 = vadd.f32 %v5002, %v5007
        %v5010 = vadd.f32 %v5003, %v5007
        %v5011 = vld [vmem:[%s3 + $0x260] sm:$0xf]
        %v5012 = vld [vmem:[%s3 + $0x264] sm:$0xf]
        %v5013 = vld [vmem:[%s3 + $0x268] sm:$0xf]
        %v5014 = vld [vmem:[%s3 + $0x26c] sm:$0xf]
        %v5015 = vpack.c.bf16 %v5009, %v5008
        %v5016 = vpack.c.bf16 %v5010, %v5010
        %v5017 = vld [vmem:[%s5 + $0x10] sm:$0x1]
        %v5018 = vlaneseq
        %v5019 = vshrl.u32 %v5018, 7
        %v5020 = vsub.s32 0, %v5019
        %v5021 = vrot.slane %v5017, %v5020
        %v5026 = vunpack.c.l.b16 %v5011
        %v5027 = vunpack.c.l.b16 %v5012
        %v5028 = vunpack.c.l.b16 %v5013
        %v5029 = vunpack.c.l.b16 %v5014
        %v5030 = vpack.c.b16 %v5027, %v5026
        %v5031 = vpack.c.b16 %v5029, %v5028
        %v5035 = vsel %vm798, %v5015, 0
        %v5038 = vsel %vm798, %v5016, 0
        %5040 = vmatprep.subr.bf16.mxu0 0
        %5041 = vmatpush1.bf16.msra.mxu0 %v5030
        %5042 = vmatprep.subr.bf16.mxu0 0
        %5043 = vmatpush1.bf16.msra.mxu0 %v5031
        %5044 = vmatprep.subr.bf16.mxu0 0
        %5045 = vmatpush1.bf16.msra.mxu0 0
        %5046 = vmatprep.subr.bf16.mxu0 0
        %5047 = vmatpush1.bf16.msra.mxu0 0
        %5048 = vmatprep.subr.bf16.mxu0 0
        %5049 = vmatpush1.bf16.msra.mxu0 0
        %5050 = vmatprep.subr.bf16.mxu0 0
        %5051 = vmatpush1.bf16.msra.mxu0 0
        %5052 = vmatprep.subr.bf16.mxu0 0
        %5053 = vmatpush1.bf16.msra.mxu0 0
        %5054 = vmatprep.subr.bf16.mxu0 0
        %5055 = vmatpush1.bf16.msra.mxu0 0
        %5056 = vmatprep.subr.bf16.mxu0 0
        %5057 = vmatpush1.bf16.msra.mxu0 0
        %5058 = vmatprep.subr.bf16.mxu0 0
        %5059 = vmatpush1.bf16.msra.mxu0 0
        %5060 = vmatprep.subr.bf16.mxu0 0
        %5061 = vmatpush1.bf16.msra.mxu0 0
        %5062 = vmatprep.subr.bf16.mxu0 0
        %5063 = vmatpush1.bf16.msra.mxu0 0
        %5064 = vmatprep.subr.bf16.mxu0 0
        %5065 = vmatpush1.bf16.msra.mxu0 0
        %5066 = vmatprep.subr.bf16.mxu0 0
        %5067 = vmatpush1.bf16.msra.mxu0 0
        %5068 = vmatprep.subr.bf16.mxu0 0
        %5069 = vmatpush1.bf16.msra.mxu0 0
        %5070 = vmatprep.subr.bf16.mxu0 0
        %5071 = vmatpush1.bf16.msra.mxu0 0
        %5072 = vmatprep.mubr.bf16.mxu0 0
        %5073 = vmatmul.mubr.bf16.gmra.mrb[0].mxu0 %v5035
        %v5074 = vpop.f32.mrb[0].mxu0
        %v5075 = vadd.f32 %v5021, %v5074
        %v5076 = vpop.f32.mrb[0].mxu0
        %v5077 = vpop.f32.mrb[0].mxu0
        %v5078 = vadd.f32 %v5021, %v5077
        %v5079 = vpop.f32.mrb[0].mxu0
        %5080 = vmatprep.mubr.bf16.mxu0 0
        %5081 = vmatmul.mubr.bf16.gmra.mrb[0].mxu0 %v5038
        %v5082 = vpop.f32.mrb[0].mxu0
        %v5083 = vadd.f32 %v5021, %v5082
        %v5084 = vpop.f32.mrb[0].mxu0
        %v5085 = vpop.f32.mrb[0].mxu0
        %v5086 = vpop.f32.mrb[0].mxu0
        %5087 = vdwg.mxu0
        %v5088 = vmax.f32 %v5075, 0.0
        %v5089 = vmax.f32 %v5078, 0.0
        %v5090 = vmax.f32 %v5083, 0.0
        %v5091 = vld [vmem:[%s2 + $0x100] sm:$0xf]
        %v5092 = vld [vmem:[%s2 + $0x104] sm:$0xf]
        %v5093 = vld [vmem:[%s2 + $0x108] sm:$0xf]
        %v5094 = vld [vmem:[%s2 + $0x10c] sm:$0xf]
        %v5095 = vld [vmem:[%s2 + $0x110] sm:$0xf]
        %v5096 = vld [vmem:[%s2 + $0x114] sm:$0xf]
        %v5097 = vld [vmem:[%s2 + $0x118] sm:$0xf]
        %v5098 = vld [vmem:[%s2 + $0x11c] sm:$0xf]
        %v5099 = vpack.c.bf16 %v5089, %v5088
        %v5100 = vpack.c.bf16 %v5090, %v5090
        %v5101 = vld [vmem:[%s5 + $0x12] sm:$0x1]
        %v5102 = vlaneseq
        %v5103 = vshrl.u32 %v5102, 7
        %v5104 = vsub.s32 0, %v5103
        %v5105 = vrot.slane %v5101, %v5104
        %v5114 = vunpack.c.l.b16 %v5091
        %v5115 = vunpack.c.l.b16 %v5092
        %v5116 = vunpack.c.l.b16 %v5093
        %v5117 = vunpack.c.l.b16 %v5094
        %v5118 = vunpack.c.l.b16 %v5095
        %v5119 = vunpack.c.l.b16 %v5096
        %v5120 = vunpack.c.l.b16 %v5097
        %v5121 = vunpack.c.l.b16 %v5098
        %v5122 = vpack.c.b16 %v5115, %v5114
        %v5123 = vpack.c.b16 %v5117, %v5116
        %v5124 = vpack.c.b16 %v5119, %v5118
        %v5125 = vpack.c.b16 %v5121, %v5120
        %v5131 = vsel %vm2469, %v5099, 0
        %v5134 = vsel %vm2469, %v5100, 0
        %5136 = vmatprep.subr.bf16.mxu0 0
        %5137 = vmatpush1.bf16.msra.mxu0 %v5122
        %5138 = vmatprep.subr.bf16.mxu0 0
        %5139 = vmatpush1.bf16.msra.mxu0 %v5123
        %5140 = vmatprep.subr.bf16.mxu0 0
        %5141 = vmatpush1.bf16.msra.mxu0 %v5124
        %5142 = vmatprep.subr.bf16.mxu0 0
        %5143 = vmatpush1.bf16.msra.mxu0 %v5125
        %5144 = vmatprep.subr.bf16.mxu0 0
        %5145 = vmatpush1.bf16.msra.mxu0 0
        %5146 = vmatprep.subr.bf16.mxu0 0
        %5147 = vmatpush1.bf16.msra.mxu0 0
        %5148 = vmatprep.subr.bf16.mxu0 0
        %5149 = vmatpush1.bf16.msra.mxu0 0
        %5150 = vmatprep.subr.bf16.mxu0 0
        %5151 = vmatpush1.bf16.msra.mxu0 0
        %5152 = vmatprep.subr.bf16.mxu0 0
        %5153 = vmatpush1.bf16.msra.mxu0 0
        %5154 = vmatprep.subr.bf16.mxu0 0
        %5155 = vmatpush1.bf16.msra.mxu0 0
        %5156 = vmatprep.subr.bf16.mxu0 0
        %5157 = vmatpush1.bf16.msra.mxu0 0
        %5158 = vmatprep.subr.bf16.mxu0 0
        %5159 = vmatpush1.bf16.msra.mxu0 0
        %5160 = vmatprep.subr.bf16.mxu0 0
        %5161 = vmatpush1.bf16.msra.mxu0 0
        %5162 = vmatprep.subr.bf16.mxu0 0
        %5163 = vmatpush1.bf16.msra.mxu0 0
        %5164 = vmatprep.subr.bf16.mxu0 0
        %5165 = vmatpush1.bf16.msra.mxu0 0
        %5166 = vmatprep.subr.bf16.mxu0 0
        %5167 = vmatpush1.bf16.msra.mxu0 0
        %5168 = vmatprep.mubr.bf16.mxu0 0
        %5169 = vmatmul.mubr.bf16.gmra.mrb[0].mxu0 %v5131
        %v5170 = vpop.f32.mrb[0].mxu0
        %v5171 = vadd.f32 %v5105, %v5170
        %v5172 = vpop.f32.mrb[0].mxu0
        %v5173 = vpop.f32.mrb[0].mxu0
        %v5174 = vadd.f32 %v5105, %v5173
        %v5175 = vpop.f32.mrb[0].mxu0
        %5176 = vmatprep.mubr.bf16.mxu0 0
        %5177 = vmatmul.mubr.bf16.gmra.mrb[0].mxu0 %v5134
        %v5178 = vpop.f32.mrb[0].mxu0
        %v5179 = vadd.f32 %v5105, %v5178
        %v5180 = vpop.f32.mrb[0].mxu0
        %v5181 = vpop.f32.mrb[0].mxu0
        %v5182 = vpop.f32.mrb[0].mxu0
        %5183 = vdwg.mxu0
        %v5184 = vadd.f32 %v5008, %v5171
        %v5185 = vadd.f32 %v5009, %v5174
        %v5186 = vadd.f32 %v5010, %v5179
        %v5187 = vld [vmem:[%s5 + $0x14] sm:$0x1]
        %v5188 = vld [vmem:[%s5 + $0x16] sm:$0x1]
        %v5189 = vsel %vm798, %v5184, 0.0
        %5190 = vadd.xlane.f32.xlu0 %v5189
        %v5191 = vpop.xlane.xlu0 %5190
        %v5192 = vsel %vm798, %v5185, 0.0
        %5193 = vadd.xlane.f32.xlu0 %v5192
        %v5194 = vpop.xlane.xlu0 %5193
        %v5195 = vsel %vm4168, %v5186, 0.0
        %5196 = vadd.xlane.f32.xlu0 %v5195
        %v5197 = vpop.xlane.xlu0 %5196
        %v5198 = vmul.f32 %v5191, %v4172
        %v5199 = vmul.f32 %v5194, %v4172
        %v5200 = vmul.f32 %v5197, %v4172
        %v5201 = vsub.f32 %v5184, %v5198
        %v5202 = vsub.f32 %v5185, %v5199
        %v5203 = vsub.f32 %v5186, %v5200
        %v5204 = vmul.f32 %v5201, %v5201
        %v5205 = vmul.f32 %v5202, %v5202
        %v5206 = vmul.f32 %v5203, %v5203
        %v5207 = vsel %vm798, %v5204, 0.0
        %5208 = vadd.xlane.f32.xlu0 %v5207
        %v5209 = vpop.xlane.xlu0 %5208
        %v5210 = vsel %vm798, %v5205, 0.0
        %5211 = vadd.xlane.f32.xlu0 %v5210
        %v5212 = vpop.xlane.xlu0 %5211
        %v5213 = vsel %vm4168, %v5206, 0.0
        %5214 = vadd.xlane.f32.xlu0 %v5213
        %v5215 = vpop.xlane.xlu0 %5214
        %v5216 = vmul.f32 %v5209, %v4172
        %v5217 = vmul.f32 %v5212, %v4172
        %v5218 = vmul.f32 %v5215, %v4172
        %v5219 = vadd.f32 %v5216, 1e-05
        %v5220 = vadd.f32 %v5217, 1e-05
        %v5221 = vadd.f32 %v5218, 1e-05
        %v5222 = vrsqrt.pop %v5219
        %v5223 = vrsqrt.pop %v5220
        %v5224 = vrsqrt.pop %v5221
        %v5225 = vmul.f32 %v5201, %v5222
        %v5226 = vmul.f32 %v5202, %v5223
        %v5227 = vmul.f32 %v5203, %v5224
        %v5228 = vlaneseq
        %v5229 = vshrl.u32 %v5228, 7
        %v5230 = vsub.s32 0, %v5229
        %v5231 = vrot.slane %v5187, %v5230
        %v5232 = vmul.f32 %v5225, %v5231
        %v5233 = vmul.f32 %v5226, %v5231
        %v5234 = vmul.f32 %v5227, %v5231
        %v5235 = vlaneseq
        %v5236 = vshrl.u32 %v5235, 7
        %v5237 = vsub.s32 0, %v5236
        %v5238 = vrot.slane %v5188, %v5237
        %v5239 = vadd.f32 %v5232, %v5238
        %v5240 = vadd.f32 %v5233, %v5238
        %v5241 = vadd.f32 %v5234, %v5238
        %v5242 = vsel %vm798, %v5239, -inf
        %v5243 = vsel %vm798, %v5240, -inf
        %v5244 = vmax.f32 %v5242, %v5243
        %v5245 = vrot.slane %v5244, 4
        %v5246 = vmax.f32 %v5244, %v5245
        %v5247 = vrot.slane %v5246, 2
        %v5248 = vmax.f32 %v5246, %v5247
        %v5249 = vrot.slane %v5248, 1
        %v5250 = vmax.f32 %v5248, %v5249
        %5252 = vrot.lane.b32.xlu0 %v5250, 32
        %v5253 = vpop.permute.xlu0 %5252
        %v5255 = vsel %vm798, %v5241, %v5253
        %v5256 = vld [vmem:[%s2 + $0x120] sm:$0xf]
        %v5257 = vld [vmem:[%s2 + $0x124] sm:$0xf]
        %v5258 = vld [vmem:[%s2 + $0x128] sm:$0xf]
        %v5259 = vld [vmem:[%s2 + $0x12c] sm:$0xf]
        %v5260 = vld [vmem:[%s2 + $0x130] sm:$0xf]
        %v5261 = vld [vmem:[%s2 + $0x134] sm:$0xf]
        %v5262 = vld [vmem:[%s2 + $0x138] sm:$0xf]
        %v5263 = vld [vmem:[%s2 + $0x13c] sm:$0xf]
        %v5264 = vpack.c.bf16 %v5255, %v5255
        %v5265 = vld [vmem:[%s5 + $0x17] sm:$0x1]
        %v5274 = vunpack.c.l.b16 %v5256
        %v5275 = vunpack.c.l.b16 %v5257
        %v5276 = vunpack.c.l.b16 %v5258
        %v5277 = vunpack.c.l.b16 %v5259
        %v5278 = vunpack.c.l.b16 %v5260
        %v5279 = vunpack.c.l.b16 %v5261
        %v5280 = vunpack.c.l.b16 %v5262
        %v5281 = vunpack.c.l.b16 %v5263
        %v5282 = vpack.c.b16 %v5275, %v5274
        %v5283 = vpack.c.b16 %v5277, %v5276
        %v5284 = vpack.c.b16 %v5279, %v5278
        %v5285 = vpack.c.b16 %v5281, %v5280
        %v5291 = vsel %vm2469, %v5264, 0
        %5293 = vmatprep.subr.bf16.mxu0 0
        %5294 = vmatpush1.bf16.msra.mxu0 %v5282
        %5295 = vmatprep.subr.bf16.mxu0 0
        %5296 = vmatpush1.bf16.msra.mxu0 %v5283
        %5297 = vmatprep.subr.bf16.mxu0 0
        %5298 = vmatpush1.bf16.msra.mxu0 %v5284
        %5299 = vmatprep.subr.bf16.mxu0 0
        %5300 = vmatpush1.bf16.msra.mxu0 %v5285
        %5301 = vmatprep.subr.bf16.mxu0 0
        %5302 = vmatpush1.bf16.msra.mxu0 0
        %5303 = vmatprep.subr.bf16.mxu0 0
        %5304 = vmatpush1.bf16.msra.mxu0 0
        %5305 = vmatprep.subr.bf16.mxu0 0
        %5306 = vmatpush1.bf16.msra.mxu0 0
        %5307 = vmatprep.subr.bf16.mxu0 0
        %5308 = vmatpush1.bf16.msra.mxu0 0
        %5309 = vmatprep.subr.bf16.mxu0 0
        %5310 = vmatpush1.bf16.msra.mxu0 0
        %5311 = vmatprep.subr.bf16.mxu0 0
        %5312 = vmatpush1.bf16.msra.mxu0 0
        %5313 = vmatprep.subr.bf16.mxu0 0
        %5314 = vmatpush1.bf16.msra.mxu0 0
        %5315 = vmatprep.subr.bf16.mxu0 0
        %5316 = vmatpush1.bf16.msra.mxu0 0
        %5317 = vmatprep.subr.bf16.mxu0 0
        %5318 = vmatpush1.bf16.msra.mxu0 0
        %5319 = vmatprep.subr.bf16.mxu0 0
        %5320 = vmatpush1.bf16.msra.mxu0 0
        %5321 = vmatprep.subr.bf16.mxu0 0
        %5322 = vmatpush1.bf16.msra.mxu0 0
        %5323 = vmatprep.subr.bf16.mxu0 0
        %5324 = vmatpush1.bf16.msra.mxu0 0
        %5325 = vmatprep.mubr.bf16.mxu0 0
        %5326 = vmatmul.mubr.bf16.gmra.mrb[0].mxu0 %v5291
        %v5327 = vpop.f32.mrb[0].mxu0
        %v5328 = vadd.f32 %v5265, %v5327
        %v5329 = vpop.f32.mrb[0].mxu0
        %v5330 = vpop.f32.mrb[0].mxu0
        %v5331 = vpop.f32.mrb[0].mxu0
        %5332 = vdwg.mxu0
        %5333 = vst.msk [vmem:[%s254] sm:$0x1] %vm4168, %v5328
        %s5334 = sand.u32 %s164, 1
        %s5335 = scalar_lea.sflag [#allocation5], %s5334
        %s5336 = sand.u32 %s164, 1
        %s5337 = scalar_lea.vmem [#allocation4], %s5336
        // Predicated region
        $region45: #{loco_transformer_encoder.1} parent=43 // pred_check
          %p5338 = pneg %p174
        $region46: #{loco_transformer_encoder.1} parent=43 // pred_check_branch
          %5340 = sbr.rel (%p5338) target = $region48
        $region47: #{loco_transformer_encoder.1} parent=43 // pred_region
          %s5342 = ssub.s32 16, 16
          %5343 = vsyncadd %s5335, %s5342
          %s5344 = smul.addr %s20, 16
          %s5345 = scalar_lea.hbm %s6, %s5344
          %s5347 = sshll.u32 %s5337, 4
          %s5348 = int_to_ptr.vmem [resolvable:$true] %s5347
          %5350 = dma.vmem_to_hbm [thread:$0]  %s5348, 16, %s5345, %s5335
        $region48: #{loco_transformer_encoder.1} parent=43 // pred_fallthru
          _
      $region44: #{loco_transformer_encoder.1} parent=5 // pred_fallthru
        _
      %p5351 = scmp.le.s32.totalorder 2, %s15
      // Predicated region
      $region49: #{loco_transformer_encoder.1} parent=5 // pred_check
        %p5352 = pneg %p5351
      $region50: #{loco_transformer_encoder.1} parent=5 // pred_check_branch
        %5354 = sbr.rel (%p5352) target = $region52
      $region51: #{loco_transformer_encoder.1} parent=5 // pred_region
        %s5355 = ssub.s32 %s15, 2
        // Predicated region
        $region53: #{loco_transformer_encoder.1} parent=51 // pred_check
          %p5356 = pneg %p180
        $region54: #{loco_transformer_encoder.1} parent=51 // pred_check_branch
          %5358 = sbr.rel (%p5356) target = $region56
        $region55: #{loco_transformer_encoder.1} parent=51 // pred_region
          %s5359 = sand.u32 %s165, 1
          %s5360 = scalar_lea.sflag [#allocation5], %s5359
          %s5361 = sand.u32 %s165, 1
          %s5362 = scalar_lea.vmem [#allocation4], %s5361
          %5363 = dma.done %s5360, 16
        $region56: #{loco_transformer_encoder.1} parent=51 // pred_fallthru
          _
      $region52: #{loco_transformer_encoder.1} parent=5 // pred_fallthru
        _
    $region6: #{loco_transformer_encoder.1} parent=1 // loop_footer
      %s19 = sadd.s32 1, %s15
    $region7: #{loco_transformer_encoder.1} parent=1 // loop_footer_branch
      %14 = sbr.rel target = $region3
    $region8: #{loco_transformer_encoder.1} parent=1 // loop_exit
      _
    %5364 = vsyncpa [#allocation5], 1
    %s5365 = scalar_lea.sflag [#allocation5], 1
    %5366 = vsyncpa %s5365, 1

</llo_original>
